<compile_context>
chip_gen: v6e
topology: v6e:2x2x1
jax: 0.10.0
libtpu: 0.0.40
codegen_flags: <defaults>
</compile_context>

<pallas_src>
import jax
import jax.numpy as jnp
import numpy as np
from jax import lax
from jax.experimental import pallas as pl
from jax.experimental.pallas import tpu as pltpu

_MXU_DTYPE = jnp.bfloat16   # dtype fed to the MXU (and used for HBM arrays)


# ----------------------------------------------------------------------------
# In-kernel helpers
# ----------------------------------------------------------------------------
def _conv3x3_taps(xp, w_ref, *, stride, dilation, h_out, w_out,
                  mxu_dtype=_MXU_DTYPE):
    """3x3 conv over a pre-padded (Hp, Wp, Cin) f32 tile.

    Nine unrolled taps; each tap is an (h_out*w_out, Cin) x (Cin, Cout) MXU
    dot in bf16 with f32 accumulation.  Slicing / reshaping is done on f32
    values (best-supported relayouts); the cast to bf16 happens right at the
    dot input.
    """
    cin = xp.shape[-1]
    acc = None
    for kh in range(3):
        h0 = kh * dilation
        rows = xp[h0:h0 + (h_out - 1) * stride + 1:stride, :, :]
        for kw in range(3):
            w0 = kw * dilation
            tap = rows[:, w0:w0 + (w_out - 1) * stride + 1:stride, :]
            lhs = tap.reshape(h_out * w_out, cin).astype(mxu_dtype)
            contrib = jnp.dot(lhs, w_ref[kh, kw],
                              preferred_element_type=jnp.float32)
            acc = contrib if acc is None else acc + contrib
    return acc  # (h_out*w_out, Cout) f32


def _basic_block_body(x_ref, w1_ref, b1_ref, w2_ref, b2_ref, res_ref, out_ref,
                      xpad_ref, mid_ref, *, stride, dilation,
                      H, W, Cmid, Cout, H1, W1):
    """conv1 -> bn1 -> relu -> conv2 -> bn2 -> (+residual) -> relu, one image."""
    d = dilation
    f32 = jnp.float32

    # ---- stage 1: conv1(stride, dilation) + bn1-bias + ReLU ----------------
    # Zero-filled halo in a VMEM scratch (no HBM padding pass).
    xpad_ref[...] = jnp.zeros_like(xpad_ref)
    xpad_ref[d:d + H, d:d + W, :] = x_ref[0].astype(f32)
    acc1 = _conv3x3_taps(xpad_ref[...], w1_ref, stride=stride, dilation=d,
                         h_out=H1, w_out=W1)                  # (H1*W1, Cmid)
    y1 = jnp.maximum(acc1 + b1_ref[...], 0.0)

    # ---- stage 2: conv2(1, dilation) + bn2-bias + residual + ReLU ----------
    # Intermediate stays in VMEM (fused; never written back to HBM).
    mid_ref[...] = jnp.zeros_like(mid_ref)
    mid_ref[d:d + H1, d:d + W1, :] = y1.reshape(H1, W1, Cmid)
    acc2 = _conv3x3_taps(mid_ref[...], w2_ref, stride=1, dilation=d,
                         h_out=H1, w_out=W1)                  # (H1*W1, Cout)
    y2 = acc2 + b2_ref[...]

    # Identity residual re-uses the already-resident input block.
    res = x_ref[0] if res_ref is None else res_ref[0]
    y2 = y2 + res.astype(f32).reshape(H1 * W1, Cout)
    out_ref[0] = jnp.maximum(y2, 0.0).astype(out_ref.dtype)


def _make_kernel(has_residual_input, **cfg):
    if has_residual_input:
        def kernel(x_ref, w1_ref, b1_ref, w2_ref, b2_ref, res_ref, out_ref,
                   xpad_ref, mid_ref):
            _basic_block_body(x_ref, w1_ref, b1_ref, w2_ref, b2_ref, res_ref,
                              out_ref, xpad_ref, mid_ref, **cfg)
    else:
        def kernel(x_ref, w1_ref, b1_ref, w2_ref, b2_ref, out_ref,
                   xpad_ref, mid_ref):
            _basic_block_body(x_ref, w1_ref, b1_ref, w2_ref, b2_ref, None,
                              out_ref, xpad_ref, mid_ref, **cfg)
    return kernel


# ----------------------------------------------------------------------------
# Host-side parameter prep (fold BN into the conv weights / a bias vector)
# ----------------------------------------------------------------------------
def fold_batchnorm(gamma, beta, running_mean, running_var, eps=1e-5):
    scale = gamma / jnp.sqrt(running_var + eps)
    bias = beta - running_mean * scale
    return scale, bias


def prepare_basic_block_params(w1, bn1, w2, bn2, *, eps=1e-5,
                               param_dtype=_MXU_DTYPE):
    """Fold inference-mode BN into the conv weights; pack for the kernel.

    w1, w2: (3, 3, Cin, Cout) HWIO conv weights (no conv bias, as in DLA).
    bn1, bn2: (gamma, beta, running_mean, running_var) tuples.
    """
    s1, b1 = fold_batchnorm(*bn1, eps=eps)
    s2, b2 = fold_batchnorm(*bn2, eps=eps)
    return {
        "w1": (w1 * s1).astype(param_dtype),        # BN scale folded offline
        "b1": b1.reshape(1, -1).astype(jnp.float32),
        "w2": (w2 * s2).astype(param_dtype),
        "b2": b2.reshape(1, -1).astype(jnp.float32),
    }


# ----------------------------------------------------------------------------
# VMEM budgeting
# ----------------------------------------------------------------------------
def _padded_vmem_bytes(shape, dtype):
    """Rough VMEM footprint of one buffer incl. (sublane, lane) padding."""
    itemsize = np.dtype(dtype).itemsize
    sublane = 8 * max(1, 4 // itemsize)
    shape = tuple(int(s) for s in shape)
    if len(shape) == 1:
        shape = (1,) + shape
    lead = 1
    for s in shape[:-2]:
        lead *= s
    rows = -(-shape[-2] // sublane) * sublane
    cols = -(-shape[-1] // 128) * 128
    return lead * rows * cols * itemsize


def _vmem_limit_bytes(block_list, scratch_list):
    est = 0
    for shp, dt in block_list:          # double-buffered by the pipeline
        est += 2 * _padded_vmem_bytes(shp, dt)
    for shp, dt in scratch_list:
        est += _padded_vmem_bytes(shp, dt)
    est += 2 * 2 ** 20                  # headroom for compiler scratch
    # Clamp: >=16 MiB (plenty here), <=64 MiB (v7x physical VMEM).
    return int(min(max(est, 16 * 2 ** 20), 64 * 2 ** 20))


# ----------------------------------------------------------------------------
# Public forward
# ----------------------------------------------------------------------------
def basic_block_forward(x_nhwc, params, *, stride=1, dilation=1,
                        residual=None, param_dtype=_MXU_DTYPE,
                        interpret=False):
    """BasicBlock.forward: conv1->bn1->relu->conv2->bn2->(+residual)->relu."""
    N, H, W, Cin = x_nhwc.shape
    w1, b1 = params["w1"], params["b1"]
    w2, b2 = params["w2"], params["b2"]
    Cmid, Cout = w1.shape[-1], w2.shape[-1]
    assert w1.shape == (3, 3, Cin, Cmid) and w2.shape == (3, 3, Cmid, Cout)

    s, d = int(stride), int(dilation)
    H1 = (H - 1) // s + 1
    W1 = (W - 1) // s + 1

    if residual is None:
        # Identity residual only shape-matches when stride==1 and
        # inplanes==planes (same contract as the PyTorch module usage).
        assert s == 1 and Cin == Cout, (
            "identity residual needs stride==1 and inplanes==planes; "
            "pass `residual=` explicitly otherwise")

    out_dtype = x_nhwc.dtype
    xq = x_nhwc.astype(param_dtype)

    cfg = dict(stride=s, dilation=d, H=H, W=W, Cmid=Cmid, Cout=Cout,
               H1=H1, W1=W1)

    in_specs = [
        pl.BlockSpec((1, H, W, Cin), lambda n: (n, 0, 0, 0)),
        pl.BlockSpec((3, 3, Cin, Cmid), lambda n: (0, 0, 0, 0)),
        pl.BlockSpec((1, Cmid), lambda n: (0, 0)),
        pl.BlockSpec((3, 3, Cmid, Cout), lambda n: (0, 0, 0, 0)),
        pl.BlockSpec((1, Cout), lambda n: (0, 0)),
    ]
    args = [xq, w1, b1, w2, b2]
    block_list = [
        ((1, H, W, Cin), param_dtype),
        ((3, 3, Cin, Cmid), param_dtype),
        ((1, Cmid), jnp.float32),
        ((3, 3, Cmid, Cout), param_dtype),
        ((1, Cout), jnp.float32),
        ((1, H1 * W1, Cout), out_dtype),
    ]
    if residual is not None:
        assert residual.shape == (N, H1, W1, Cout)
        in_specs.append(
            pl.BlockSpec((1, H1, W1, Cout), lambda n: (n, 0, 0, 0)))
        args.append(residual.astype(param_dtype))
        block_list.append(((1, H1, W1, Cout), param_dtype))

    Hp, Wp = H + 2 * d, W + 2 * d
    H1p, W1p = H1 + 2 * d, W1 + 2 * d
    scratch_list = [((Hp, Wp, Cin), jnp.float32),
                    ((H1p, W1p, Cmid), jnp.float32)]
    scratch_shapes = [pltpu.VMEM(shp, dt) for shp, dt in scratch_list]

    kernel = _make_kernel(residual is not None, **cfg)

    out = pl.pallas_call(
        kernel,
        out_shape=jax.ShapeDtypeStruct((N, H1 * W1, Cout), out_dtype),
        grid_spec=pltpu.PrefetchScalarGridSpec(
            num_scalar_prefetch=0,
            grid=(N,),
            in_specs=in_specs,
            out_specs=pl.BlockSpec((1, H1 * W1, Cout), lambda n: (n, 0, 0)),
            scratch_shapes=scratch_shapes,
        ),
        compiler_params=pltpu.CompilerParams(
            dimension_semantics=("parallel",),
            vmem_limit_bytes=_vmem_limit_bytes(block_list, scratch_list),
        ),
        interpret=interpret,
    )(*args)
    return out.reshape(N, H1, W1, Cout)


# ----------------------------------------------------------------------------
# Pure-JAX reference (lax.conv) for correctness checking
# ----------------------------------------------------------------------------
def _reference_basic_block(xq, w1q, b1, w2q, b2, *, stride, dilation,
                           residual=None):
    def conv(v, w, s):
        return lax.conv_general_dilated(
            v, w, window_strides=(s, s),
            padding=[(dilation, dilation), (dilation, dilation)],
            rhs_dilation=(dilation, dilation),
            dimension_numbers=("NHWC", "HWIO", "NHWC"),
            precision=lax.Precision.HIGHEST)
    if residual is None:
        residual = xq
    out = jnp.maximum(conv(xq, w1q, stride) + b1.reshape(1, 1, 1, -1), 0.0)
    out = conv(out, w2q, 1) + b2.reshape(1, 1, 1, -1)
    return jnp.maximum(out + residual, 0.0)


if __name__ == "__main__":
    # Small deterministic configuration consistent with BasicBlock semantics:
    # identity residual => stride=1 and inplanes == planes.
    N, H, W = 2, 16, 16
    inplanes = planes = 8
    stride, dilation = 1, 1

    key = jax.random.PRNGKey(0)
    k = jax.random.split(key, 9)

    x = jax.random.normal(k[0], (N, H, W, inplanes), jnp.float32)
    w1 = jax.random.normal(k[1], (3, 3, inplanes, planes), jnp.float32) * 0.1
    w2 = jax.random.normal(k[2], (3, 3, planes, planes), jnp.float32) * 0.1

    bn1 = (1.0 + 0.1 * jax.random.normal(k[3], (planes,), jnp.float32),  # gamma
           0.1 * jax.random.normal(k[4], (planes,), jnp.float32),        # beta
           0.1 * jax.random.normal(k[5], (planes,), jnp.float32),        # mean
           1.0 + 0.1 * jax.random.uniform(k[6], (planes,), jnp.float32)) # var
    bn2 = (1.0 + 0.1 * jax.random.normal(k[7], (planes,), jnp.float32),
           0.1 * jax.random.normal(k[8], (planes,), jnp.float32),
           jnp.zeros((planes,), jnp.float32),
           jnp.ones((planes,), jnp.float32))

    params = prepare_basic_block_params(w1, bn1, w2, bn2)

    out = basic_block_forward(x, params, stride=stride, dilation=dilation)
    out = jax.block_until_ready(out)

    # Reference consumes the exact same bf16-quantised input / folded weights
    # (f32 accumulation on both sides), so the comparison isolates the Pallas
    # kernel; the only extra rounding in the kernel is the bf16 MXU feed of
    # the fused intermediate.
    xq = x.astype(jnp.bfloat16).astype(jnp.float32)
    w1q = params["w1"].astype(jnp.float32)
    w2q = params["w2"].astype(jnp.float32)
    ref = _reference_basic_block(xq, w1q, params["b1"], w2q, params["b2"],
                                 stride=stride, dilation=dilation)

    np.testing.assert_allclose(np.asarray(out), np.asarray(ref),
                               rtol=1e-2, atol=1e-2)
    print("KERNEL_OK")
</pallas_src>

<mosaic_0001>
module attributes {stable_mosaic.version = 11 : i64} {
  func.func @kernel(%arg0: i32, %arg1: memref<1x16x16x8xbf16, #tpu.memory_space<vmem>>, %arg2: memref<3x3x8x8xbf16, #tpu.memory_space<vmem>>, %arg3: memref<1x8xf32, #tpu.memory_space<vmem>>, %arg4: memref<3x3x8x8xbf16, #tpu.memory_space<vmem>>, %arg5: memref<1x8xf32, #tpu.memory_space<vmem>>, %arg6: memref<1x256x8xf32, #tpu.memory_space<vmem>>, %arg7: memref<18x18x8xf32, #tpu.memory_space<vmem>>, %arg8: memref<18x18x8xf32, #tpu.memory_space<vmem>>) attributes {dimension_semantics = [#tpu.dimension_semantics<parallel>], iteration_bounds = array<i64: 2>, scalar_prefetch = 0 : i64, scratch_operands = 2 : i64, tpu.core_type = #tpu.core_type<tc>, window_params = [{transform_indices = @transform_0, window_bounds = array<i64: 1, 16, 16, 8>}, {pipeline_mode = #tpu.pipeline_mode<synchronous>, transform_indices = @transform_1, window_bounds = array<i64: 3, 3, 8, 8>}, {pipeline_mode = #tpu.pipeline_mode<synchronous>, transform_indices = @transform_2, window_bounds = array<i64: 1, 8>}, {pipeline_mode = #tpu.pipeline_mode<synchronous>, transform_indices = @transform_3, window_bounds = array<i64: 3, 3, 8, 8>}, {pipeline_mode = #tpu.pipeline_mode<synchronous>, transform_indices = @transform_4, window_bounds = array<i64: 1, 8>}, {transform_indices = @transform_5, window_bounds = array<i64: 1, 256, 8>}]} {
    %cst = arith.constant 0.000000e+00 : f32
    %0 = vector.broadcast %cst : f32 to vector<18x18x8xf32>
    %c0 = arith.constant 0 : index
    %c0_0 = arith.constant 0 : index
    %c0_1 = arith.constant 0 : index
    %1 = vector.load %arg7[%c0, %c0_0, %c0_1] : memref<18x18x8xf32, #tpu.memory_space<vmem>>, vector<18x18x8xf32>
    tpu.vector_store %arg7[%c0, %c0_0, %c0_1], %0 {strides = array<i32>} : memref<18x18x8xf32, #tpu.memory_space<vmem>>, vector<18x18x8xf32>,
    %c0_2 = arith.constant 0 : index
    %c0_3 = arith.constant 0 : index
    %c0_4 = arith.constant 0 : index
    %c0_5 = arith.constant 0 : index
    %2 = vector.load %arg1[%c0_2, %c0_3, %c0_4, %c0_5] : memref<1x16x16x8xbf16, #tpu.memory_space<vmem>>, vector<1x16x16x8xbf16>
    %3 = vector.shape_cast %2 : vector<1x16x16x8xbf16> to vector<16x16x8xbf16>
    %4 = arith.extf %3 : vector<16x16x8xbf16> to vector<16x16x8xf32>
    %c1 = arith.constant 1 : index
    %c1_6 = arith.constant 1 : index
    %c0_7 = arith.constant 0 : index
    %5 = vector.load %arg7[%c1, %c1_6, %c0_7] : memref<18x18x8xf32, #tpu.memory_space<vmem>>, vector<16x16x8xf32>
    tpu.vector_store %arg7[%c1, %c1_6, %c0_7], %4 {strides = array<i32>} : memref<18x18x8xf32, #tpu.memory_space<vmem>>, vector<16x16x8xf32>,
    %c0_8 = arith.constant 0 : index
    %c0_9 = arith.constant 0 : index
    %c0_10 = arith.constant 0 : index
    %6 = vector.load %arg7[%c0_8, %c0_9, %c0_10] : memref<18x18x8xf32, #tpu.memory_space<vmem>>, vector<18x18x8xf32>
    %7 = vector.extract_strided_slice %6 {offsets = [0, 0, 0], sizes = [16, 18, 8], strides = [1, 1, 1]} : vector<18x18x8xf32> to vector<16x18x8xf32>
    %8 = vector.extract_strided_slice %7 {offsets = [0, 0, 0], sizes = [16, 16, 8], strides = [1, 1, 1]} : vector<16x18x8xf32> to vector<16x16x8xf32>
    %9 = vector.shape_cast %8 : vector<16x16x8xf32> to vector<256x8xf32>
    %10 = arith.truncf %9 : vector<256x8xf32> to vector<256x8xbf16>
    %c0_11 = arith.constant 0 : index
    %c0_12 = arith.constant 0 : index
    %c0_13 = arith.constant 0 : index
    %c0_14 = arith.constant 0 : index
    %11 = vector.load %arg2[%c0_11, %c0_12, %c0_13, %c0_14] : memref<3x3x8x8xbf16, #tpu.memory_space<vmem>>, vector<1x1x8x8xbf16>
    %12 = vector.shape_cast %11 : vector<1x1x8x8xbf16> to vector<8x8xbf16>
    %cst_15 = arith.constant dense<0.000000e+00> : vector<256x8xf32>
    %13 = tpu.matmul %10, %12, %cst_15 {dimension_numbers = #tpu.dot_dimension_numbers<[1], [0], [0], [1], [0, 0, 1, 1], [], []>} : vector<256x8xbf16>, vector<8x8xbf16>, vector<256x8xf32> -> vector<256x8xf32>
    %14 = vector.extract_strided_slice %7 {offsets = [0, 1, 0], sizes = [16, 16, 8], strides = [1, 1, 1]} : vector<16x18x8xf32> to vector<16x16x8xf32>
    %15 = vector.shape_cast %14 : vector<16x16x8xf32> to vector<256x8xf32>
    %16 = arith.truncf %15 : vector<256x8xf32> to vector<256x8xbf16>
    %c0_16 = arith.constant 0 : index
    %c1_17 = arith.constant 1 : index
    %c0_18 = arith.constant 0 : index
    %c0_19 = arith.constant 0 : index
    %17 = vector.load %arg2[%c0_16, %c1_17, %c0_18, %c0_19] : memref<3x3x8x8xbf16, #tpu.memory_space<vmem>>, vector<1x1x8x8xbf16>
    %18 = vector.shape_cast %17 : vector<1x1x8x8xbf16> to vector<8x8xbf16>
    %cst_20 = arith.constant dense<0.000000e+00> : vector<256x8xf32>
    %19 = tpu.matmul %16, %18, %cst_20 {dimension_numbers = #tpu.dot_dimension_numbers<[1], [0], [0], [1], [0, 0, 1, 1], [], []>} : vector<256x8xbf16>, vector<8x8xbf16>, vector<256x8xf32> -> vector<256x8xf32>
    %20 = arith.addf %13, %19 : vector<256x8xf32>
    %21 = vector.extract_strided_slice %7 {offsets = [0, 2, 0], sizes = [16, 16, 8], strides = [1, 1, 1]} : vector<16x18x8xf32> to vector<16x16x8xf32>
    %22 = vector.shape_cast %21 : vector<16x16x8xf32> to vector<256x8xf32>
    %23 = arith.truncf %22 : vector<256x8xf32> to vector<256x8xbf16>
    %c0_21 = arith.constant 0 : index
    %c2 = arith.constant 2 : index
    %c0_22 = arith.constant 0 : index
    %c0_23 = arith.constant 0 : index
    %24 = vector.load %arg2[%c0_21, %c2, %c0_22, %c0_23] : memref<3x3x8x8xbf16, #tpu.memory_space<vmem>>, vector<1x1x8x8xbf16>
    %25 = vector.shape_cast %24 : vector<1x1x8x8xbf16> to vector<8x8xbf16>
    %cst_24 = arith.constant dense<0.000000e+00> : vector<256x8xf32>
    %26 = tpu.matmul %23, %25, %cst_24 {dimension_numbers = #tpu.dot_dimension_numbers<[1], [0], [0], [1], [0, 0, 1, 1], [], []>} : vector<256x8xbf16>, vector<8x8xbf16>, vector<256x8xf32> -> vector<256x8xf32>
    %27 = arith.addf %20, %26 : vector<256x8xf32>
    %28 = vector.extract_strided_slice %6 {offsets = [1, 0, 0], sizes = [16, 18, 8], strides = [1, 1, 1]} : vector<18x18x8xf32> to vector<16x18x8xf32>
    %29 = vector.extract_strided_slice %28 {offsets = [0, 0, 0], sizes = [16, 16, 8], strides = [1, 1, 1]} : vector<16x18x8xf32> to vector<16x16x8xf32>
    %30 = vector.shape_cast %29 : vector<16x16x8xf32> to vector<256x8xf32>
    %31 = arith.truncf %30 : vector<256x8xf32> to vector<256x8xbf16>
    %c1_25 = arith.constant 1 : index
    %c0_26 = arith.constant 0 : index
    %c0_27 = arith.constant 0 : index
    %c0_28 = arith.constant 0 : index
    %32 = vector.load %arg2[%c1_25, %c0_26, %c0_27, %c0_28] : memref<3x3x8x8xbf16, #tpu.memory_space<vmem>>, vector<1x1x8x8xbf16>
    %33 = vector.shape_cast %32 : vector<1x1x8x8xbf16> to vector<8x8xbf16>
    %cst_29 = arith.constant dense<0.000000e+00> : vector<256x8xf32>
    %34 = tpu.matmul %31, %33, %cst_29 {dimension_numbers = #tpu.dot_dimension_numbers<[1], [0], [0], [1], [0, 0, 1, 1], [], []>} : vector<256x8xbf16>, vector<8x8xbf16>, vector<256x8xf32> -> vector<256x8xf32>
    %35 = arith.addf %27, %34 : vector<256x8xf32>
    %36 = vector.extract_strided_slice %28 {offsets = [0, 1, 0], sizes = [16, 16, 8], strides = [1, 1, 1]} : vector<16x18x8xf32> to vector<16x16x8xf32>
    %37 = vector.shape_cast %36 : vector<16x16x8xf32> to vector<256x8xf32>
    %38 = arith.truncf %37 : vector<256x8xf32> to vector<256x8xbf16>
    %c1_30 = arith.constant 1 : index
    %c1_31 = arith.constant 1 : index
    %c0_32 = arith.constant 0 : index
    %c0_33 = arith.constant 0 : index
    %39 = vector.load %arg2[%c1_30, %c1_31, %c0_32, %c0_33] : memref<3x3x8x8xbf16, #tpu.memory_space<vmem>>, vector<1x1x8x8xbf16>
    %40 = vector.shape_cast %39 : vector<1x1x8x8xbf16> to vector<8x8xbf16>
    %cst_34 = arith.constant dense<0.000000e+00> : vector<256x8xf32>
    %41 = tpu.matmul %38, %40, %cst_34 {dimension_numbers = #tpu.dot_dimension_numbers<[1], [0], [0], [1], [0, 0, 1, 1], [], []>} : vector<256x8xbf16>, vector<8x8xbf16>, vector<256x8xf32> -> vector<256x8xf32>
    %42 = arith.addf %35, %41 : vector<256x8xf32>
    %43 = vector.extract_strided_slice %28 {offsets = [0, 2, 0], sizes = [16, 16, 8], strides = [1, 1, 1]} : vector<16x18x8xf32> to vector<16x16x8xf32>
    %44 = vector.shape_cast %43 : vector<16x16x8xf32> to vector<256x8xf32>
    %45 = arith.truncf %44 : vector<256x8xf32> to vector<256x8xbf16>
    %c1_35 = arith.constant 1 : index
    %c2_36 = arith.constant 2 : index
    %c0_37 = arith.constant 0 : index
    %c0_38 = arith.constant 0 : index
    %46 = vector.load %arg2[%c1_35, %c2_36, %c0_37, %c0_38] : memref<3x3x8x8xbf16, #tpu.memory_space<vmem>>, vector<1x1x8x8xbf16>
    %47 = vector.shape_cast %46 : vector<1x1x8x8xbf16> to vector<8x8xbf16>
    %cst_39 = arith.constant dense<0.000000e+00> : vector<256x8xf32>
    %48 = tpu.matmul %45, %47, %cst_39 {dimension_numbers = #tpu.dot_dimension_numbers<[1], [0], [0], [1], [0, 0, 1, 1], [], []>} : vector<256x8xbf16>, vector<8x8xbf16>, vector<256x8xf32> -> vector<256x8xf32>
    %49 = arith.addf %42, %48 : vector<256x8xf32>
    %50 = vector.extract_strided_slice %6 {offsets = [2, 0, 0], sizes = [16, 18, 8], strides = [1, 1, 1]} : vector<18x18x8xf32> to vector<16x18x8xf32>
    %51 = vector.extract_strided_slice %50 {offsets = [0, 0, 0], sizes = [16, 16, 8], strides = [1, 1, 1]} : vector<16x18x8xf32> to vector<16x16x8xf32>
    %52 = vector.shape_cast %51 : vector<16x16x8xf32> to vector<256x8xf32>
    %53 = arith.truncf %52 : vector<256x8xf32> to vector<256x8xbf16>
    %c2_40 = arith.constant 2 : index
    %c0_41 = arith.constant 0 : index
    %c0_42 = arith.constant 0 : index
    %c0_43 = arith.constant 0 : index
    %54 = vector.load %arg2[%c2_40, %c0_41, %c0_42, %c0_43] : memref<3x3x8x8xbf16, #tpu.memory_space<vmem>>, vector<1x1x8x8xbf16>
    %55 = vector.shape_cast %54 : vector<1x1x8x8xbf16> to vector<8x8xbf16>
    %cst_44 = arith.constant dense<0.000000e+00> : vector<256x8xf32>
    %56 = tpu.matmul %53, %55, %cst_44 {dimension_numbers = #tpu.dot_dimension_numbers<[1], [0], [0], [1], [0, 0, 1, 1], [], []>} : vector<256x8xbf16>, vector<8x8xbf16>, vector<256x8xf32> -> vector<256x8xf32>
    %57 = arith.addf %49, %56 : vector<256x8xf32>
    %58 = vector.extract_strided_slice %50 {offsets = [0, 1, 0], sizes = [16, 16, 8], strides = [1, 1, 1]} : vector<16x18x8xf32> to vector<16x16x8xf32>
    %59 = vector.shape_cast %58 : vector<16x16x8xf32> to vector<256x8xf32>
    %60 = arith.truncf %59 : vector<256x8xf32> to vector<256x8xbf16>
    %c2_45 = arith.constant 2 : index
    %c1_46 = arith.constant 1 : index
    %c0_47 = arith.constant 0 : index
    %c0_48 = arith.constant 0 : index
    %61 = vector.load %arg2[%c2_45, %c1_46, %c0_47, %c0_48] : memref<3x3x8x8xbf16, #tpu.memory_space<vmem>>, vector<1x1x8x8xbf16>
    %62 = vector.shape_cast %61 : vector<1x1x8x8xbf16> to vector<8x8xbf16>
    %cst_49 = arith.constant dense<0.000000e+00> : vector<256x8xf32>
    %63 = tpu.matmul %60, %62, %cst_49 {dimension_numbers = #tpu.dot_dimension_numbers<[1], [0], [0], [1], [0, 0, 1, 1], [], []>} : vector<256x8xbf16>, vector<8x8xbf16>, vector<256x8xf32> -> vector<256x8xf32>
    %64 = arith.addf %57, %63 : vector<256x8xf32>
    %65 = vector.extract_strided_slice %50 {offsets = [0, 2, 0], sizes = [16, 16, 8], strides = [1, 1, 1]} : vector<16x18x8xf32> to vector<16x16x8xf32>
    %66 = vector.shape_cast %65 : vector<16x16x8xf32> to vector<256x8xf32>
    %67 = arith.truncf %66 : vector<256x8xf32> to vector<256x8xbf16>
    %c2_50 = arith.constant 2 : index
    %c2_51 = arith.constant 2 : index
    %c0_52 = arith.constant 0 : index
    %c0_53 = arith.constant 0 : index
    %68 = vector.load %arg2[%c2_50, %c2_51, %c0_52, %c0_53] : memref<3x3x8x8xbf16, #tpu.memory_space<vmem>>, vector<1x1x8x8xbf16>
    %69 = vector.shape_cast %68 : vector<1x1x8x8xbf16> to vector<8x8xbf16>
    %cst_54 = arith.constant dense<0.000000e+00> : vector<256x8xf32>
    %70 = tpu.matmul %67, %69, %cst_54 {dimension_numbers = #tpu.dot_dimension_numbers<[1], [0], [0], [1], [0, 0, 1, 1], [], []>} : vector<256x8xbf16>, vector<8x8xbf16>, vector<256x8xf32> -> vector<256x8xf32>
    %71 = arith.addf %64, %70 : vector<256x8xf32>
    %c0_55 = arith.constant 0 : index
    %c0_56 = arith.constant 0 : index
    %72 = vector.load %arg3[%c0_55, %c0_56] : memref<1x8xf32, #tpu.memory_space<vmem>>, vector<1x8xf32>
    %73 = vector.broadcast %72 : vector<1x8xf32> to vector<256x8xf32>
    %74 = arith.addf %71, %73 : vector<256x8xf32>
    %cst_57 = arith.constant 0.000000e+00 : f32
    %75 = vector.broadcast %cst_57 : f32 to vector<256x8xf32>
    %76 = arith.maximumf %74, %75 : vector<256x8xf32>
    %cst_58 = arith.constant 0.000000e+00 : f32
    %77 = vector.broadcast %cst_58 : f32 to vector<18x18x8xf32>
    %c0_59 = arith.constant 0 : index
    %c0_60 = arith.constant 0 : index
    %c0_61 = arith.constant 0 : index
    %78 = vector.load %arg8[%c0_59, %c0_60, %c0_61] : memref<18x18x8xf32, #tpu.memory_space<vmem>>, vector<18x18x8xf32>
    tpu.vector_store %arg8[%c0_59, %c0_60, %c0_61], %77 {strides = array<i32>} : memref<18x18x8xf32, #tpu.memory_space<vmem>>, vector<18x18x8xf32>,
    %79 = vector.shape_cast %76 : vector<256x8xf32> to vector<16x16x8xf32>
    %c1_62 = arith.constant 1 : index
    %c1_63 = arith.constant 1 : index
    %c0_64 = arith.constant 0 : index
    %80 = vector.load %arg8[%c1_62, %c1_63, %c0_64] : memref<18x18x8xf32, #tpu.memory_space<vmem>>, vector<16x16x8xf32>
    tpu.vector_store %arg8[%c1_62, %c1_63, %c0_64], %79 {strides = array<i32>} : memref<18x18x8xf32, #tpu.memory_space<vmem>>, vector<16x16x8xf32>,
    %c0_65 = arith.constant 0 : index
    %c0_66 = arith.constant 0 : index
    %c0_67 = arith.constant 0 : index
    %81 = vector.load %arg8[%c0_65, %c0_66, %c0_67] : memref<18x18x8xf32, #tpu.memory_space<vmem>>, vector<18x18x8xf32>
    %82 = vector.extract_strided_slice %81 {offsets = [0, 0, 0], sizes = [16, 18, 8], strides = [1, 1, 1]} : vector<18x18x8xf32> to vector<16x18x8xf32>
    %83 = vector.extract_strided_slice %82 {offsets = [0, 0, 0], sizes = [16, 16, 8], strides = [1, 1, 1]} : vector<16x18x8xf32> to vector<16x16x8xf32>
    %84 = vector.shape_cast %83 : vector<16x16x8xf32> to vector<256x8xf32>
    %85 = arith.truncf %84 : vector<256x8xf32> to vector<256x8xbf16>
    %c0_68 = arith.constant 0 : index
    %c0_69 = arith.constant 0 : index
    %c0_70 = arith.constant 0 : index
    %c0_71 = arith.constant 0 : index
    %86 = vector.load %arg4[%c0_68, %c0_69, %c0_70, %c0_71] : memref<3x3x8x8xbf16, #tpu.memory_space<vmem>>, vector<1x1x8x8xbf16>
    %87 = vector.shape_cast %86 : vector<1x1x8x8xbf16> to vector<8x8xbf16>
    %cst_72 = arith.constant dense<0.000000e+00> : vector<256x8xf32>
    %88 = tpu.matmul %85, %87, %cst_72 {dimension_numbers = #tpu.dot_dimension_numbers<[1], [0], [0], [1], [0, 0, 1, 1], [], []>} : vector<256x8xbf16>, vector<8x8xbf16>, vector<256x8xf32> -> vector<256x8xf32>
    %89 = vector.extract_strided_slice %82 {offsets = [0, 1, 0], sizes = [16, 16, 8], strides = [1, 1, 1]} : vector<16x18x8xf32> to vector<16x16x8xf32>
    %90 = vector.shape_cast %89 : vector<16x16x8xf32> to vector<256x8xf32>
    %91 = arith.truncf %90 : vector<256x8xf32> to vector<256x8xbf16>
    %c0_73 = arith.constant 0 : index
    %c1_74 = arith.constant 1 : index
    %c0_75 = arith.constant 0 : index
    %c0_76 = arith.constant 0 : index
    %92 = vector.load %arg4[%c0_73, %c1_74, %c0_75, %c0_76] : memref<3x3x8x8xbf16, #tpu.memory_space<vmem>>, vector<1x1x8x8xbf16>
    %93 = vector.shape_cast %92 : vector<1x1x8x8xbf16> to vector<8x8xbf16>
    %cst_77 = arith.constant dense<0.000000e+00> : vector<256x8xf32>
    %94 = tpu.matmul %91, %93, %cst_77 {dimension_numbers = #tpu.dot_dimension_numbers<[1], [0], [0], [1], [0, 0, 1, 1], [], []>} : vector<256x8xbf16>, vector<8x8xbf16>, vector<256x8xf32> -> vector<256x8xf32>
    %95 = arith.addf %88, %94 : vector<256x8xf32>
    %96 = vector.extract_strided_slice %82 {offsets = [0, 2, 0], sizes = [16, 16, 8], strides = [1, 1, 1]} : vector<16x18x8xf32> to vector<16x16x8xf32>
    %97 = vector.shape_cast %96 : vector<16x16x8xf32> to vector<256x8xf32>
    %98 = arith.truncf %97 : vector<256x8xf32> to vector<256x8xbf16>
    %c0_78 = arith.constant 0 : index
    %c2_79 = arith.constant 2 : index
    %c0_80 = arith.constant 0 : index
    %c0_81 = arith.constant 0 : index
    %99 = vector.load %arg4[%c0_78, %c2_79, %c0_80, %c0_81] : memref<3x3x8x8xbf16, #tpu.memory_space<vmem>>, vector<1x1x8x8xbf16>
    %100 = vector.shape_cast %99 : vector<1x1x8x8xbf16> to vector<8x8xbf16>
    %cst_82 = arith.constant dense<0.000000e+00> : vector<256x8xf32>
    %101 = tpu.matmul %98, %100, %cst_82 {dimension_numbers = #tpu.dot_dimension_numbers<[1], [0], [0], [1], [0, 0, 1, 1], [], []>} : vector<256x8xbf16>, vector<8x8xbf16>, vector<256x8xf32> -> vector<256x8xf32>
    %102 = arith.addf %95, %101 : vector<256x8xf32>
    %103 = vector.extract_strided_slice %81 {offsets = [1, 0, 0], sizes = [16, 18, 8], strides = [1, 1, 1]} : vector<18x18x8xf32> to vector<16x18x8xf32>
    %104 = vector.extract_strided_slice %103 {offsets = [0, 0, 0], sizes = [16, 16, 8], strides = [1, 1, 1]} : vector<16x18x8xf32> to vector<16x16x8xf32>
    %105 = vector.shape_cast %104 : vector<16x16x8xf32> to vector<256x8xf32>
    %106 = arith.truncf %105 : vector<256x8xf32> to vector<256x8xbf16>
    %c1_83 = arith.constant 1 : index
    %c0_84 = arith.constant 0 : index
    %c0_85 = arith.constant 0 : index
    %c0_86 = arith.constant 0 : index
    %107 = vector.load %arg4[%c1_83, %c0_84, %c0_85, %c0_86] : memref<3x3x8x8xbf16, #tpu.memory_space<vmem>>, vector<1x1x8x8xbf16>
    %108 = vector.shape_cast %107 : vector<1x1x8x8xbf16> to vector<8x8xbf16>
    %cst_87 = arith.constant dense<0.000000e+00> : vector<256x8xf32>
    %109 = tpu.matmul %106, %108, %cst_87 {dimension_numbers = #tpu.dot_dimension_numbers<[1], [0], [0], [1], [0, 0, 1, 1], [], []>} : vector<256x8xbf16>, vector<8x8xbf16>, vector<256x8xf32> -> vector<256x8xf32>
    %110 = arith.addf %102, %109 : vector<256x8xf32>
    %111 = vector.extract_strided_slice %103 {offsets = [0, 1, 0], sizes = [16, 16, 8], strides = [1, 1, 1]} : vector<16x18x8xf32> to vector<16x16x8xf32>
    %112 = vector.shape_cast %111 : vector<16x16x8xf32> to vector<256x8xf32>
    %113 = arith.truncf %112 : vector<256x8xf32> to vector<256x8xbf16>
    %c1_88 = arith.constant 1 : index
    %c1_89 = arith.constant 1 : index
    %c0_90 = arith.constant 0 : index
    %c0_91 = arith.constant 0 : index
    %114 = vector.load %arg4[%c1_88, %c1_89, %c0_90, %c0_91] : memref<3x3x8x8xbf16, #tpu.memory_space<vmem>>, vector<1x1x8x8xbf16>
    %115 = vector.shape_cast %114 : vector<1x1x8x8xbf16> to vector<8x8xbf16>
    %cst_92 = arith.constant dense<0.000000e+00> : vector<256x8xf32>
    %116 = tpu.matmul %113, %115, %cst_92 {dimension_numbers = #tpu.dot_dimension_numbers<[1], [0], [0], [1], [0, 0, 1, 1], [], []>} : vector<256x8xbf16>, vector<8x8xbf16>, vector<256x8xf32> -> vector<256x8xf32>
    %117 = arith.addf %110, %116 : vector<256x8xf32>
    %118 = vector.extract_strided_slice %103 {offsets = [0, 2, 0], sizes = [16, 16, 8], strides = [1, 1, 1]} : vector<16x18x8xf32> to vector<16x16x8xf32>
    %119 = vector.shape_cast %118 : vector<16x16x8xf32> to vector<256x8xf32>
    %120 = arith.truncf %119 : vector<256x8xf32> to vector<256x8xbf16>
    %c1_93 = arith.constant 1 : index
    %c2_94 = arith.constant 2 : index
    %c0_95 = arith.constant 0 : index
    %c0_96 = arith.constant 0 : index
    %121 = vector.load %arg4[%c1_93, %c2_94, %c0_95, %c0_96] : memref<3x3x8x8xbf16, #tpu.memory_space<vmem>>, vector<1x1x8x8xbf16>
    %122 = vector.shape_cast %121 : vector<1x1x8x8xbf16> to vector<8x8xbf16>
    %cst_97 = arith.constant dense<0.000000e+00> : vector<256x8xf32>
    %123 = tpu.matmul %120, %122, %cst_97 {dimension_numbers = #tpu.dot_dimension_numbers<[1], [0], [0], [1], [0, 0, 1, 1], [], []>} : vector<256x8xbf16>, vector<8x8xbf16>, vector<256x8xf32> -> vector<256x8xf32>
    %124 = arith.addf %117, %123 : vector<256x8xf32>
    %125 = vector.extract_strided_slice %81 {offsets = [2, 0, 0], sizes = [16, 18, 8], strides = [1, 1, 1]} : vector<18x18x8xf32> to vector<16x18x8xf32>
    %126 = vector.extract_strided_slice %125 {offsets = [0, 0, 0], sizes = [16, 16, 8], strides = [1, 1, 1]} : vector<16x18x8xf32> to vector<16x16x8xf32>
    %127 = vector.shape_cast %126 : vector<16x16x8xf32> to vector<256x8xf32>
    %128 = arith.truncf %127 : vector<256x8xf32> to vector<256x8xbf16>
    %c2_98 = arith.constant 2 : index
    %c0_99 = arith.constant 0 : index
    %c0_100 = arith.constant 0 : index
    %c0_101 = arith.constant 0 : index
    %129 = vector.load %arg4[%c2_98, %c0_99, %c0_100, %c0_101] : memref<3x3x8x8xbf16, #tpu.memory_space<vmem>>, vector<1x1x8x8xbf16>
    %130 = vector.shape_cast %129 : vector<1x1x8x8xbf16> to vector<8x8xbf16>
    %cst_102 = arith.constant dense<0.000000e+00> : vector<256x8xf32>
    %131 = tpu.matmul %128, %130, %cst_102 {dimension_numbers = #tpu.dot_dimension_numbers<[1], [0], [0], [1], [0, 0, 1, 1], [], []>} : vector<256x8xbf16>, vector<8x8xbf16>, vector<256x8xf32> -> vector<256x8xf32>
    %132 = arith.addf %124, %131 : vector<256x8xf32>
    %133 = vector.extract_strided_slice %125 {offsets = [0, 1, 0], sizes = [16, 16, 8], strides = [1, 1, 1]} : vector<16x18x8xf32> to vector<16x16x8xf32>
    %134 = vector.shape_cast %133 : vector<16x16x8xf32> to vector<256x8xf32>
    %135 = arith.truncf %134 : vector<256x8xf32> to vector<256x8xbf16>
    %c2_103 = arith.constant 2 : index
    %c1_104 = arith.constant 1 : index
    %c0_105 = arith.constant 0 : index
    %c0_106 = arith.constant 0 : index
    %136 = vector.load %arg4[%c2_103, %c1_104, %c0_105, %c0_106] : memref<3x3x8x8xbf16, #tpu.memory_space<vmem>>, vector<1x1x8x8xbf16>
    %137 = vector.shape_cast %136 : vector<1x1x8x8xbf16> to vector<8x8xbf16>
    %cst_107 = arith.constant dense<0.000000e+00> : vector<256x8xf32>
    %138 = tpu.matmul %135, %137, %cst_107 {dimension_numbers = #tpu.dot_dimension_numbers<[1], [0], [0], [1], [0, 0, 1, 1], [], []>} : vector<256x8xbf16>, vector<8x8xbf16>, vector<256x8xf32> -> vector<256x8xf32>
    %139 = arith.addf %132, %138 : vector<256x8xf32>
    %140 = vector.extract_strided_slice %125 {offsets = [0, 2, 0], sizes = [16, 16, 8], strides = [1, 1, 1]} : vector<16x18x8xf32> to vector<16x16x8xf32>
    %141 = vector.shape_cast %140 : vector<16x16x8xf32> to vector<256x8xf32>
    %142 = arith.truncf %141 : vector<256x8xf32> to vector<256x8xbf16>
    %c2_108 = arith.constant 2 : index
    %c2_109 = arith.constant 2 : index
    %c0_110 = arith.constant 0 : index
    %c0_111 = arith.constant 0 : index
    %143 = vector.load %arg4[%c2_108, %c2_109, %c0_110, %c0_111] : memref<3x3x8x8xbf16, #tpu.memory_space<vmem>>, vector<1x1x8x8xbf16>
    %144 = vector.shape_cast %143 : vector<1x1x8x8xbf16> to vector<8x8xbf16>
    %cst_112 = arith.constant dense<0.000000e+00> : vector<256x8xf32>
    %145 = tpu.matmul %142, %144, %cst_112 {dimension_numbers = #tpu.dot_dimension_numbers<[1], [0], [0], [1], [0, 0, 1, 1], [], []>} : vector<256x8xbf16>, vector<8x8xbf16>, vector<256x8xf32> -> vector<256x8xf32>
    %146 = arith.addf %139, %145 : vector<256x8xf32>
    %c0_113 = arith.constant 0 : index
    %c0_114 = arith.constant 0 : index
    %147 = vector.load %arg5[%c0_113, %c0_114] : memref<1x8xf32, #tpu.memory_space<vmem>>, vector<1x8xf32>
    %148 = vector.broadcast %147 : vector<1x8xf32> to vector<256x8xf32>
    %149 = arith.addf %146, %148 : vector<256x8xf32>
    %c0_115 = arith.constant 0 : index
    %c0_116 = arith.constant 0 : index
    %c0_117 = arith.constant 0 : index
    %c0_118 = arith.constant 0 : index
    %150 = vector.load %arg1[%c0_115, %c0_116, %c0_117, %c0_118] : memref<1x16x16x8xbf16, #tpu.memory_space<vmem>>, vector<1x16x16x8xbf16>
    %151 = vector.shape_cast %150 : vector<1x16x16x8xbf16> to vector<16x16x8xbf16>
    %152 = arith.extf %151 : vector<16x16x8xbf16> to vector<16x16x8xf32>
    %153 = vector.shape_cast %152 : vector<16x16x8xf32> to vector<256x8xf32>
    %154 = arith.addf %149, %153 : vector<256x8xf32>
    %cst_119 = arith.constant 0.000000e+00 : f32
    %155 = vector.broadcast %cst_119 : f32 to vector<256x8xf32>
    %156 = arith.maximumf %154, %155 : vector<256x8xf32>
    %c0_120 = arith.constant 0 : index
    %c0_121 = arith.constant 0 : index
    %c0_122 = arith.constant 0 : index
    %157 = vector.load %arg6[%c0_120, %c0_121, %c0_122] : memref<1x256x8xf32, #tpu.memory_space<vmem>>, vector<1x256x8xf32>
    %158 = vector.shape_cast %157 : vector<1x256x8xf32> to vector<256x8xf32>
    %159 = vector.shape_cast %156 : vector<256x8xf32> to vector<1x256x8xf32>
    tpu.vector_store %arg6[%c0_120, %c0_121, %c0_122], %159 {strides = array<i32>} : memref<1x256x8xf32, #tpu.memory_space<vmem>>, vector<1x256x8xf32>,
    return
  }
  func.func @transform_0(%arg0: i32) -> (i32, i32, i32, i32) {
    %c0_i32 = arith.constant 0 : i32
    %c0_i32_0 = arith.constant 0 : i32
    %c0_i32_1 = arith.constant 0 : i32
    %c0_i32_2 = arith.constant 0 : i32
    return %arg0, %c0_i32, %c0_i32_0, %c0_i32_1 : i32, i32, i32, i32
  }
  func.func @transform_1(%arg0: i32) -> (i32, i32, i32, i32) {
    %c0_i32 = arith.constant 0 : i32
    %c0_i32_0 = arith.constant 0 : i32
    %c0_i32_1 = arith.constant 0 : i32
    %c0_i32_2 = arith.constant 0 : i32
    %c0_i32_3 = arith.constant 0 : i32
    return %c0_i32, %c0_i32_0, %c0_i32_1, %c0_i32_2 : i32, i32, i32, i32
  }
  func.func @transform_2(%arg0: i32) -> (i32, i32) {
    %c0_i32 = arith.constant 0 : i32
    %c0_i32_0 = arith.constant 0 : i32
    %c0_i32_1 = arith.constant 0 : i32
    return %c0_i32, %c0_i32_0 : i32, i32
  }
  func.func @transform_3(%arg0: i32) -> (i32, i32, i32, i32) {
    %c0_i32 = arith.constant 0 : i32
    %c0_i32_0 = arith.constant 0 : i32
    %c0_i32_1 = arith.constant 0 : i32
    %c0_i32_2 = arith.constant 0 : i32
    %c0_i32_3 = arith.constant 0 : i32
    return %c0_i32, %c0_i32_0, %c0_i32_1, %c0_i32_2 : i32, i32, i32, i32
  }
  func.func @transform_4(%arg0: i32) -> (i32, i32) {
    %c0_i32 = arith.constant 0 : i32
    %c0_i32_0 = arith.constant 0 : i32
    %c0_i32_1 = arith.constant 0 : i32
    return %c0_i32, %c0_i32_0 : i32, i32
  }
  func.func @transform_5(%arg0: i32) -> (i32, i32, i32) {
    %c0_i32 = arith.constant 0 : i32
    %c0_i32_0 = arith.constant 0 : i32
    %c0_i32_1 = arith.constant 0 : i32
    return %arg0, %c0_i32, %c0_i32_0 : i32, i32, i32
  }
}

</mosaic_0001>

<llo_original>
// kernel: tpu_custom_call.1
$region0: #{tpu_custom_call.1}
  #allocation0 [shape = 'u32[]', space=smem, size = 0x4, offset = 0x4, fixed_abs, tag = 'smem constant byte address 0x4 - core index']
  #allocation1 [shape = 'u32[144,128]{1,0:T(1,128)}', space=vmem, size = 0x12000, scoped, tag = 'internal scratch']
  #allocation2 [shape = 'f32[18,18,8]{2,1,0:T(8,128)}', space=vmem, size = 0x36000, scoped, tag = 'scratch operand']
  #allocation3 [shape = 'f32[18,18,8]{2,1,0:T(8,128)}', space=vmem, size = 0x36000, scoped, tag = 'scratch operand']
  %s0 = inlined_call_operand.vmem [shape: bf16[2,16,16,8], index: 0, kind: input, shape index: {}]
  %s1 = inlined_call_operand.vmem [shape: bf16[3,3,8,8], index: 1, kind: input, shape index: {}]
  %s2 = inlined_call_operand.vmem [shape: f32[1,8], index: 2, kind: input, shape index: {}]
  %s3 = inlined_call_operand.vmem [shape: bf16[3,3,8,8], index: 3, kind: input, shape index: {}]
  %s4 = inlined_call_operand.vmem [shape: f32[1,8], index: 4, kind: input, shape index: {}]
  %s5 = inlined_call_operand.vmem [shape: f32[2,256,8], index: 5, kind: output, shape index: {}]
  %s6 = sld [smem:[#allocation0]]
  $region53: #{tpu_custom_call.1} parent=0
    _
  %s8 = ssub.s32 1, %s6
  %s9 = scalar_select 0, %s8, %s6
  loop: start=0, step=1, limit=4
  $region2: #{tpu_custom_call.1} parent=0 // loop_pre_header
    _
  $region3: #{tpu_custom_call.1} parent=0 // loop_header
    %s11 = sphi 0, %s15
    %p12 = scmp.ge.s32.totalorder %s11, 4
    %s21 = sphi 0, %s23
    %s24 = sphi 0, %s21
    %s25 = sphi 0, %s24
    %s41 = sphi 0, %s25
    %s45 = sphi 0, %s45
    %s47 = sphi 0, %s45
    %s48 = sphi 0, %s47
    %s62 = sphi 0, %s48
    %s66 = sphi 0, %s66
    %s68 = sphi 0, %s66
    %s69 = sphi 0, %s68
    %s83 = sphi 0, %s69
    %s87 = sphi 0, %s87
    %s89 = sphi 0, %s87
    %s90 = sphi 0, %s89
    %s104 = sphi 0, %s90
    %s108 = sphi 0, %s108
    %s110 = sphi 0, %s108
    %s111 = sphi 0, %s110
    %s125 = sphi 0, %s111
    %s131 = sphi 0, %s133
    %s134 = sphi 0, %s131
    %s135 = sphi 0, %s134
    %s151 = sphi 0, %s135
  $region4: #{tpu_custom_call.1} parent=0 // loop_header_branch
    %14 = sbr.rel (%p12) target = $region8
  $region5: #{tpu_custom_call.1} parent=0 // loop_body
    %s16 = ssub.s32 %s11, 1
    %s17 = ssub.s32 %s11, 2
    %s18 = sadd.s32 %s11, 1
    %s19 = ssub.s32 %s11, %s18
    %p20 = scmp.eq.s32.totalorder %s19, 0
    %s22 = sadd.s32 %s21, 1
    %s23 = scalar_select %p20, %s21, %s22
    %p26 = pneg %p20
    %p27 = scmp.eq.s32.totalorder %s11, 1
    %p28 = por %p26, %p27
    %p29 = scmp.ne.s32.totalorder %s21, %s24
    %p30 = scmp.eq.s32.totalorder %s11, 0
    %p31 = por %p29, %p30
    %p32 = scmp.ne.s32.totalorder %s21, %s24
    %p33 = scmp.eq.s32.totalorder %s16, 1
    %p34 = por %p32, %p33
    %p35 = scmp.ne.s32.totalorder %s24, %s25
    %p36 = scmp.eq.s32.totalorder %s16, 0
    %p37 = por %p35, %p36
    %p38 = scmp.ne.s32.totalorder %s24, %s25
    %p39 = scmp.eq.s32.totalorder %s17, 1
    %p40 = por %p38, %p39
    %p42 = scmp.ne.s32.totalorder %s25, %s41
    %p43 = scmp.eq.s32.totalorder %s17, 0
    %p44 = por %p42, %p43
    %s46 = sadd.s32 %s45, 1
    %p49 = scmp.eq.s32.totalorder %s11, 1
    %p50 = scmp.ne.s32.totalorder %s45, %s47
    %p51 = scmp.eq.s32.totalorder %s11, 0
    %p52 = por %p50, %p51
    %p53 = scmp.ne.s32.totalorder %s45, %s47
    %p54 = scmp.eq.s32.totalorder %s16, 1
    %p55 = por %p53, %p54
    %p56 = scmp.ne.s32.totalorder %s47, %s48
    %p57 = scmp.eq.s32.totalorder %s16, 0
    %p58 = por %p56, %p57
    %p59 = scmp.ne.s32.totalorder %s47, %s48
    %p60 = scmp.eq.s32.totalorder %s17, 1
    %p61 = por %p59, %p60
    %p63 = scmp.ne.s32.totalorder %s48, %s62
    %p64 = scmp.eq.s32.totalorder %s17, 0
    %p65 = por %p63, %p64
    %s67 = sadd.s32 %s66, 1
    %p70 = scmp.eq.s32.totalorder %s11, 1
    %p71 = scmp.ne.s32.totalorder %s66, %s68
    %p72 = scmp.eq.s32.totalorder %s11, 0
    %p73 = por %p71, %p72
    %p74 = scmp.ne.s32.totalorder %s66, %s68
    %p75 = scmp.eq.s32.totalorder %s16, 1
    %p76 = por %p74, %p75
    %p77 = scmp.ne.s32.totalorder %s68, %s69
    %p78 = scmp.eq.s32.totalorder %s16, 0
    %p79 = por %p77, %p78
    %p80 = scmp.ne.s32.totalorder %s68, %s69
    %p81 = scmp.eq.s32.totalorder %s17, 1
    %p82 = por %p80, %p81
    %p84 = scmp.ne.s32.totalorder %s69, %s83
    %p85 = scmp.eq.s32.totalorder %s17, 0
    %p86 = por %p84, %p85
    %s88 = sadd.s32 %s87, 1
    %p91 = scmp.eq.s32.totalorder %s11, 1
    %p92 = scmp.ne.s32.totalorder %s87, %s89
    %p93 = scmp.eq.s32.totalorder %s11, 0
    %p94 = por %p92, %p93
    %p95 = scmp.ne.s32.totalorder %s87, %s89
    %p96 = scmp.eq.s32.totalorder %s16, 1
    %p97 = por %p95, %p96
    %p98 = scmp.ne.s32.totalorder %s89, %s90
    %p99 = scmp.eq.s32.totalorder %s16, 0
    %p100 = por %p98, %p99
    %p101 = scmp.ne.s32.totalorder %s89, %s90
    %p102 = scmp.eq.s32.totalorder %s17, 1
    %p103 = por %p101, %p102
    %p105 = scmp.ne.s32.totalorder %s90, %s104
    %p106 = scmp.eq.s32.totalorder %s17, 0
    %p107 = por %p105, %p106
    %s109 = sadd.s32 %s108, 1
    %p112 = scmp.eq.s32.totalorder %s11, 1
    %p113 = scmp.ne.s32.totalorder %s108, %s110
    %p114 = scmp.eq.s32.totalorder %s11, 0
    %p115 = por %p113, %p114
    %p116 = scmp.ne.s32.totalorder %s108, %s110
    %p117 = scmp.eq.s32.totalorder %s16, 1
    %p118 = por %p116, %p117
    %p119 = scmp.ne.s32.totalorder %s110, %s111
    %p120 = scmp.eq.s32.totalorder %s16, 0
    %p121 = por %p119, %p120
    %p122 = scmp.ne.s32.totalorder %s110, %s111
    %p123 = scmp.eq.s32.totalorder %s17, 1
    %p124 = por %p122, %p123
    %p126 = scmp.ne.s32.totalorder %s111, %s125
    %p127 = scmp.eq.s32.totalorder %s17, 0
    %p128 = por %p126, %p127
    %s129 = ssub.s32 %s11, %s18
    %p130 = scmp.eq.s32.totalorder %s129, 0
    %s132 = sadd.s32 %s131, 1
    %s133 = scalar_select %p130, %s131, %s132
    %p136 = pneg %p130
    %p137 = scmp.eq.s32.totalorder %s11, 1
    %p138 = por %p136, %p137
    %p139 = scmp.ne.s32.totalorder %s131, %s134
    %p140 = scmp.eq.s32.totalorder %s11, 0
    %p141 = por %p139, %p140
    %p142 = scmp.ne.s32.totalorder %s131, %s134
    %p143 = scmp.eq.s32.totalorder %s16, 1
    %p144 = por %p142, %p143
    %p145 = scmp.ne.s32.totalorder %s134, %s135
    %p146 = scmp.eq.s32.totalorder %s16, 0
    %p147 = por %p145, %p146
    %p148 = scmp.ne.s32.totalorder %s134, %s135
    %p149 = scmp.eq.s32.totalorder %s17, 1
    %p150 = por %p148, %p149
    %p152 = scmp.ne.s32.totalorder %s135, %s151
    %p153 = scmp.eq.s32.totalorder %s17, 0
    %p154 = por %p152, %p153
    %p155 = scmp.le.s32.totalorder 1, %s11
    %p156 = scmp.lt.s32.totalorder %s11, 3
    %p157 = pnand %p155, %p156
    %p158 = pneg %p157
    // Predicated region
    $region9: #{tpu_custom_call.1} parent=5 // pred_check
      _
    $region10: #{tpu_custom_call.1} parent=5 // pred_check_branch
      %160 = sbr.rel (%p157) target = $region12
    $region11: #{tpu_custom_call.1} parent=5 // pred_region
      %s161 = ssub.s32 %s11, 1
      // Predicated region
      $region13: #{tpu_custom_call.1} parent=11 // pred_check
        %p162 = pneg %p58
      $region14: #{tpu_custom_call.1} parent=11 // pred_check_branch
        %164 = sbr.rel (%p162) target = $region16
      $region15: #{tpu_custom_call.1} parent=11 // pred_region
        _
      $region16: #{tpu_custom_call.1} parent=11 // pred_fallthru
        _
      // Predicated region
      $region17: #{tpu_custom_call.1} parent=11 // pred_check
        %p165 = pneg %p79
      $region18: #{tpu_custom_call.1} parent=11 // pred_check_branch
        %167 = sbr.rel (%p165) target = $region20
      $region19: #{tpu_custom_call.1} parent=11 // pred_region
        _
      $region20: #{tpu_custom_call.1} parent=11 // pred_fallthru
        _
      // Predicated region
      $region21: #{tpu_custom_call.1} parent=11 // pred_check
        %p168 = pneg %p100
      $region22: #{tpu_custom_call.1} parent=11 // pred_check_branch
        %170 = sbr.rel (%p168) target = $region24
      $region23: #{tpu_custom_call.1} parent=11 // pred_region
        _
      $region24: #{tpu_custom_call.1} parent=11 // pred_fallthru
        _
      // Predicated region
      $region25: #{tpu_custom_call.1} parent=11 // pred_check
        %p171 = pneg %p121
      $region26: #{tpu_custom_call.1} parent=11 // pred_check_branch
        %173 = sbr.rel (%p171) target = $region28
      $region27: #{tpu_custom_call.1} parent=11 // pred_region
        _
      $region28: #{tpu_custom_call.1} parent=11 // pred_fallthru
        _
    $region12: #{tpu_custom_call.1} parent=5 // pred_fallthru
      _
    %p174 = scmp.lt.s32.totalorder %s11, 2
    // Predicated region
    $region29: #{tpu_custom_call.1} parent=5 // pred_check
      %p175 = pneg %p174
    $region30: #{tpu_custom_call.1} parent=5 // pred_check_branch
      %177 = sbr.rel (%p175) target = $region32
    $region31: #{tpu_custom_call.1} parent=5 // pred_region
      // Predicated region
      $region33: #{tpu_custom_call.1} parent=31 // pred_check
        %p178 = pneg %p31
      $region34: #{tpu_custom_call.1} parent=31 // pred_check_branch
        %180 = sbr.rel (%p178) target = $region36
      $region35: #{tpu_custom_call.1} parent=31 // pred_region
        %p181 = scmp.lt.s32.totalorder %s11, 1
        %s182 = scalar_select %p181, %s11, 1
        %s183 = smul.addr %s182, 32
        %s184 = smul.addr %s183, 4
        %s185 = scalar_lea.vmem %s0, %s184
      $region36: #{tpu_custom_call.1} parent=31 // pred_fallthru
        _
    $region32: #{tpu_custom_call.1} parent=5 // pred_fallthru
      _
    %p186 = scmp.le.s32.totalorder 1, %s11
    %p187 = scmp.lt.s32.totalorder %s11, 3
    %p188 = pnand %p186, %p187
    %p189 = pneg %p188
    // Predicated region
    $region37: #{tpu_custom_call.1} parent=5 // pred_check
      _
    $region38: #{tpu_custom_call.1} parent=5 // pred_check_branch
      %191 = sbr.rel (%p188) target = $region40
    $region39: #{tpu_custom_call.1} parent=5 // pred_region
      %s192 = ssub.s32 %s11, 1
      %p193 = scmp.lt.s32.totalorder %s16, 1
      %s194 = scalar_select %p193, %s16, 1
      %s195 = smul.addr %s194, 32
      %s196 = smul.addr %s195, 4
      %s197 = scalar_lea.vmem %s0, %s196
      %p198 = pneg %p37
      %p199 = pneg %p34
      %p200 = pneg %p58
      %p201 = pneg %p55
      %p202 = pneg %p79
      %p203 = pneg %p76
      %p204 = pneg %p100
      %p205 = pneg %p97
      %p206 = pneg %p121
      %p207 = pneg %p118
      %p208 = pneg %p147
      %p209 = pneg %p144
      %p210 = scmp.lt.s32.totalorder %s16, 1
      %s211 = scalar_select %p210, %s16, 1
      %s212 = smul.addr %s211, 32
      %s213 = smul.addr %s212, 8
      %s214 = scalar_lea.vmem %s5, %s213
      %p215 = scmp.lt.s32.totalorder %s16, 1
      %s216 = scalar_select %p215, %s16, 1
      %s217 = smul.addr %s216, 32
      %s218 = smul.addr %s217, 4
      %s219 = scalar_lea.vmem %s0, %s218
      %p220 = scmp.lt.s32.totalorder %s16, 1
      %s221 = scalar_select %p220, %s16, 1
      %s222 = smul.addr %s221, 32
      %s223 = smul.addr %s222, 8
      %s224 = scalar_lea.vmem %s5, %s223
      %vm226 = vcmask 64512
      %227 = vst.msk [vmem:[#allocation2] sm:$0xff] %vm226, 0.0
      %228 = vst.msk [vmem:[#allocation2 + $0x8] sm:$0xff] %vm226, 0.0
      %vm229 = vcmask 58368
      %230 = vst.msk [vmem:[#allocation2 + $0x10] sm:$0x3] %vm229, 0.0
      %231 = vst.msk [vmem:[#allocation2 + $0x18] sm:$0xff] %vm226, 0.0
      %232 = vst.msk [vmem:[#allocation2 + $0x20] sm:$0xff] %vm226, 0.0
      %233 = vst.msk [vmem:[#allocation2 + $0x28] sm:$0x3] %vm229, 0.0
      %234 = vst.msk [vmem:[#allocation2 + $0x30] sm:$0xff] %vm226, 0.0
      %235 = vst.msk [vmem:[#allocation2 + $0x38] sm:$0xff] %vm226, 0.0
      %236 = vst.msk [vmem:[#allocation2 + $0x40] sm:$0x3] %vm229, 0.0
      %237 = vst.msk [vmem:[#allocation2 + $0x48] sm:$0xff] %vm226, 0.0
      %238 = vst.msk [vmem:[#allocation2 + $0x50] sm:$0xff] %vm226, 0.0
      %239 = vst.msk [vmem:[#allocation2 + $0x58] sm:$0x3] %vm229, 0.0
      %240 = vst.msk [vmem:[#allocation2 + $0x60] sm:$0xff] %vm226, 0.0
      %241 = vst.msk [vmem:[#allocation2 + $0x68] sm:$0xff] %vm226, 0.0
      %242 = vst.msk [vmem:[#allocation2 + $0x70] sm:$0x3] %vm229, 0.0
      %243 = vst.msk [vmem:[#allocation2 + $0x78] sm:$0xff] %vm226, 0.0
      %244 = vst.msk [vmem:[#allocation2 + $0x80] sm:$0xff] %vm226, 0.0
      %245 = vst.msk [vmem:[#allocation2 + $0x88] sm:$0x3] %vm229, 0.0
      %246 = vst.msk [vmem:[#allocation2 + $0x90] sm:$0xff] %vm226, 0.0
      %247 = vst.msk [vmem:[#allocation2 + $0x98] sm:$0xff] %vm226, 0.0
      %248 = vst.msk [vmem:[#allocation2 + $0xa0] sm:$0x3] %vm229, 0.0
      %249 = vst.msk [vmem:[#allocation2 + $0xa8] sm:$0xff] %vm226, 0.0
      %250 = vst.msk [vmem:[#allocation2 + $0xb0] sm:$0xff] %vm226, 0.0
      %251 = vst.msk [vmem:[#allocation2 + $0xb8] sm:$0x3] %vm229, 0.0
      %252 = vst.msk [vmem:[#allocation2 + $0xc0] sm:$0xff] %vm226, 0.0
      %253 = vst.msk [vmem:[#allocation2 + $0xc8] sm:$0xff] %vm226, 0.0
      %254 = vst.msk [vmem:[#allocation2 + $0xd0] sm:$0x3] %vm229, 0.0
      %255 = vst.msk [vmem:[#allocation2 + $0xd8] sm:$0xff] %vm226, 0.0
      %256 = vst.msk [vmem:[#allocation2 + $0xe0] sm:$0xff] %vm226, 0.0
      %257 = vst.msk [vmem:[#allocation2 + $0xe8] sm:$0x3] %vm229, 0.0
      %258 = vst.msk [vmem:[#allocation2 + $0xf0] sm:$0xff] %vm226, 0.0
      %259 = vst.msk [vmem:[#allocation2 + $0xf8] sm:$0xff] %vm226, 0.0
      %260 = vst.msk [vmem:[#allocation2 + $0x100] sm:$0x3] %vm229, 0.0
      %261 = vst.msk [vmem:[#allocation2 + $0x108] sm:$0xff] %vm226, 0.0
      %262 = vst.msk [vmem:[#allocation2 + $0x110] sm:$0xff] %vm226, 0.0
      %263 = vst.msk [vmem:[#allocation2 + $0x118] sm:$0x3] %vm229, 0.0
      %264 = vst.msk [vmem:[#allocation2 + $0x120] sm:$0xff] %vm226, 0.0
      %265 = vst.msk [vmem:[#allocation2 + $0x128] sm:$0xff] %vm226, 0.0
      %266 = vst.msk [vmem:[#allocation2 + $0x130] sm:$0x3] %vm229, 0.0
      %267 = vst.msk [vmem:[#allocation2 + $0x138] sm:$0xff] %vm226, 0.0
      %268 = vst.msk [vmem:[#allocation2 + $0x140] sm:$0xff] %vm226, 0.0
      %269 = vst.msk [vmem:[#allocation2 + $0x148] sm:$0x3] %vm229, 0.0
      %270 = vst.msk [vmem:[#allocation2 + $0x150] sm:$0xff] %vm226, 0.0
      %271 = vst.msk [vmem:[#allocation2 + $0x158] sm:$0xff] %vm226, 0.0
      %272 = vst.msk [vmem:[#allocation2 + $0x160] sm:$0x3] %vm229, 0.0
      %273 = vst.msk [vmem:[#allocation2 + $0x168] sm:$0xff] %vm226, 0.0
      %274 = vst.msk [vmem:[#allocation2 + $0x170] sm:$0xff] %vm226, 0.0
      %275 = vst.msk [vmem:[#allocation2 + $0x178] sm:$0x3] %vm229, 0.0
      %276 = vst.msk [vmem:[#allocation2 + $0x180] sm:$0xff] %vm226, 0.0
      %277 = vst.msk [vmem:[#allocation2 + $0x188] sm:$0xff] %vm226, 0.0
      %278 = vst.msk [vmem:[#allocation2 + $0x190] sm:$0x3] %vm229, 0.0
      %279 = vst.msk [vmem:[#allocation2 + $0x198] sm:$0xff] %vm226, 0.0
      %280 = vst.msk [vmem:[#allocation2 + $0x1a0] sm:$0xff] %vm226, 0.0
      %281 = vst.msk [vmem:[#allocation2 + $0x1a8] sm:$0x3] %vm229, 0.0
      %v282 = vld [vmem:[%s219] sm:$0xf]
      %v283 = vld [vmem:[%s219 + $0x4] sm:$0xf]
      %v284 = vld [vmem:[%s219 + $0x8] sm:$0xf]
      %v285 = vld [vmem:[%s219 + $0xc] sm:$0xf]
      %v286 = vld [vmem:[%s219 + $0x10] sm:$0xf]
      %v287 = vld [vmem:[%s219 + $0x14] sm:$0xf]
      %v288 = vld [vmem:[%s219 + $0x18] sm:$0xf]
      %v289 = vld [vmem:[%s219 + $0x1c] sm:$0xf]
      %v290 = vld [vmem:[%s219 + $0x20] sm:$0xf]
      %v291 = vld [vmem:[%s219 + $0x24] sm:$0xf]
      %v292 = vld [vmem:[%s219 + $0x28] sm:$0xf]
      %v293 = vld [vmem:[%s219 + $0x2c] sm:$0xf]
      %v294 = vld [vmem:[%s219 + $0x30] sm:$0xf]
      %v295 = vld [vmem:[%s219 + $0x34] sm:$0xf]
      %v296 = vld [vmem:[%s219 + $0x38] sm:$0xf]
      %v297 = vld [vmem:[%s219 + $0x3c] sm:$0xf]
      %v298 = vld [vmem:[%s219 + $0x40] sm:$0xf]
      %v299 = vld [vmem:[%s219 + $0x44] sm:$0xf]
      %v300 = vld [vmem:[%s219 + $0x48] sm:$0xf]
      %v301 = vld [vmem:[%s219 + $0x4c] sm:$0xf]
      %v302 = vld [vmem:[%s219 + $0x50] sm:$0xf]
      %v303 = vld [vmem:[%s219 + $0x54] sm:$0xf]
      %v304 = vld [vmem:[%s219 + $0x58] sm:$0xf]
      %v305 = vld [vmem:[%s219 + $0x5c] sm:$0xf]
      %v306 = vld [vmem:[%s219 + $0x60] sm:$0xf]
      %v307 = vld [vmem:[%s219 + $0x64] sm:$0xf]
      %v308 = vld [vmem:[%s219 + $0x68] sm:$0xf]
      %v309 = vld [vmem:[%s219 + $0x6c] sm:$0xf]
      %v310 = vld [vmem:[%s219 + $0x70] sm:$0xf]
      %v311 = vld [vmem:[%s219 + $0x74] sm:$0xf]
      %v312 = vld [vmem:[%s219 + $0x78] sm:$0xf]
      %v313 = vld [vmem:[%s219 + $0x7c] sm:$0xf]
      %v314 = vunpack.c.l.bf16 %v282
      %v315 = vunpack.c.l.bf16 %v283
      %v316 = vunpack.c.l.bf16 %v284
      %v317 = vunpack.c.l.bf16 %v285
      %v318 = vunpack.c.l.bf16 %v286
      %v319 = vunpack.c.l.bf16 %v287
      %v320 = vunpack.c.l.bf16 %v288
      %v321 = vunpack.c.l.bf16 %v289
      %v322 = vunpack.c.l.bf16 %v290
      %v323 = vunpack.c.l.bf16 %v291
      %v324 = vunpack.c.l.bf16 %v292
      %v325 = vunpack.c.l.bf16 %v293
      %v326 = vunpack.c.l.bf16 %v294
      %v327 = vunpack.c.l.bf16 %v295
      %v328 = vunpack.c.l.bf16 %v296
      %v329 = vunpack.c.l.bf16 %v297
      %v330 = vunpack.c.l.bf16 %v298
      %v331 = vunpack.c.l.bf16 %v299
      %v332 = vunpack.c.l.bf16 %v300
      %v333 = vunpack.c.l.bf16 %v301
      %v334 = vunpack.c.l.bf16 %v302
      %v335 = vunpack.c.l.bf16 %v303
      %v336 = vunpack.c.l.bf16 %v304
      %v337 = vunpack.c.l.bf16 %v305
      %v338 = vunpack.c.l.bf16 %v306
      %v339 = vunpack.c.l.bf16 %v307
      %v340 = vunpack.c.l.bf16 %v308
      %v341 = vunpack.c.l.bf16 %v309
      %v342 = vunpack.c.l.bf16 %v310
      %v343 = vunpack.c.l.bf16 %v311
      %v344 = vunpack.c.l.bf16 %v312
      %v345 = vunpack.c.l.bf16 %v313
      %s346 = scalar_lea.vmem [#allocation2], 24
      %347 = vst.msk [vmem:[%s346 + $0x1] sm:$0xff] %vm226, %v314
      %348 = vst.msk [vmem:[%s346 + $0x9] sm:$0xff] %vm226, %v315
      %349 = vst.msk [vmem:[%s346 + $0x19] sm:$0xff] %vm226, %v316
      %350 = vst.msk [vmem:[%s346 + $0x21] sm:$0xff] %vm226, %v317
      %351 = vst.msk [vmem:[%s346 + $0x31] sm:$0xff] %vm226, %v318
      %352 = vst.msk [vmem:[%s346 + $0x39] sm:$0xff] %vm226, %v319
      %353 = vst.msk [vmem:[%s346 + $0x49] sm:$0xff] %vm226, %v320
      %354 = vst.msk [vmem:[%s346 + $0x51] sm:$0xff] %vm226, %v321
      %355 = vst.msk [vmem:[%s346 + $0x61] sm:$0xff] %vm226, %v322
      %356 = vst.msk [vmem:[%s346 + $0x69] sm:$0xff] %vm226, %v323
      %357 = vst.msk [vmem:[%s346 + $0x79] sm:$0xff] %vm226, %v324
      %358 = vst.msk [vmem:[%s346 + $0x81] sm:$0xff] %vm226, %v325
      %359 = vst.msk [vmem:[%s346 + $0x91] sm:$0xff] %vm226, %v326
      %360 = vst.msk [vmem:[%s346 + $0x99] sm:$0xff] %vm226, %v327
      %361 = vst.msk [vmem:[%s346 + $0xa9] sm:$0xff] %vm226, %v328
      %362 = vst.msk [vmem:[%s346 + $0xb1] sm:$0xff] %vm226, %v329
      %363 = vst.msk [vmem:[%s346 + $0xc1] sm:$0xff] %vm226, %v330
      %364 = vst.msk [vmem:[%s346 + $0xc9] sm:$0xff] %vm226, %v331
      %365 = vst.msk [vmem:[%s346 + $0xd9] sm:$0xff] %vm226, %v332
      %366 = vst.msk [vmem:[%s346 + $0xe1] sm:$0xff] %vm226, %v333
      %367 = vst.msk [vmem:[%s346 + $0xf1] sm:$0xff] %vm226, %v334
      %368 = vst.msk [vmem:[%s346 + $0xf9] sm:$0xff] %vm226, %v335
      %369 = vst.msk [vmem:[%s346 + $0x109] sm:$0xff] %vm226, %v336
      %370 = vst.msk [vmem:[%s346 + $0x111] sm:$0xff] %vm226, %v337
      %371 = vst.msk [vmem:[%s346 + $0x121] sm:$0xff] %vm226, %v338
      %372 = vst.msk [vmem:[%s346 + $0x129] sm:$0xff] %vm226, %v339
      %373 = vst.msk [vmem:[%s346 + $0x139] sm:$0xff] %vm226, %v340
      %374 = vst.msk [vmem:[%s346 + $0x141] sm:$0xff] %vm226, %v341
      %375 = vst.msk [vmem:[%s346 + $0x151] sm:$0xff] %vm226, %v342
      %376 = vst.msk [vmem:[%s346 + $0x159] sm:$0xff] %vm226, %v343
      %377 = vst.msk [vmem:[%s346 + $0x169] sm:$0xff] %vm226, %v344
      %378 = vst.msk [vmem:[%s346 + $0x171] sm:$0xff] %vm226, %v345
      %v379 = vld [vmem:[#allocation2] sm:$0xff]
      %v380 = vld [vmem:[#allocation2 + $0x8] sm:$0xff]
      %v381 = vld [vmem:[#allocation2 + $0x10] sm:$0x3]
      %v382 = vld [vmem:[#allocation2 + $0x18] sm:$0xff]
      %v383 = vld [vmem:[#allocation2 + $0x20] sm:$0xff]
      %v384 = vld [vmem:[#allocation2 + $0x28] sm:$0x3]
      %v385 = vld [vmem:[#allocation2 + $0x30] sm:$0xff]
      %v386 = vld [vmem:[#allocation2 + $0x38] sm:$0xff]
      %v387 = vld [vmem:[#allocation2 + $0x40] sm:$0x3]
      %v388 = vld [vmem:[#allocation2 + $0x48] sm:$0xff]
      %v389 = vld [vmem:[#allocation2 + $0x50] sm:$0xff]
      %v390 = vld [vmem:[#allocation2 + $0x58] sm:$0x3]
      %v391 = vld [vmem:[#allocation2 + $0x60] sm:$0xff]
      %v392 = vld [vmem:[#allocation2 + $0x68] sm:$0xff]
      %v393 = vld [vmem:[#allocation2 + $0x70] sm:$0x3]
      %v394 = vld [vmem:[#allocation2 + $0x78] sm:$0xff]
      %v395 = vld [vmem:[#allocation2 + $0x80] sm:$0xff]
      %v396 = vld [vmem:[#allocation2 + $0x88] sm:$0x3]
      %v397 = vld [vmem:[#allocation2 + $0x90] sm:$0xff]
      %v398 = vld [vmem:[#allocation2 + $0x98] sm:$0xff]
      %v399 = vld [vmem:[#allocation2 + $0xa0] sm:$0x3]
      %v400 = vld [vmem:[#allocation2 + $0xa8] sm:$0xff]
      %v401 = vld [vmem:[#allocation2 + $0xb0] sm:$0xff]
      %v402 = vld [vmem:[#allocation2 + $0xb8] sm:$0x3]
      %v403 = vld [vmem:[#allocation2 + $0xc0] sm:$0xff]
      %v404 = vld [vmem:[#allocation2 + $0xc8] sm:$0xff]
      %v405 = vld [vmem:[#allocation2 + $0xd0] sm:$0x3]
      %v406 = vld [vmem:[#allocation2 + $0xd8] sm:$0xff]
      %v407 = vld [vmem:[#allocation2 + $0xe0] sm:$0xff]
      %v408 = vld [vmem:[#allocation2 + $0xe8] sm:$0x3]
      %v409 = vld [vmem:[#allocation2 + $0xf0] sm:$0xff]
      %v410 = vld [vmem:[#allocation2 + $0xf8] sm:$0xff]
      %v411 = vld [vmem:[#allocation2 + $0x100] sm:$0x3]
      %v412 = vld [vmem:[#allocation2 + $0x108] sm:$0xff]
      %v413 = vld [vmem:[#allocation2 + $0x110] sm:$0xff]
      %v414 = vld [vmem:[#allocation2 + $0x118] sm:$0x3]
      %v415 = vld [vmem:[#allocation2 + $0x120] sm:$0xff]
      %v416 = vld [vmem:[#allocation2 + $0x128] sm:$0xff]
      %v417 = vld [vmem:[#allocation2 + $0x130] sm:$0x3]
      %v418 = vld [vmem:[#allocation2 + $0x138] sm:$0xff]
      %v419 = vld [vmem:[#allocation2 + $0x140] sm:$0xff]
      %v420 = vld [vmem:[#allocation2 + $0x148] sm:$0x3]
      %v421 = vld [vmem:[#allocation2 + $0x150] sm:$0xff]
      %v422 = vld [vmem:[#allocation2 + $0x158] sm:$0xff]
      %v423 = vld [vmem:[#allocation2 + $0x160] sm:$0x3]
      %v424 = vld [vmem:[#allocation2 + $0x168] sm:$0xff]
      %v425 = vld [vmem:[#allocation2 + $0x170] sm:$0xff]
      %v426 = vld [vmem:[#allocation2 + $0x178] sm:$0x3]
      %v427 = vld [vmem:[#allocation2 + $0x180] sm:$0xff]
      %v428 = vld [vmem:[#allocation2 + $0x188] sm:$0xff]
      %v429 = vld [vmem:[#allocation2 + $0x190] sm:$0x3]
      %v430 = vld [vmem:[#allocation2 + $0x198] sm:$0xff]
      %v431 = vld [vmem:[#allocation2 + $0x1a0] sm:$0xff]
      %v432 = vld [vmem:[#allocation2 + $0x1a8] sm:$0x3]
      %v433 = vpack.c.bf16 %v380, %v379
      %v434 = vpack.c.bf16 %v383, %v382
      %v435 = vpack.c.bf16 %v386, %v385
      %v436 = vpack.c.bf16 %v389, %v388
      %v437 = vpack.c.bf16 %v392, %v391
      %v438 = vpack.c.bf16 %v395, %v394
      %v439 = vpack.c.bf16 %v398, %v397
      %v440 = vpack.c.bf16 %v401, %v400
      %v441 = vpack.c.bf16 %v404, %v403
      %v442 = vpack.c.bf16 %v407, %v406
      %v443 = vpack.c.bf16 %v410, %v409
      %v444 = vpack.c.bf16 %v413, %v412
      %v445 = vpack.c.bf16 %v416, %v415
      %v446 = vpack.c.bf16 %v419, %v418
      %v447 = vpack.c.bf16 %v422, %v421
      %v448 = vpack.c.bf16 %v425, %v424
      %v449 = vld [vmem:[%s1] sm:$0xf]
      %vm498 = vcmask 1046528
      %v499 = vrot.slane %v379, 1
      %v500 = vrot.slane %v380, 1
      %v501 = vsel %vm498, %v499, %v500
      %v502 = vrot.slane %v381, 1
      %v503 = vsel %vm498, %v500, %v502
      %v504 = vrot.slane %v382, 1
      %v505 = vrot.slane %v383, 1
      %v506 = vsel %vm498, %v504, %v505
      %v507 = vrot.slane %v384, 1
      %v508 = vsel %vm498, %v505, %v507
      %v509 = vrot.slane %v385, 1
      %v510 = vrot.slane %v386, 1
      %v511 = vsel %vm498, %v509, %v510
      %v512 = vrot.slane %v387, 1
      %v513 = vsel %vm498, %v510, %v512
      %v514 = vrot.slane %v388, 1
      %v515 = vrot.slane %v389, 1
      %v516 = vsel %vm498, %v514, %v515
      %v517 = vrot.slane %v390, 1
      %v518 = vsel %vm498, %v515, %v517
      %v519 = vrot.slane %v391, 1
      %v520 = vrot.slane %v392, 1
      %v521 = vsel %vm498, %v519, %v520
      %v522 = vrot.slane %v393, 1
      %v523 = vsel %vm498, %v520, %v522
      %v524 = vrot.slane %v394, 1
      %v525 = vrot.slane %v395, 1
      %v526 = vsel %vm498, %v524, %v525
      %v527 = vrot.slane %v396, 1
      %v528 = vsel %vm498, %v525, %v527
      %v529 = vrot.slane %v397, 1
      %v530 = vrot.slane %v398, 1
      %v531 = vsel %vm498, %v529, %v530
      %v532 = vrot.slane %v399, 1
      %v533 = vsel %vm498, %v530, %v532
      %v534 = vrot.slane %v400, 1
      %v535 = vrot.slane %v401, 1
      %v536 = vsel %vm498, %v534, %v535
      %v537 = vrot.slane %v402, 1
      %v538 = vsel %vm498, %v535, %v537
      %v539 = vrot.slane %v403, 1
      %v540 = vrot.slane %v404, 1
      %v541 = vsel %vm498, %v539, %v540
      %v542 = vrot.slane %v405, 1
      %v543 = vsel %vm498, %v540, %v542
      %v544 = vrot.slane %v406, 1
      %v545 = vrot.slane %v407, 1
      %v546 = vsel %vm498, %v544, %v545
      %v547 = vrot.slane %v408, 1
      %v548 = vsel %vm498, %v545, %v547
      %v549 = vrot.slane %v409, 1
      %v550 = vrot.slane %v410, 1
      %v551 = vsel %vm498, %v549, %v550
      %v552 = vrot.slane %v411, 1
      %v553 = vsel %vm498, %v550, %v552
      %v554 = vrot.slane %v412, 1
      %v555 = vrot.slane %v413, 1
      %v556 = vsel %vm498, %v554, %v555
      %v557 = vrot.slane %v414, 1
      %v558 = vsel %vm498, %v555, %v557
      %v559 = vrot.slane %v415, 1
      %v560 = vrot.slane %v416, 1
      %v561 = vsel %vm498, %v559, %v560
      %v562 = vrot.slane %v417, 1
      %v563 = vsel %vm498, %v560, %v562
      %v564 = vrot.slane %v418, 1
      %v565 = vrot.slane %v419, 1
      %v566 = vsel %vm498, %v564, %v565
      %v567 = vrot.slane %v420, 1
      %v568 = vsel %vm498, %v565, %v567
      %v569 = vrot.slane %v421, 1
      %v570 = vrot.slane %v422, 1
      %v571 = vsel %vm498, %v569, %v570
      %v572 = vrot.slane %v423, 1
      %v573 = vsel %vm498, %v570, %v572
      %v574 = vrot.slane %v424, 1
      %v575 = vrot.slane %v425, 1
      %v576 = vsel %vm498, %v574, %v575
      %v577 = vrot.slane %v426, 1
      %v578 = vsel %vm498, %v575, %v577
      %v611 = vpack.c.bf16 %v503, %v501
      %v612 = vpack.c.bf16 %v508, %v506
      %v613 = vpack.c.bf16 %v513, %v511
      %v614 = vpack.c.bf16 %v518, %v516
      %v615 = vpack.c.bf16 %v523, %v521
      %v616 = vpack.c.bf16 %v528, %v526
      %v617 = vpack.c.bf16 %v533, %v531
      %v618 = vpack.c.bf16 %v538, %v536
      %v619 = vpack.c.bf16 %v543, %v541
      %v620 = vpack.c.bf16 %v548, %v546
      %v621 = vpack.c.bf16 %v553, %v551
      %v622 = vpack.c.bf16 %v558, %v556
      %v623 = vpack.c.bf16 %v563, %v561
      %v624 = vpack.c.bf16 %v568, %v566
      %v625 = vpack.c.bf16 %v573, %v571
      %v626 = vpack.c.bf16 %v578, %v576
      %s627 = scalar_lea.vmem %s1, 4
      %v628 = vld [vmem:[%s627] sm:$0xf]
      %v630 = vsel %vm226, %v611, 0
      %v633 = vsel %vm226, %v612, 0
      %v636 = vsel %vm226, %v613, 0
      %v639 = vsel %vm226, %v614, 0
      %v642 = vsel %vm226, %v615, 0
      %v645 = vsel %vm226, %v616, 0
      %v648 = vsel %vm226, %v617, 0
      %v651 = vsel %vm226, %v618, 0
      %v654 = vsel %vm226, %v619, 0
      %v657 = vsel %vm226, %v620, 0
      %v660 = vsel %vm226, %v621, 0
      %v663 = vsel %vm226, %v622, 0
      %v666 = vsel %vm226, %v623, 0
      %v669 = vsel %vm226, %v624, 0
      %v672 = vsel %vm226, %v625, 0
      %v675 = vsel %vm226, %v626, 0
      %vm677 = vcmask 1043456
      %v679 = vsel %vm677, %v628, 0
      %681 = vmatprep.subr.bf16.mxu0 0
      %682 = vmatpush1.bf16.msra.mxu0 0
      %683 = vmatprep.subr.bf16.mxu0 0
      %684 = vmatpush1.bf16.msra.mxu0 0
      %685 = vmatprep.subr.bf16.mxu0 0
      %686 = vmatpush1.bf16.msra.mxu0 0
      %687 = vmatprep.subr.bf16.mxu0 0
      %688 = vmatpush1.bf16.msra.mxu0 0
      %689 = vmatprep.subr.bf16.mxu0 0
      %690 = vmatpush1.bf16.msra.mxu0 0
      %691 = vmatprep.subr.bf16.mxu0 0
      %692 = vmatpush1.bf16.msra.mxu0 0
      %693 = vmatprep.subr.bf16.mxu0 0
      %694 = vmatpush1.bf16.msra.mxu0 0
      %695 = vmatprep.subr.bf16.mxu0 0
      %696 = vmatpush1.bf16.msra.mxu0 %v679
      %697 = vmatprep.subr.bf16.mxu0 0
      %698 = vmatpush2.bf16.msra.mxu0 0
      %699 = vmatprep.subr.bf16.mxu0 0
      %700 = vmatpush2.bf16.msra.mxu0 0
      %701 = vmatprep.subr.bf16.mxu0 0
      %702 = vmatpush2.bf16.msra.mxu0 0
      %703 = vmatprep.subr.bf16.mxu0 0
      %704 = vmatpush2.bf16.msra.mxu0 0
      %705 = vmatprep.subr.bf16.mxu0 0
      %706 = vmatpush2.bf16.msra.mxu0 0
      %707 = vmatprep.subr.bf16.mxu0 0
      %708 = vmatpush2.bf16.msra.mxu0 0
      %709 = vmatprep.subr.bf16.mxu0 0
      %710 = vmatpush2.bf16.msra.mxu0 0
      %711 = vmatprep.subr.bf16.mxu0 0
      %712 = vmatpush2.bf16.msra.mxu0 0
      %713 = vmatprep.mubr.bf16.mxu0 0
      %714 = vmatmul.mubr.bf16.gmra.mxu0 %v630
      %v715 = vpop.f32.mrf.mxu0
      %v716 = vadd.f32 0.0, %v715
      %v717 = vpop.f32.mrf.mxu0
      %v718 = vpop.f32.mrf.mxu0
      %v719 = vadd.f32 0.0, %v718
      %v720 = vpop.f32.mrf.mxu0
      %721 = vmatprep.mubr.bf16.mxu0 0
      %722 = vmatmul.mubr.bf16.gmra.mxu0 %v633
      %v723 = vpop.f32.mrf.mxu0
      %v724 = vadd.f32 0.0, %v723
      %v725 = vpop.f32.mrf.mxu0
      %v726 = vpop.f32.mrf.mxu0
      %v727 = vadd.f32 0.0, %v726
      %v728 = vpop.f32.mrf.mxu0
      %729 = vmatprep.mubr.bf16.mxu0 0
      %730 = vmatmul.mubr.bf16.gmra.mxu0 %v636
      %v731 = vpop.f32.mrf.mxu0
      %v732 = vadd.f32 0.0, %v731
      %v733 = vpop.f32.mrf.mxu0
      %v734 = vpop.f32.mrf.mxu0
      %v735 = vadd.f32 0.0, %v734
      %v736 = vpop.f32.mrf.mxu0
      %737 = vmatprep.mubr.bf16.mxu0 0
      %738 = vmatmul.mubr.bf16.gmra.mxu0 %v639
      %v739 = vpop.f32.mrf.mxu0
      %v740 = vadd.f32 0.0, %v739
      %v741 = vpop.f32.mrf.mxu0
      %v742 = vpop.f32.mrf.mxu0
      %v743 = vadd.f32 0.0, %v742
      %v744 = vpop.f32.mrf.mxu0
      %745 = vmatprep.mubr.bf16.mxu0 0
      %746 = vmatmul.mubr.bf16.gmra.mxu0 %v642
      %v747 = vpop.f32.mrf.mxu0
      %v748 = vadd.f32 0.0, %v747
      %v749 = vpop.f32.mrf.mxu0
      %v750 = vpop.f32.mrf.mxu0
      %v751 = vadd.f32 0.0, %v750
      %v752 = vpop.f32.mrf.mxu0
      %753 = vmatprep.mubr.bf16.mxu0 0
      %754 = vmatmul.mubr.bf16.gmra.mxu0 %v645
      %v755 = vpop.f32.mrf.mxu0
      %v756 = vadd.f32 0.0, %v755
      %v757 = vpop.f32.mrf.mxu0
      %v758 = vpop.f32.mrf.mxu0
      %v759 = vadd.f32 0.0, %v758
      %v760 = vpop.f32.mrf.mxu0
      %761 = vmatprep.mubr.bf16.mxu0 0
      %762 = vmatmul.mubr.bf16.gmra.mxu0 %v648
      %v763 = vpop.f32.mrf.mxu0
      %v764 = vadd.f32 0.0, %v763
      %v765 = vpop.f32.mrf.mxu0
      %v766 = vpop.f32.mrf.mxu0
      %v767 = vadd.f32 0.0, %v766
      %v768 = vpop.f32.mrf.mxu0
      %769 = vmatprep.mubr.bf16.mxu0 0
      %770 = vmatmul.mubr.bf16.gmra.mxu0 %v651
      %v771 = vpop.f32.mrf.mxu0
      %v772 = vadd.f32 0.0, %v771
      %v773 = vpop.f32.mrf.mxu0
      %v774 = vpop.f32.mrf.mxu0
      %v775 = vadd.f32 0.0, %v774
      %v776 = vpop.f32.mrf.mxu0
      %777 = vmatprep.mubr.bf16.mxu0 0
      %778 = vmatmul.mubr.bf16.gmra.mxu0 %v654
      %v779 = vpop.f32.mrf.mxu0
      %v780 = vadd.f32 0.0, %v779
      %v781 = vpop.f32.mrf.mxu0
      %v782 = vpop.f32.mrf.mxu0
      %v783 = vadd.f32 0.0, %v782
      %v784 = vpop.f32.mrf.mxu0
      %785 = vmatprep.mubr.bf16.mxu0 0
      %786 = vmatmul.mubr.bf16.gmra.mxu0 %v657
      %v787 = vpop.f32.mrf.mxu0
      %v788 = vadd.f32 0.0, %v787
      %v789 = vpop.f32.mrf.mxu0
      %v790 = vpop.f32.mrf.mxu0
      %v791 = vadd.f32 0.0, %v790
      %v792 = vpop.f32.mrf.mxu0
      %793 = vmatprep.mubr.bf16.mxu0 0
      %794 = vmatmul.mubr.bf16.gmra.mxu0 %v660
      %v795 = vpop.f32.mrf.mxu0
      %v796 = vadd.f32 0.0, %v795
      %v797 = vpop.f32.mrf.mxu0
      %v798 = vpop.f32.mrf.mxu0
      %v799 = vadd.f32 0.0, %v798
      %v800 = vpop.f32.mrf.mxu0
      %801 = vmatprep.mubr.bf16.mxu0 0
      %802 = vmatmul.mubr.bf16.gmra.mxu0 %v663
      %v803 = vpop.f32.mrf.mxu0
      %v804 = vadd.f32 0.0, %v803
      %v805 = vpop.f32.mrf.mxu0
      %v806 = vpop.f32.mrf.mxu0
      %v807 = vadd.f32 0.0, %v806
      %v808 = vpop.f32.mrf.mxu0
      %809 = vmatprep.mubr.bf16.mxu0 0
      %810 = vmatmul.mubr.bf16.gmra.mxu0 %v666
      %v811 = vpop.f32.mrf.mxu0
      %v812 = vadd.f32 0.0, %v811
      %v813 = vpop.f32.mrf.mxu0
      %v814 = vpop.f32.mrf.mxu0
      %v815 = vadd.f32 0.0, %v814
      %v816 = vpop.f32.mrf.mxu0
      %817 = vmatprep.mubr.bf16.mxu0 0
      %818 = vmatmul.mubr.bf16.gmra.mxu0 %v669
      %v819 = vpop.f32.mrf.mxu0
      %v820 = vadd.f32 0.0, %v819
      %v821 = vpop.f32.mrf.mxu0
      %v822 = vpop.f32.mrf.mxu0
      %v823 = vadd.f32 0.0, %v822
      %v824 = vpop.f32.mrf.mxu0
      %825 = vmatprep.mubr.bf16.mxu0 0
      %826 = vmatmul.mubr.bf16.gmra.mxu0 %v672
      %v827 = vpop.f32.mrf.mxu0
      %v828 = vadd.f32 0.0, %v827
      %v829 = vpop.f32.mrf.mxu0
      %v830 = vpop.f32.mrf.mxu0
      %v831 = vadd.f32 0.0, %v830
      %v832 = vpop.f32.mrf.mxu0
      %833 = vmatprep.mubr.bf16.mxu0 0
      %834 = vmatmul.mubr.bf16.gmra.mxu0 %v675
      %v835 = vpop.f32.mrf.mxu0
      %v836 = vadd.f32 0.0, %v835
      %v837 = vpop.f32.mrf.mxu0
      %v838 = vpop.f32.mrf.mxu0
      %v839 = vadd.f32 0.0, %v838
      %v840 = vpop.f32.mrf.mxu0
      %841 = vdwg.mxu0
      %v843 = vsel %vm226, %v433, 0
      %v846 = vsel %vm226, %v434, 0
      %v849 = vsel %vm226, %v435, 0
      %v852 = vsel %vm226, %v436, 0
      %v855 = vsel %vm226, %v437, 0
      %v858 = vsel %vm226, %v438, 0
      %v861 = vsel %vm226, %v439, 0
      %v864 = vsel %vm226, %v440, 0
      %v867 = vsel %vm226, %v441, 0
      %v870 = vsel %vm226, %v442, 0
      %v873 = vsel %vm226, %v443, 0
      %v876 = vsel %vm226, %v444, 0
      %v879 = vsel %vm226, %v445, 0
      %v882 = vsel %vm226, %v446, 0
      %v885 = vsel %vm226, %v447, 0
      %v888 = vsel %vm226, %v448, 0
      %v891 = vsel %vm677, %v449, 0
      %893 = vmatprep.subr.bf16.mxu0 0
      %894 = vmatpush1.bf16.msra.mxu0 0
      %895 = vmatprep.subr.bf16.mxu0 0
      %896 = vmatpush1.bf16.msra.mxu0 0
      %897 = vmatprep.subr.bf16.mxu0 0
      %898 = vmatpush1.bf16.msra.mxu0 0
      %899 = vmatprep.subr.bf16.mxu0 0
      %900 = vmatpush1.bf16.msra.mxu0 0
      %901 = vmatprep.subr.bf16.mxu0 0
      %902 = vmatpush1.bf16.msra.mxu0 0
      %903 = vmatprep.subr.bf16.mxu0 0
      %904 = vmatpush1.bf16.msra.mxu0 0
      %905 = vmatprep.subr.bf16.mxu0 0
      %906 = vmatpush1.bf16.msra.mxu0 0
      %907 = vmatprep.subr.bf16.mxu0 0
      %908 = vmatpush1.bf16.msra.mxu0 %v891
      %909 = vmatprep.subr.bf16.mxu0 0
      %910 = vmatpush2.bf16.msra.mxu0 0
      %911 = vmatprep.subr.bf16.mxu0 0
      %912 = vmatpush2.bf16.msra.mxu0 0
      %913 = vmatprep.subr.bf16.mxu0 0
      %914 = vmatpush2.bf16.msra.mxu0 0
      %915 = vmatprep.subr.bf16.mxu0 0
      %916 = vmatpush2.bf16.msra.mxu0 0
      %917 = vmatprep.subr.bf16.mxu0 0
      %918 = vmatpush2.bf16.msra.mxu0 0
      %919 = vmatprep.subr.bf16.mxu0 0
      %920 = vmatpush2.bf16.msra.mxu0 0
      %921 = vmatprep.subr.bf16.mxu0 0
      %922 = vmatpush2.bf16.msra.mxu0 0
      %923 = vmatprep.subr.bf16.mxu0 0
      %924 = vmatpush2.bf16.msra.mxu0 0
      %925 = vmatprep.mubr.bf16.mxu0 0
      %926 = vmatmul.mubr.bf16.gmra.mxu0 %v843
      %v927 = vpop.f32.mrf.mxu0
      %v928 = vadd.f32 %v716, %v927
      %v929 = vpop.f32.mrf.mxu0
      %v930 = vpop.f32.mrf.mxu0
      %v931 = vadd.f32 %v719, %v930
      %v932 = vpop.f32.mrf.mxu0
      %933 = vmatprep.mubr.bf16.mxu0 0
      %934 = vmatmul.mubr.bf16.gmra.mxu0 %v846
      %v935 = vpop.f32.mrf.mxu0
      %v936 = vadd.f32 %v724, %v935
      %v937 = vpop.f32.mrf.mxu0
      %v938 = vpop.f32.mrf.mxu0
      %v939 = vadd.f32 %v727, %v938
      %v940 = vpop.f32.mrf.mxu0
      %941 = vmatprep.mubr.bf16.mxu0 0
      %942 = vmatmul.mubr.bf16.gmra.mxu0 %v849
      %v943 = vpop.f32.mrf.mxu0
      %v944 = vadd.f32 %v732, %v943
      %v945 = vpop.f32.mrf.mxu0
      %v946 = vpop.f32.mrf.mxu0
      %v947 = vadd.f32 %v735, %v946
      %v948 = vpop.f32.mrf.mxu0
      %949 = vmatprep.mubr.bf16.mxu0 0
      %950 = vmatmul.mubr.bf16.gmra.mxu0 %v852
      %v951 = vpop.f32.mrf.mxu0
      %v952 = vadd.f32 %v740, %v951
      %v953 = vpop.f32.mrf.mxu0
      %v954 = vpop.f32.mrf.mxu0
      %v955 = vadd.f32 %v743, %v954
      %v956 = vpop.f32.mrf.mxu0
      %957 = vmatprep.mubr.bf16.mxu0 0
      %958 = vmatmul.mubr.bf16.gmra.mxu0 %v855
      %v959 = vpop.f32.mrf.mxu0
      %v960 = vadd.f32 %v748, %v959
      %v961 = vpop.f32.mrf.mxu0
      %v962 = vpop.f32.mrf.mxu0
      %v963 = vadd.f32 %v751, %v962
      %v964 = vpop.f32.mrf.mxu0
      %965 = vmatprep.mubr.bf16.mxu0 0
      %966 = vmatmul.mubr.bf16.gmra.mxu0 %v858
      %v967 = vpop.f32.mrf.mxu0
      %v968 = vadd.f32 %v756, %v967
      %v969 = vpop.f32.mrf.mxu0
      %v970 = vpop.f32.mrf.mxu0
      %v971 = vadd.f32 %v759, %v970
      %v972 = vpop.f32.mrf.mxu0
      %973 = vmatprep.mubr.bf16.mxu0 0
      %974 = vmatmul.mubr.bf16.gmra.mxu0 %v861
      %v975 = vpop.f32.mrf.mxu0
      %v976 = vadd.f32 %v764, %v975
      %v977 = vpop.f32.mrf.mxu0
      %v978 = vpop.f32.mrf.mxu0
      %v979 = vadd.f32 %v767, %v978
      %v980 = vpop.f32.mrf.mxu0
      %981 = vmatprep.mubr.bf16.mxu0 0
      %982 = vmatmul.mubr.bf16.gmra.mxu0 %v864
      %v983 = vpop.f32.mrf.mxu0
      %v984 = vadd.f32 %v772, %v983
      %v985 = vpop.f32.mrf.mxu0
      %v986 = vpop.f32.mrf.mxu0
      %v987 = vadd.f32 %v775, %v986
      %v988 = vpop.f32.mrf.mxu0
      %989 = vmatprep.mubr.bf16.mxu0 0
      %990 = vmatmul.mubr.bf16.gmra.mxu0 %v867
      %v991 = vpop.f32.mrf.mxu0
      %v992 = vadd.f32 %v780, %v991
      %v993 = vpop.f32.mrf.mxu0
      %v994 = vpop.f32.mrf.mxu0
      %v995 = vadd.f32 %v783, %v994
      %v996 = vpop.f32.mrf.mxu0
      %997 = vmatprep.mubr.bf16.mxu0 0
      %998 = vmatmul.mubr.bf16.gmra.mxu0 %v870
      %v999 = vpop.f32.mrf.mxu0
      %v1000 = vadd.f32 %v788, %v999
      %v1001 = vpop.f32.mrf.mxu0
      %v1002 = vpop.f32.mrf.mxu0
      %v1003 = vadd.f32 %v791, %v1002
      %v1004 = vpop.f32.mrf.mxu0
      %1005 = vmatprep.mubr.bf16.mxu0 0
      %1006 = vmatmul.mubr.bf16.gmra.mxu0 %v873
      %v1007 = vpop.f32.mrf.mxu0
      %v1008 = vadd.f32 %v796, %v1007
      %v1009 = vpop.f32.mrf.mxu0
      %v1010 = vpop.f32.mrf.mxu0
      %v1011 = vadd.f32 %v799, %v1010
      %v1012 = vpop.f32.mrf.mxu0
      %1013 = vmatprep.mubr.bf16.mxu0 0
      %1014 = vmatmul.mubr.bf16.gmra.mxu0 %v876
      %v1015 = vpop.f32.mrf.mxu0
      %v1016 = vadd.f32 %v804, %v1015
      %v1017 = vpop.f32.mrf.mxu0
      %v1018 = vpop.f32.mrf.mxu0
      %v1019 = vadd.f32 %v807, %v1018
      %v1020 = vpop.f32.mrf.mxu0
      %1021 = vmatprep.mubr.bf16.mxu0 0
      %1022 = vmatmul.mubr.bf16.gmra.mxu0 %v879
      %v1023 = vpop.f32.mrf.mxu0
      %v1024 = vadd.f32 %v812, %v1023
      %v1025 = vpop.f32.mrf.mxu0
      %v1026 = vpop.f32.mrf.mxu0
      %v1027 = vadd.f32 %v815, %v1026
      %v1028 = vpop.f32.mrf.mxu0
      %1029 = vmatprep.mubr.bf16.mxu0 0
      %1030 = vmatmul.mubr.bf16.gmra.mxu0 %v882
      %v1031 = vpop.f32.mrf.mxu0
      %v1032 = vadd.f32 %v820, %v1031
      %v1033 = vpop.f32.mrf.mxu0
      %v1034 = vpop.f32.mrf.mxu0
      %v1035 = vadd.f32 %v823, %v1034
      %v1036 = vpop.f32.mrf.mxu0
      %1037 = vmatprep.mubr.bf16.mxu0 0
      %1038 = vmatmul.mubr.bf16.gmra.mxu0 %v885
      %v1039 = vpop.f32.mrf.mxu0
      %v1040 = vadd.f32 %v828, %v1039
      %v1041 = vpop.f32.mrf.mxu0
      %v1042 = vpop.f32.mrf.mxu0
      %v1043 = vadd.f32 %v831, %v1042
      %v1044 = vpop.f32.mrf.mxu0
      %1045 = vmatprep.mubr.bf16.mxu0 0
      %1046 = vmatmul.mubr.bf16.gmra.mxu0 %v888
      %v1047 = vpop.f32.mrf.mxu0
      %v1048 = vadd.f32 %v836, %v1047
      %v1049 = vpop.f32.mrf.mxu0
      %v1050 = vpop.f32.mrf.mxu0
      %v1051 = vadd.f32 %v839, %v1050
      %v1052 = vpop.f32.mrf.mxu0
      %1053 = vdwg.mxu0
      %vm1054 = vcmask 1045504
      %v1055 = vrot.slane %v379, 2
      %v1056 = vrot.slane %v380, 2
      %v1057 = vsel %vm1054, %v1055, %v1056
      %v1058 = vrot.slane %v381, 2
      %v1059 = vsel %vm1054, %v1056, %v1058
      %v1060 = vrot.slane %v382, 2
      %v1061 = vrot.slane %v383, 2
      %v1062 = vsel %vm1054, %v1060, %v1061
      %v1063 = vrot.slane %v384, 2
      %v1064 = vsel %vm1054, %v1061, %v1063
      %v1065 = vrot.slane %v385, 2
      %v1066 = vrot.slane %v386, 2
      %v1067 = vsel %vm1054, %v1065, %v1066
      %v1068 = vrot.slane %v387, 2
      %v1069 = vsel %vm1054, %v1066, %v1068
      %v1070 = vrot.slane %v388, 2
      %v1071 = vrot.slane %v389, 2
      %v1072 = vsel %vm1054, %v1070, %v1071
      %v1073 = vrot.slane %v390, 2
      %v1074 = vsel %vm1054, %v1071, %v1073
      %v1075 = vrot.slane %v391, 2
      %v1076 = vrot.slane %v392, 2
      %v1077 = vsel %vm1054, %v1075, %v1076
      %v1078 = vrot.slane %v393, 2
      %v1079 = vsel %vm1054, %v1076, %v1078
      %v1080 = vrot.slane %v394, 2
      %v1081 = vrot.slane %v395, 2
      %v1082 = vsel %vm1054, %v1080, %v1081
      %v1083 = vrot.slane %v396, 2
      %v1084 = vsel %vm1054, %v1081, %v1083
      %v1085 = vrot.slane %v397, 2
      %v1086 = vrot.slane %v398, 2
      %v1087 = vsel %vm1054, %v1085, %v1086
      %v1088 = vrot.slane %v399, 2
      %v1089 = vsel %vm1054, %v1086, %v1088
      %v1090 = vrot.slane %v400, 2
      %v1091 = vrot.slane %v401, 2
      %v1092 = vsel %vm1054, %v1090, %v1091
      %v1093 = vrot.slane %v402, 2
      %v1094 = vsel %vm1054, %v1091, %v1093
      %v1095 = vrot.slane %v403, 2
      %v1096 = vrot.slane %v404, 2
      %v1097 = vsel %vm1054, %v1095, %v1096
      %v1098 = vrot.slane %v405, 2
      %v1099 = vsel %vm1054, %v1096, %v1098
      %v1100 = vrot.slane %v406, 2
      %v1101 = vrot.slane %v407, 2
      %v1102 = vsel %vm1054, %v1100, %v1101
      %v1103 = vrot.slane %v408, 2
      %v1104 = vsel %vm1054, %v1101, %v1103
      %v1105 = vrot.slane %v409, 2
      %v1106 = vrot.slane %v410, 2
      %v1107 = vsel %vm1054, %v1105, %v1106
      %v1108 = vrot.slane %v411, 2
      %v1109 = vsel %vm1054, %v1106, %v1108
      %v1110 = vrot.slane %v412, 2
      %v1111 = vrot.slane %v413, 2
      %v1112 = vsel %vm1054, %v1110, %v1111
      %v1113 = vrot.slane %v414, 2
      %v1114 = vsel %vm1054, %v1111, %v1113
      %v1115 = vrot.slane %v415, 2
      %v1116 = vrot.slane %v416, 2
      %v1117 = vsel %vm1054, %v1115, %v1116
      %v1118 = vrot.slane %v417, 2
      %v1119 = vsel %vm1054, %v1116, %v1118
      %v1120 = vrot.slane %v418, 2
      %v1121 = vrot.slane %v419, 2
      %v1122 = vsel %vm1054, %v1120, %v1121
      %v1123 = vrot.slane %v420, 2
      %v1124 = vsel %vm1054, %v1121, %v1123
      %v1125 = vrot.slane %v421, 2
      %v1126 = vrot.slane %v422, 2
      %v1127 = vsel %vm1054, %v1125, %v1126
      %v1128 = vrot.slane %v423, 2
      %v1129 = vsel %vm1054, %v1126, %v1128
      %v1130 = vrot.slane %v424, 2
      %v1131 = vrot.slane %v425, 2
      %v1132 = vsel %vm1054, %v1130, %v1131
      %v1133 = vrot.slane %v426, 2
      %v1134 = vsel %vm1054, %v1131, %v1133
      %v1167 = vpack.c.bf16 %v1059, %v1057
      %v1168 = vpack.c.bf16 %v1064, %v1062
      %v1169 = vpack.c.bf16 %v1069, %v1067
      %v1170 = vpack.c.bf16 %v1074, %v1072
      %v1171 = vpack.c.bf16 %v1079, %v1077
      %v1172 = vpack.c.bf16 %v1084, %v1082
      %v1173 = vpack.c.bf16 %v1089, %v1087
      %v1174 = vpack.c.bf16 %v1094, %v1092
      %v1175 = vpack.c.bf16 %v1099, %v1097
      %v1176 = vpack.c.bf16 %v1104, %v1102
      %v1177 = vpack.c.bf16 %v1109, %v1107
      %v1178 = vpack.c.bf16 %v1114, %v1112
      %v1179 = vpack.c.bf16 %v1119, %v1117
      %v1180 = vpack.c.bf16 %v1124, %v1122
      %v1181 = vpack.c.bf16 %v1129, %v1127
      %v1182 = vpack.c.bf16 %v1134, %v1132
      %s1183 = scalar_lea.vmem %s1, 8
      %v1184 = vld [vmem:[%s1183] sm:$0xf]
      %v1186 = vsel %vm226, %v1167, 0
      %v1189 = vsel %vm226, %v1168, 0
      %v1192 = vsel %vm226, %v1169, 0
      %v1195 = vsel %vm226, %v1170, 0
      %v1198 = vsel %vm226, %v1171, 0
      %v1201 = vsel %vm226, %v1172, 0
      %v1204 = vsel %vm226, %v1173, 0
      %v1207 = vsel %vm226, %v1174, 0
      %v1210 = vsel %vm226, %v1175, 0
      %v1213 = vsel %vm226, %v1176, 0
      %v1216 = vsel %vm226, %v1177, 0
      %v1219 = vsel %vm226, %v1178, 0
      %v1222 = vsel %vm226, %v1179, 0
      %v1225 = vsel %vm226, %v1180, 0
      %v1228 = vsel %vm226, %v1181, 0
      %v1231 = vsel %vm226, %v1182, 0
      %v1234 = vsel %vm677, %v1184, 0
      %1236 = vmatprep.subr.bf16.mxu0 0
      %1237 = vmatpush1.bf16.msra.mxu0 0
      %1238 = vmatprep.subr.bf16.mxu0 0
      %1239 = vmatpush1.bf16.msra.mxu0 0
      %1240 = vmatprep.subr.bf16.mxu0 0
      %1241 = vmatpush1.bf16.msra.mxu0 0
      %1242 = vmatprep.subr.bf16.mxu0 0
      %1243 = vmatpush1.bf16.msra.mxu0 0
      %1244 = vmatprep.subr.bf16.mxu0 0
      %1245 = vmatpush1.bf16.msra.mxu0 0
      %1246 = vmatprep.subr.bf16.mxu0 0
      %1247 = vmatpush1.bf16.msra.mxu0 0
      %1248 = vmatprep.subr.bf16.mxu0 0
      %1249 = vmatpush1.bf16.msra.mxu0 0
      %1250 = vmatprep.subr.bf16.mxu0 0
      %1251 = vmatpush1.bf16.msra.mxu0 %v1234
      %1252 = vmatprep.subr.bf16.mxu0 0
      %1253 = vmatpush2.bf16.msra.mxu0 0
      %1254 = vmatprep.subr.bf16.mxu0 0
      %1255 = vmatpush2.bf16.msra.mxu0 0
      %1256 = vmatprep.subr.bf16.mxu0 0
      %1257 = vmatpush2.bf16.msra.mxu0 0
      %1258 = vmatprep.subr.bf16.mxu0 0
      %1259 = vmatpush2.bf16.msra.mxu0 0
      %1260 = vmatprep.subr.bf16.mxu0 0
      %1261 = vmatpush2.bf16.msra.mxu0 0
      %1262 = vmatprep.subr.bf16.mxu0 0
      %1263 = vmatpush2.bf16.msra.mxu0 0
      %1264 = vmatprep.subr.bf16.mxu0 0
      %1265 = vmatpush2.bf16.msra.mxu0 0
      %1266 = vmatprep.subr.bf16.mxu0 0
      %1267 = vmatpush2.bf16.msra.mxu0 0
      %1268 = vmatprep.mubr.bf16.mxu0 0
      %1269 = vmatmul.mubr.bf16.gmra.mxu0 %v1186
      %v1270 = vpop.f32.mrf.mxu0
      %v1271 = vadd.f32 0.0, %v1270
      %v1272 = vpop.f32.mrf.mxu0
      %v1273 = vpop.f32.mrf.mxu0
      %v1274 = vadd.f32 0.0, %v1273
      %v1275 = vpop.f32.mrf.mxu0
      %1276 = vmatprep.mubr.bf16.mxu0 0
      %1277 = vmatmul.mubr.bf16.gmra.mxu0 %v1189
      %v1278 = vpop.f32.mrf.mxu0
      %v1279 = vadd.f32 0.0, %v1278
      %v1280 = vpop.f32.mrf.mxu0
      %v1281 = vpop.f32.mrf.mxu0
      %v1282 = vadd.f32 0.0, %v1281
      %v1283 = vpop.f32.mrf.mxu0
      %1284 = vmatprep.mubr.bf16.mxu0 0
      %1285 = vmatmul.mubr.bf16.gmra.mxu0 %v1192
      %v1286 = vpop.f32.mrf.mxu0
      %v1287 = vadd.f32 0.0, %v1286
      %v1288 = vpop.f32.mrf.mxu0
      %v1289 = vpop.f32.mrf.mxu0
      %v1290 = vadd.f32 0.0, %v1289
      %v1291 = vpop.f32.mrf.mxu0
      %1292 = vmatprep.mubr.bf16.mxu0 0
      %1293 = vmatmul.mubr.bf16.gmra.mxu0 %v1195
      %v1294 = vpop.f32.mrf.mxu0
      %v1295 = vadd.f32 0.0, %v1294
      %v1296 = vpop.f32.mrf.mxu0
      %v1297 = vpop.f32.mrf.mxu0
      %v1298 = vadd.f32 0.0, %v1297
      %v1299 = vpop.f32.mrf.mxu0
      %1300 = vmatprep.mubr.bf16.mxu0 0
      %1301 = vmatmul.mubr.bf16.gmra.mxu0 %v1198
      %v1302 = vpop.f32.mrf.mxu0
      %v1303 = vadd.f32 0.0, %v1302
      %v1304 = vpop.f32.mrf.mxu0
      %v1305 = vpop.f32.mrf.mxu0
      %v1306 = vadd.f32 0.0, %v1305
      %v1307 = vpop.f32.mrf.mxu0
      %1308 = vmatprep.mubr.bf16.mxu0 0
      %1309 = vmatmul.mubr.bf16.gmra.mxu0 %v1201
      %v1310 = vpop.f32.mrf.mxu0
      %v1311 = vadd.f32 0.0, %v1310
      %v1312 = vpop.f32.mrf.mxu0
      %v1313 = vpop.f32.mrf.mxu0
      %v1314 = vadd.f32 0.0, %v1313
      %v1315 = vpop.f32.mrf.mxu0
      %1316 = vmatprep.mubr.bf16.mxu0 0
      %1317 = vmatmul.mubr.bf16.gmra.mxu0 %v1204
      %v1318 = vpop.f32.mrf.mxu0
      %v1319 = vadd.f32 0.0, %v1318
      %v1320 = vpop.f32.mrf.mxu0
      %v1321 = vpop.f32.mrf.mxu0
      %v1322 = vadd.f32 0.0, %v1321
      %v1323 = vpop.f32.mrf.mxu0
      %1324 = vmatprep.mubr.bf16.mxu0 0
      %1325 = vmatmul.mubr.bf16.gmra.mxu0 %v1207
      %v1326 = vpop.f32.mrf.mxu0
      %v1327 = vadd.f32 0.0, %v1326
      %v1328 = vpop.f32.mrf.mxu0
      %v1329 = vpop.f32.mrf.mxu0
      %v1330 = vadd.f32 0.0, %v1329
      %v1331 = vpop.f32.mrf.mxu0
      %1332 = vmatprep.mubr.bf16.mxu0 0
      %1333 = vmatmul.mubr.bf16.gmra.mxu0 %v1210
      %v1334 = vpop.f32.mrf.mxu0
      %v1335 = vadd.f32 0.0, %v1334
      %v1336 = vpop.f32.mrf.mxu0
      %v1337 = vpop.f32.mrf.mxu0
      %v1338 = vadd.f32 0.0, %v1337
      %v1339 = vpop.f32.mrf.mxu0
      %1340 = vmatprep.mubr.bf16.mxu0 0
      %1341 = vmatmul.mubr.bf16.gmra.mxu0 %v1213
      %v1342 = vpop.f32.mrf.mxu0
      %v1343 = vadd.f32 0.0, %v1342
      %v1344 = vpop.f32.mrf.mxu0
      %v1345 = vpop.f32.mrf.mxu0
      %v1346 = vadd.f32 0.0, %v1345
      %v1347 = vpop.f32.mrf.mxu0
      %1348 = vmatprep.mubr.bf16.mxu0 0
      %1349 = vmatmul.mubr.bf16.gmra.mxu0 %v1216
      %v1350 = vpop.f32.mrf.mxu0
      %v1351 = vadd.f32 0.0, %v1350
      %v1352 = vpop.f32.mrf.mxu0
      %v1353 = vpop.f32.mrf.mxu0
      %v1354 = vadd.f32 0.0, %v1353
      %v1355 = vpop.f32.mrf.mxu0
      %1356 = vmatprep.mubr.bf16.mxu0 0
      %1357 = vmatmul.mubr.bf16.gmra.mxu0 %v1219
      %v1358 = vpop.f32.mrf.mxu0
      %v1359 = vadd.f32 0.0, %v1358
      %v1360 = vpop.f32.mrf.mxu0
      %v1361 = vpop.f32.mrf.mxu0
      %v1362 = vadd.f32 0.0, %v1361
      %v1363 = vpop.f32.mrf.mxu0
      %1364 = vmatprep.mubr.bf16.mxu0 0
      %1365 = vmatmul.mubr.bf16.gmra.mxu0 %v1222
      %v1366 = vpop.f32.mrf.mxu0
      %v1367 = vadd.f32 0.0, %v1366
      %v1368 = vpop.f32.mrf.mxu0
      %v1369 = vpop.f32.mrf.mxu0
      %v1370 = vadd.f32 0.0, %v1369
      %v1371 = vpop.f32.mrf.mxu0
      %1372 = vmatprep.mubr.bf16.mxu0 0
      %1373 = vmatmul.mubr.bf16.gmra.mxu0 %v1225
      %v1374 = vpop.f32.mrf.mxu0
      %v1375 = vadd.f32 0.0, %v1374
      %v1376 = vpop.f32.mrf.mxu0
      %v1377 = vpop.f32.mrf.mxu0
      %v1378 = vadd.f32 0.0, %v1377
      %v1379 = vpop.f32.mrf.mxu0
      %1380 = vmatprep.mubr.bf16.mxu0 0
      %1381 = vmatmul.mubr.bf16.gmra.mxu0 %v1228
      %v1382 = vpop.f32.mrf.mxu0
      %v1383 = vadd.f32 0.0, %v1382
      %v1384 = vpop.f32.mrf.mxu0
      %v1385 = vpop.f32.mrf.mxu0
      %v1386 = vadd.f32 0.0, %v1385
      %v1387 = vpop.f32.mrf.mxu0
      %1388 = vmatprep.mubr.bf16.mxu0 0
      %1389 = vmatmul.mubr.bf16.gmra.mxu0 %v1231
      %v1390 = vpop.f32.mrf.mxu0
      %v1391 = vadd.f32 0.0, %v1390
      %v1392 = vpop.f32.mrf.mxu0
      %v1393 = vpop.f32.mrf.mxu0
      %v1394 = vadd.f32 0.0, %v1393
      %v1395 = vpop.f32.mrf.mxu0
      %1396 = vdwg.mxu0
      %v1397 = vadd.f32 %v928, %v1271
      %v1398 = vadd.f32 %v931, %v1274
      %v1399 = vadd.f32 %v936, %v1279
      %v1400 = vadd.f32 %v939, %v1282
      %v1401 = vadd.f32 %v944, %v1287
      %v1402 = vadd.f32 %v947, %v1290
      %v1403 = vadd.f32 %v952, %v1295
      %v1404 = vadd.f32 %v955, %v1298
      %v1405 = vadd.f32 %v960, %v1303
      %v1406 = vadd.f32 %v963, %v1306
      %v1407 = vadd.f32 %v968, %v1311
      %v1408 = vadd.f32 %v971, %v1314
      %v1409 = vadd.f32 %v976, %v1319
      %v1410 = vadd.f32 %v979, %v1322
      %v1411 = vadd.f32 %v984, %v1327
      %v1412 = vadd.f32 %v987, %v1330
      %v1413 = vadd.f32 %v992, %v1335
      %v1414 = vadd.f32 %v995, %v1338
      %v1415 = vadd.f32 %v1000, %v1343
      %v1416 = vadd.f32 %v1003, %v1346
      %v1417 = vadd.f32 %v1008, %v1351
      %v1418 = vadd.f32 %v1011, %v1354
      %v1419 = vadd.f32 %v1016, %v1359
      %v1420 = vadd.f32 %v1019, %v1362
      %v1421 = vadd.f32 %v1024, %v1367
      %v1422 = vadd.f32 %v1027, %v1370
      %v1423 = vadd.f32 %v1032, %v1375
      %v1424 = vadd.f32 %v1035, %v1378
      %v1425 = vadd.f32 %v1040, %v1383
      %v1426 = vadd.f32 %v1043, %v1386
      %v1427 = vadd.f32 %v1048, %v1391
      %v1428 = vadd.f32 %v1051, %v1394
      %v1429 = vpack.c.bf16 %v428, %v427
      %s1430 = scalar_lea.vmem %s1, 12
      %v1431 = vld [vmem:[%s1430] sm:$0xf]
      %v1433 = vsel %vm226, %v1429, 0
      %v1436 = vsel %vm677, %v1431, 0
      %1438 = vmatprep.subr.bf16.mxu0 0
      %1439 = vmatpush1.bf16.msra.mxu0 0
      %1440 = vmatprep.subr.bf16.mxu0 0
      %1441 = vmatpush1.bf16.msra.mxu0 0
      %1442 = vmatprep.subr.bf16.mxu0 0
      %1443 = vmatpush1.bf16.msra.mxu0 0
      %1444 = vmatprep.subr.bf16.mxu0 0
      %1445 = vmatpush1.bf16.msra.mxu0 0
      %1446 = vmatprep.subr.bf16.mxu0 0
      %1447 = vmatpush1.bf16.msra.mxu0 0
      %1448 = vmatprep.subr.bf16.mxu0 0
      %1449 = vmatpush1.bf16.msra.mxu0 0
      %1450 = vmatprep.subr.bf16.mxu0 0
      %1451 = vmatpush1.bf16.msra.mxu0 0
      %1452 = vmatprep.subr.bf16.mxu0 0
      %1453 = vmatpush1.bf16.msra.mxu0 %v1436
      %1454 = vmatprep.subr.bf16.mxu0 0
      %1455 = vmatpush2.bf16.msra.mxu0 0
      %1456 = vmatprep.subr.bf16.mxu0 0
      %1457 = vmatpush2.bf16.msra.mxu0 0
      %1458 = vmatprep.subr.bf16.mxu0 0
      %1459 = vmatpush2.bf16.msra.mxu0 0
      %1460 = vmatprep.subr.bf16.mxu0 0
      %1461 = vmatpush2.bf16.msra.mxu0 0
      %1462 = vmatprep.subr.bf16.mxu0 0
      %1463 = vmatpush2.bf16.msra.mxu0 0
      %1464 = vmatprep.subr.bf16.mxu0 0
      %1465 = vmatpush2.bf16.msra.mxu0 0
      %1466 = vmatprep.subr.bf16.mxu0 0
      %1467 = vmatpush2.bf16.msra.mxu0 0
      %1468 = vmatprep.subr.bf16.mxu0 0
      %1469 = vmatpush2.bf16.msra.mxu0 0
      %1470 = vmatprep.mubr.bf16.mxu0 0
      %1471 = vmatmul.mubr.bf16.gmra.mxu0 %v846
      %v1472 = vpop.f32.mrf.mxu0
      %v1473 = vadd.f32 0.0, %v1472
      %v1474 = vpop.f32.mrf.mxu0
      %v1475 = vpop.f32.mrf.mxu0
      %v1476 = vadd.f32 0.0, %v1475
      %v1477 = vpop.f32.mrf.mxu0
      %1478 = vmatprep.mubr.bf16.mxu0 0
      %1479 = vmatmul.mubr.bf16.gmra.mxu0 %v849
      %v1480 = vpop.f32.mrf.mxu0
      %v1481 = vadd.f32 0.0, %v1480
      %v1482 = vpop.f32.mrf.mxu0
      %v1483 = vpop.f32.mrf.mxu0
      %v1484 = vadd.f32 0.0, %v1483
      %v1485 = vpop.f32.mrf.mxu0
      %1486 = vmatprep.mubr.bf16.mxu0 0
      %1487 = vmatmul.mubr.bf16.gmra.mxu0 %v852
      %v1488 = vpop.f32.mrf.mxu0
      %v1489 = vadd.f32 0.0, %v1488
      %v1490 = vpop.f32.mrf.mxu0
      %v1491 = vpop.f32.mrf.mxu0
      %v1492 = vadd.f32 0.0, %v1491
      %v1493 = vpop.f32.mrf.mxu0
      %1494 = vmatprep.mubr.bf16.mxu0 0
      %1495 = vmatmul.mubr.bf16.gmra.mxu0 %v855
      %v1496 = vpop.f32.mrf.mxu0
      %v1497 = vadd.f32 0.0, %v1496
      %v1498 = vpop.f32.mrf.mxu0
      %v1499 = vpop.f32.mrf.mxu0
      %v1500 = vadd.f32 0.0, %v1499
      %v1501 = vpop.f32.mrf.mxu0
      %1502 = vmatprep.mubr.bf16.mxu0 0
      %1503 = vmatmul.mubr.bf16.gmra.mxu0 %v858
      %v1504 = vpop.f32.mrf.mxu0
      %v1505 = vadd.f32 0.0, %v1504
      %v1506 = vpop.f32.mrf.mxu0
      %v1507 = vpop.f32.mrf.mxu0
      %v1508 = vadd.f32 0.0, %v1507
      %v1509 = vpop.f32.mrf.mxu0
      %1510 = vmatprep.mubr.bf16.mxu0 0
      %1511 = vmatmul.mubr.bf16.gmra.mxu0 %v861
      %v1512 = vpop.f32.mrf.mxu0
      %v1513 = vadd.f32 0.0, %v1512
      %v1514 = vpop.f32.mrf.mxu0
      %v1515 = vpop.f32.mrf.mxu0
      %v1516 = vadd.f32 0.0, %v1515
      %v1517 = vpop.f32.mrf.mxu0
      %1518 = vmatprep.mubr.bf16.mxu0 0
      %1519 = vmatmul.mubr.bf16.gmra.mxu0 %v864
      %v1520 = vpop.f32.mrf.mxu0
      %v1521 = vadd.f32 0.0, %v1520
      %v1522 = vpop.f32.mrf.mxu0
      %v1523 = vpop.f32.mrf.mxu0
      %v1524 = vadd.f32 0.0, %v1523
      %v1525 = vpop.f32.mrf.mxu0
      %1526 = vmatprep.mubr.bf16.mxu0 0
      %1527 = vmatmul.mubr.bf16.gmra.mxu0 %v867
      %v1528 = vpop.f32.mrf.mxu0
      %v1529 = vadd.f32 0.0, %v1528
      %v1530 = vpop.f32.mrf.mxu0
      %v1531 = vpop.f32.mrf.mxu0
      %v1532 = vadd.f32 0.0, %v1531
      %v1533 = vpop.f32.mrf.mxu0
      %1534 = vmatprep.mubr.bf16.mxu0 0
      %1535 = vmatmul.mubr.bf16.gmra.mxu0 %v870
      %v1536 = vpop.f32.mrf.mxu0
      %v1537 = vadd.f32 0.0, %v1536
      %v1538 = vpop.f32.mrf.mxu0
      %v1539 = vpop.f32.mrf.mxu0
      %v1540 = vadd.f32 0.0, %v1539
      %v1541 = vpop.f32.mrf.mxu0
      %1542 = vmatprep.mubr.bf16.mxu0 0
      %1543 = vmatmul.mubr.bf16.gmra.mxu0 %v873
      %v1544 = vpop.f32.mrf.mxu0
      %v1545 = vadd.f32 0.0, %v1544
      %v1546 = vpop.f32.mrf.mxu0
      %v1547 = vpop.f32.mrf.mxu0
      %v1548 = vadd.f32 0.0, %v1547
      %v1549 = vpop.f32.mrf.mxu0
      %1550 = vmatprep.mubr.bf16.mxu0 0
      %1551 = vmatmul.mubr.bf16.gmra.mxu0 %v876
      %v1552 = vpop.f32.mrf.mxu0
      %v1553 = vadd.f32 0.0, %v1552
      %v1554 = vpop.f32.mrf.mxu0
      %v1555 = vpop.f32.mrf.mxu0
      %v1556 = vadd.f32 0.0, %v1555
      %v1557 = vpop.f32.mrf.mxu0
      %1558 = vmatprep.mubr.bf16.mxu0 0
      %1559 = vmatmul.mubr.bf16.gmra.mxu0 %v879
      %v1560 = vpop.f32.mrf.mxu0
      %v1561 = vadd.f32 0.0, %v1560
      %v1562 = vpop.f32.mrf.mxu0
      %v1563 = vpop.f32.mrf.mxu0
      %v1564 = vadd.f32 0.0, %v1563
      %v1565 = vpop.f32.mrf.mxu0
      %1566 = vmatprep.mubr.bf16.mxu0 0
      %1567 = vmatmul.mubr.bf16.gmra.mxu0 %v882
      %v1568 = vpop.f32.mrf.mxu0
      %v1569 = vadd.f32 0.0, %v1568
      %v1570 = vpop.f32.mrf.mxu0
      %v1571 = vpop.f32.mrf.mxu0
      %v1572 = vadd.f32 0.0, %v1571
      %v1573 = vpop.f32.mrf.mxu0
      %1574 = vmatprep.mubr.bf16.mxu0 0
      %1575 = vmatmul.mubr.bf16.gmra.mxu0 %v885
      %v1576 = vpop.f32.mrf.mxu0
      %v1577 = vadd.f32 0.0, %v1576
      %v1578 = vpop.f32.mrf.mxu0
      %v1579 = vpop.f32.mrf.mxu0
      %v1580 = vadd.f32 0.0, %v1579
      %v1581 = vpop.f32.mrf.mxu0
      %1582 = vmatprep.mubr.bf16.mxu0 0
      %1583 = vmatmul.mubr.bf16.gmra.mxu0 %v888
      %v1584 = vpop.f32.mrf.mxu0
      %v1585 = vadd.f32 0.0, %v1584
      %v1586 = vpop.f32.mrf.mxu0
      %v1587 = vpop.f32.mrf.mxu0
      %v1588 = vadd.f32 0.0, %v1587
      %v1589 = vpop.f32.mrf.mxu0
      %1590 = vmatprep.mubr.bf16.mxu0 0
      %1591 = vmatmul.mubr.bf16.gmra.mxu0 %v1433
      %v1592 = vpop.f32.mrf.mxu0
      %v1593 = vadd.f32 0.0, %v1592
      %v1594 = vpop.f32.mrf.mxu0
      %v1595 = vpop.f32.mrf.mxu0
      %v1596 = vadd.f32 0.0, %v1595
      %v1597 = vpop.f32.mrf.mxu0
      %1598 = vdwg.mxu0
      %v1599 = vadd.f32 %v1397, %v1473
      %v1600 = vadd.f32 %v1398, %v1476
      %v1601 = vadd.f32 %v1399, %v1481
      %v1602 = vadd.f32 %v1400, %v1484
      %v1603 = vadd.f32 %v1401, %v1489
      %v1604 = vadd.f32 %v1402, %v1492
      %v1605 = vadd.f32 %v1403, %v1497
      %v1606 = vadd.f32 %v1404, %v1500
      %v1607 = vadd.f32 %v1405, %v1505
      %v1608 = vadd.f32 %v1406, %v1508
      %v1609 = vadd.f32 %v1407, %v1513
      %v1610 = vadd.f32 %v1408, %v1516
      %v1611 = vadd.f32 %v1409, %v1521
      %v1612 = vadd.f32 %v1410, %v1524
      %v1613 = vadd.f32 %v1411, %v1529
      %v1614 = vadd.f32 %v1412, %v1532
      %v1615 = vadd.f32 %v1413, %v1537
      %v1616 = vadd.f32 %v1414, %v1540
      %v1617 = vadd.f32 %v1415, %v1545
      %v1618 = vadd.f32 %v1416, %v1548
      %v1619 = vadd.f32 %v1417, %v1553
      %v1620 = vadd.f32 %v1418, %v1556
      %v1621 = vadd.f32 %v1419, %v1561
      %v1622 = vadd.f32 %v1420, %v1564
      %v1623 = vadd.f32 %v1421, %v1569
      %v1624 = vadd.f32 %v1422, %v1572
      %v1625 = vadd.f32 %v1423, %v1577
      %v1626 = vadd.f32 %v1424, %v1580
      %v1627 = vadd.f32 %v1425, %v1585
      %v1628 = vadd.f32 %v1426, %v1588
      %v1629 = vadd.f32 %v1427, %v1593
      %v1630 = vadd.f32 %v1428, %v1596
      %v1634 = vrot.slane %v427, 1
      %v1635 = vrot.slane %v428, 1
      %v1636 = vsel %vm498, %v1634, %v1635
      %v1637 = vrot.slane %v429, 1
      %v1638 = vsel %vm498, %v1635, %v1637
      %v1641 = vpack.c.bf16 %v1638, %v1636
      %s1642 = scalar_lea.vmem %s1, 16
      %v1643 = vld [vmem:[%s1642] sm:$0xf]
      %v1645 = vsel %vm226, %v1641, 0
      %v1648 = vsel %vm677, %v1643, 0
      %1650 = vmatprep.subr.bf16.mxu0 0
      %1651 = vmatpush1.bf16.msra.mxu0 0
      %1652 = vmatprep.subr.bf16.mxu0 0
      %1653 = vmatpush1.bf16.msra.mxu0 0
      %1654 = vmatprep.subr.bf16.mxu0 0
      %1655 = vmatpush1.bf16.msra.mxu0 0
      %1656 = vmatprep.subr.bf16.mxu0 0
      %1657 = vmatpush1.bf16.msra.mxu0 0
      %1658 = vmatprep.subr.bf16.mxu0 0
      %1659 = vmatpush1.bf16.msra.mxu0 0
      %1660 = vmatprep.subr.bf16.mxu0 0
      %1661 = vmatpush1.bf16.msra.mxu0 0
      %1662 = vmatprep.subr.bf16.mxu0 0
      %1663 = vmatpush1.bf16.msra.mxu0 0
      %1664 = vmatprep.subr.bf16.mxu0 0
      %1665 = vmatpush1.bf16.msra.mxu0 %v1648
      %1666 = vmatprep.subr.bf16.mxu0 0
      %1667 = vmatpush2.bf16.msra.mxu0 0
      %1668 = vmatprep.subr.bf16.mxu0 0
      %1669 = vmatpush2.bf16.msra.mxu0 0
      %1670 = vmatprep.subr.bf16.mxu0 0
      %1671 = vmatpush2.bf16.msra.mxu0 0
      %1672 = vmatprep.subr.bf16.mxu0 0
      %1673 = vmatpush2.bf16.msra.mxu0 0
      %1674 = vmatprep.subr.bf16.mxu0 0
      %1675 = vmatpush2.bf16.msra.mxu0 0
      %1676 = vmatprep.subr.bf16.mxu0 0
      %1677 = vmatpush2.bf16.msra.mxu0 0
      %1678 = vmatprep.subr.bf16.mxu0 0
      %1679 = vmatpush2.bf16.msra.mxu0 0
      %1680 = vmatprep.subr.bf16.mxu0 0
      %1681 = vmatpush2.bf16.msra.mxu0 0
      %1682 = vmatprep.mubr.bf16.mxu0 0
      %1683 = vmatmul.mubr.bf16.gmra.mxu0 %v633
      %v1684 = vpop.f32.mrf.mxu0
      %v1685 = vadd.f32 0.0, %v1684
      %v1686 = vpop.f32.mrf.mxu0
      %v1687 = vpop.f32.mrf.mxu0
      %v1688 = vadd.f32 0.0, %v1687
      %v1689 = vpop.f32.mrf.mxu0
      %1690 = vmatprep.mubr.bf16.mxu0 0
      %1691 = vmatmul.mubr.bf16.gmra.mxu0 %v636
      %v1692 = vpop.f32.mrf.mxu0
      %v1693 = vadd.f32 0.0, %v1692
      %v1694 = vpop.f32.mrf.mxu0
      %v1695 = vpop.f32.mrf.mxu0
      %v1696 = vadd.f32 0.0, %v1695
      %v1697 = vpop.f32.mrf.mxu0
      %1698 = vmatprep.mubr.bf16.mxu0 0
      %1699 = vmatmul.mubr.bf16.gmra.mxu0 %v639
      %v1700 = vpop.f32.mrf.mxu0
      %v1701 = vadd.f32 0.0, %v1700
      %v1702 = vpop.f32.mrf.mxu0
      %v1703 = vpop.f32.mrf.mxu0
      %v1704 = vadd.f32 0.0, %v1703
      %v1705 = vpop.f32.mrf.mxu0
      %1706 = vmatprep.mubr.bf16.mxu0 0
      %1707 = vmatmul.mubr.bf16.gmra.mxu0 %v642
      %v1708 = vpop.f32.mrf.mxu0
      %v1709 = vadd.f32 0.0, %v1708
      %v1710 = vpop.f32.mrf.mxu0
      %v1711 = vpop.f32.mrf.mxu0
      %v1712 = vadd.f32 0.0, %v1711
      %v1713 = vpop.f32.mrf.mxu0
      %1714 = vmatprep.mubr.bf16.mxu0 0
      %1715 = vmatmul.mubr.bf16.gmra.mxu0 %v645
      %v1716 = vpop.f32.mrf.mxu0
      %v1717 = vadd.f32 0.0, %v1716
      %v1718 = vpop.f32.mrf.mxu0
      %v1719 = vpop.f32.mrf.mxu0
      %v1720 = vadd.f32 0.0, %v1719
      %v1721 = vpop.f32.mrf.mxu0
      %1722 = vmatprep.mubr.bf16.mxu0 0
      %1723 = vmatmul.mubr.bf16.gmra.mxu0 %v648
      %v1724 = vpop.f32.mrf.mxu0
      %v1725 = vadd.f32 0.0, %v1724
      %v1726 = vpop.f32.mrf.mxu0
      %v1727 = vpop.f32.mrf.mxu0
      %v1728 = vadd.f32 0.0, %v1727
      %v1729 = vpop.f32.mrf.mxu0
      %1730 = vmatprep.mubr.bf16.mxu0 0
      %1731 = vmatmul.mubr.bf16.gmra.mxu0 %v651
      %v1732 = vpop.f32.mrf.mxu0
      %v1733 = vadd.f32 0.0, %v1732
      %v1734 = vpop.f32.mrf.mxu0
      %v1735 = vpop.f32.mrf.mxu0
      %v1736 = vadd.f32 0.0, %v1735
      %v1737 = vpop.f32.mrf.mxu0
      %1738 = vmatprep.mubr.bf16.mxu0 0
      %1739 = vmatmul.mubr.bf16.gmra.mxu0 %v654
      %v1740 = vpop.f32.mrf.mxu0
      %v1741 = vadd.f32 0.0, %v1740
      %v1742 = vpop.f32.mrf.mxu0
      %v1743 = vpop.f32.mrf.mxu0
      %v1744 = vadd.f32 0.0, %v1743
      %v1745 = vpop.f32.mrf.mxu0
      %1746 = vmatprep.mubr.bf16.mxu0 0
      %1747 = vmatmul.mubr.bf16.gmra.mxu0 %v657
      %v1748 = vpop.f32.mrf.mxu0
      %v1749 = vadd.f32 0.0, %v1748
      %v1750 = vpop.f32.mrf.mxu0
      %v1751 = vpop.f32.mrf.mxu0
      %v1752 = vadd.f32 0.0, %v1751
      %v1753 = vpop.f32.mrf.mxu0
      %1754 = vmatprep.mubr.bf16.mxu0 0
      %1755 = vmatmul.mubr.bf16.gmra.mxu0 %v660
      %v1756 = vpop.f32.mrf.mxu0
      %v1757 = vadd.f32 0.0, %v1756
      %v1758 = vpop.f32.mrf.mxu0
      %v1759 = vpop.f32.mrf.mxu0
      %v1760 = vadd.f32 0.0, %v1759
      %v1761 = vpop.f32.mrf.mxu0
      %1762 = vmatprep.mubr.bf16.mxu0 0
      %1763 = vmatmul.mubr.bf16.gmra.mxu0 %v663
      %v1764 = vpop.f32.mrf.mxu0
      %v1765 = vadd.f32 0.0, %v1764
      %v1766 = vpop.f32.mrf.mxu0
      %v1767 = vpop.f32.mrf.mxu0
      %v1768 = vadd.f32 0.0, %v1767
      %v1769 = vpop.f32.mrf.mxu0
      %1770 = vmatprep.mubr.bf16.mxu0 0
      %1771 = vmatmul.mubr.bf16.gmra.mxu0 %v666
      %v1772 = vpop.f32.mrf.mxu0
      %v1773 = vadd.f32 0.0, %v1772
      %v1774 = vpop.f32.mrf.mxu0
      %v1775 = vpop.f32.mrf.mxu0
      %v1776 = vadd.f32 0.0, %v1775
      %v1777 = vpop.f32.mrf.mxu0
      %1778 = vmatprep.mubr.bf16.mxu0 0
      %1779 = vmatmul.mubr.bf16.gmra.mxu0 %v669
      %v1780 = vpop.f32.mrf.mxu0
      %v1781 = vadd.f32 0.0, %v1780
      %v1782 = vpop.f32.mrf.mxu0
      %v1783 = vpop.f32.mrf.mxu0
      %v1784 = vadd.f32 0.0, %v1783
      %v1785 = vpop.f32.mrf.mxu0
      %1786 = vmatprep.mubr.bf16.mxu0 0
      %1787 = vmatmul.mubr.bf16.gmra.mxu0 %v672
      %v1788 = vpop.f32.mrf.mxu0
      %v1789 = vadd.f32 0.0, %v1788
      %v1790 = vpop.f32.mrf.mxu0
      %v1791 = vpop.f32.mrf.mxu0
      %v1792 = vadd.f32 0.0, %v1791
      %v1793 = vpop.f32.mrf.mxu0
      %1794 = vmatprep.mubr.bf16.mxu0 0
      %1795 = vmatmul.mubr.bf16.gmra.mxu0 %v675
      %v1796 = vpop.f32.mrf.mxu0
      %v1797 = vadd.f32 0.0, %v1796
      %v1798 = vpop.f32.mrf.mxu0
      %v1799 = vpop.f32.mrf.mxu0
      %v1800 = vadd.f32 0.0, %v1799
      %v1801 = vpop.f32.mrf.mxu0
      %1802 = vmatprep.mubr.bf16.mxu0 0
      %1803 = vmatmul.mubr.bf16.gmra.mxu0 %v1645
      %v1804 = vpop.f32.mrf.mxu0
      %v1805 = vadd.f32 0.0, %v1804
      %v1806 = vpop.f32.mrf.mxu0
      %v1807 = vpop.f32.mrf.mxu0
      %v1808 = vadd.f32 0.0, %v1807
      %v1809 = vpop.f32.mrf.mxu0
      %1810 = vdwg.mxu0
      %v1811 = vadd.f32 %v1599, %v1685
      %v1812 = vadd.f32 %v1600, %v1688
      %v1813 = vadd.f32 %v1601, %v1693
      %v1814 = vadd.f32 %v1602, %v1696
      %v1815 = vadd.f32 %v1603, %v1701
      %v1816 = vadd.f32 %v1604, %v1704
      %v1817 = vadd.f32 %v1605, %v1709
      %v1818 = vadd.f32 %v1606, %v1712
      %v1819 = vadd.f32 %v1607, %v1717
      %v1820 = vadd.f32 %v1608, %v1720
      %v1821 = vadd.f32 %v1609, %v1725
      %v1822 = vadd.f32 %v1610, %v1728
      %v1823 = vadd.f32 %v1611, %v1733
      %v1824 = vadd.f32 %v1612, %v1736
      %v1825 = vadd.f32 %v1613, %v1741
      %v1826 = vadd.f32 %v1614, %v1744
      %v1827 = vadd.f32 %v1615, %v1749
      %v1828 = vadd.f32 %v1616, %v1752
      %v1829 = vadd.f32 %v1617, %v1757
      %v1830 = vadd.f32 %v1618, %v1760
      %v1831 = vadd.f32 %v1619, %v1765
      %v1832 = vadd.f32 %v1620, %v1768
      %v1833 = vadd.f32 %v1621, %v1773
      %v1834 = vadd.f32 %v1622, %v1776
      %v1835 = vadd.f32 %v1623, %v1781
      %v1836 = vadd.f32 %v1624, %v1784
      %v1837 = vadd.f32 %v1625, %v1789
      %v1838 = vadd.f32 %v1626, %v1792
      %v1839 = vadd.f32 %v1627, %v1797
      %v1840 = vadd.f32 %v1628, %v1800
      %v1841 = vadd.f32 %v1629, %v1805
      %v1842 = vadd.f32 %v1630, %v1808
      %v1843 = vrot.slane %v427, 2
      %v1844 = vrot.slane %v428, 2
      %v1845 = vsel %vm1054, %v1843, %v1844
      %v1846 = vrot.slane %v429, 2
      %v1847 = vsel %vm1054, %v1844, %v1846
      %v1850 = vpack.c.bf16 %v1847, %v1845
      %s1851 = scalar_lea.vmem %s1, 20
      %v1852 = vld [vmem:[%s1851] sm:$0xf]
      %v1854 = vsel %vm226, %v1850, 0
      %v1857 = vsel %vm677, %v1852, 0
      %1859 = vmatprep.subr.bf16.mxu0 0
      %1860 = vmatpush1.bf16.msra.mxu0 0
      %1861 = vmatprep.subr.bf16.mxu0 0
      %1862 = vmatpush1.bf16.msra.mxu0 0
      %1863 = vmatprep.subr.bf16.mxu0 0
      %1864 = vmatpush1.bf16.msra.mxu0 0
      %1865 = vmatprep.subr.bf16.mxu0 0
      %1866 = vmatpush1.bf16.msra.mxu0 0
      %1867 = vmatprep.subr.bf16.mxu0 0
      %1868 = vmatpush1.bf16.msra.mxu0 0
      %1869 = vmatprep.subr.bf16.mxu0 0
      %1870 = vmatpush1.bf16.msra.mxu0 0
      %1871 = vmatprep.subr.bf16.mxu0 0
      %1872 = vmatpush1.bf16.msra.mxu0 0
      %1873 = vmatprep.subr.bf16.mxu0 0
      %1874 = vmatpush1.bf16.msra.mxu0 %v1857
      %1875 = vmatprep.subr.bf16.mxu0 0
      %1876 = vmatpush2.bf16.msra.mxu0 0
      %1877 = vmatprep.subr.bf16.mxu0 0
      %1878 = vmatpush2.bf16.msra.mxu0 0
      %1879 = vmatprep.subr.bf16.mxu0 0
      %1880 = vmatpush2.bf16.msra.mxu0 0
      %1881 = vmatprep.subr.bf16.mxu0 0
      %1882 = vmatpush2.bf16.msra.mxu0 0
      %1883 = vmatprep.subr.bf16.mxu0 0
      %1884 = vmatpush2.bf16.msra.mxu0 0
      %1885 = vmatprep.subr.bf16.mxu0 0
      %1886 = vmatpush2.bf16.msra.mxu0 0
      %1887 = vmatprep.subr.bf16.mxu0 0
      %1888 = vmatpush2.bf16.msra.mxu0 0
      %1889 = vmatprep.subr.bf16.mxu0 0
      %1890 = vmatpush2.bf16.msra.mxu0 0
      %1891 = vmatprep.mubr.bf16.mxu0 0
      %1892 = vmatmul.mubr.bf16.gmra.mxu0 %v1189
      %v1893 = vpop.f32.mrf.mxu0
      %v1894 = vadd.f32 0.0, %v1893
      %v1895 = vpop.f32.mrf.mxu0
      %v1896 = vpop.f32.mrf.mxu0
      %v1897 = vadd.f32 0.0, %v1896
      %v1898 = vpop.f32.mrf.mxu0
      %1899 = vmatprep.mubr.bf16.mxu0 0
      %1900 = vmatmul.mubr.bf16.gmra.mxu0 %v1192
      %v1901 = vpop.f32.mrf.mxu0
      %v1902 = vadd.f32 0.0, %v1901
      %v1903 = vpop.f32.mrf.mxu0
      %v1904 = vpop.f32.mrf.mxu0
      %v1905 = vadd.f32 0.0, %v1904
      %v1906 = vpop.f32.mrf.mxu0
      %1907 = vmatprep.mubr.bf16.mxu0 0
      %1908 = vmatmul.mubr.bf16.gmra.mxu0 %v1195
      %v1909 = vpop.f32.mrf.mxu0
      %v1910 = vadd.f32 0.0, %v1909
      %v1911 = vpop.f32.mrf.mxu0
      %v1912 = vpop.f32.mrf.mxu0
      %v1913 = vadd.f32 0.0, %v1912
      %v1914 = vpop.f32.mrf.mxu0
      %1915 = vmatprep.mubr.bf16.mxu0 0
      %1916 = vmatmul.mubr.bf16.gmra.mxu0 %v1198
      %v1917 = vpop.f32.mrf.mxu0
      %v1918 = vadd.f32 0.0, %v1917
      %v1919 = vpop.f32.mrf.mxu0
      %v1920 = vpop.f32.mrf.mxu0
      %v1921 = vadd.f32 0.0, %v1920
      %v1922 = vpop.f32.mrf.mxu0
      %1923 = vmatprep.mubr.bf16.mxu0 0
      %1924 = vmatmul.mubr.bf16.gmra.mxu0 %v1201
      %v1925 = vpop.f32.mrf.mxu0
      %v1926 = vadd.f32 0.0, %v1925
      %v1927 = vpop.f32.mrf.mxu0
      %v1928 = vpop.f32.mrf.mxu0
      %v1929 = vadd.f32 0.0, %v1928
      %v1930 = vpop.f32.mrf.mxu0
      %1931 = vmatprep.mubr.bf16.mxu0 0
      %1932 = vmatmul.mubr.bf16.gmra.mxu0 %v1204
      %v1933 = vpop.f32.mrf.mxu0
      %v1934 = vadd.f32 0.0, %v1933
      %v1935 = vpop.f32.mrf.mxu0
      %v1936 = vpop.f32.mrf.mxu0
      %v1937 = vadd.f32 0.0, %v1936
      %v1938 = vpop.f32.mrf.mxu0
      %1939 = vmatprep.mubr.bf16.mxu0 0
      %1940 = vmatmul.mubr.bf16.gmra.mxu0 %v1207
      %v1941 = vpop.f32.mrf.mxu0
      %v1942 = vadd.f32 0.0, %v1941
      %v1943 = vpop.f32.mrf.mxu0
      %v1944 = vpop.f32.mrf.mxu0
      %v1945 = vadd.f32 0.0, %v1944
      %v1946 = vpop.f32.mrf.mxu0
      %1947 = vmatprep.mubr.bf16.mxu0 0
      %1948 = vmatmul.mubr.bf16.gmra.mxu0 %v1210
      %v1949 = vpop.f32.mrf.mxu0
      %v1950 = vadd.f32 0.0, %v1949
      %v1951 = vpop.f32.mrf.mxu0
      %v1952 = vpop.f32.mrf.mxu0
      %v1953 = vadd.f32 0.0, %v1952
      %v1954 = vpop.f32.mrf.mxu0
      %1955 = vmatprep.mubr.bf16.mxu0 0
      %1956 = vmatmul.mubr.bf16.gmra.mxu0 %v1213
      %v1957 = vpop.f32.mrf.mxu0
      %v1958 = vadd.f32 0.0, %v1957
      %v1959 = vpop.f32.mrf.mxu0
      %v1960 = vpop.f32.mrf.mxu0
      %v1961 = vadd.f32 0.0, %v1960
      %v1962 = vpop.f32.mrf.mxu0
      %1963 = vmatprep.mubr.bf16.mxu0 0
      %1964 = vmatmul.mubr.bf16.gmra.mxu0 %v1216
      %v1965 = vpop.f32.mrf.mxu0
      %v1966 = vadd.f32 0.0, %v1965
      %v1967 = vpop.f32.mrf.mxu0
      %v1968 = vpop.f32.mrf.mxu0
      %v1969 = vadd.f32 0.0, %v1968
      %v1970 = vpop.f32.mrf.mxu0
      %1971 = vmatprep.mubr.bf16.mxu0 0
      %1972 = vmatmul.mubr.bf16.gmra.mxu0 %v1219
      %v1973 = vpop.f32.mrf.mxu0
      %v1974 = vadd.f32 0.0, %v1973
      %v1975 = vpop.f32.mrf.mxu0
      %v1976 = vpop.f32.mrf.mxu0
      %v1977 = vadd.f32 0.0, %v1976
      %v1978 = vpop.f32.mrf.mxu0
      %1979 = vmatprep.mubr.bf16.mxu0 0
      %1980 = vmatmul.mubr.bf16.gmra.mxu0 %v1222
      %v1981 = vpop.f32.mrf.mxu0
      %v1982 = vadd.f32 0.0, %v1981
      %v1983 = vpop.f32.mrf.mxu0
      %v1984 = vpop.f32.mrf.mxu0
      %v1985 = vadd.f32 0.0, %v1984
      %v1986 = vpop.f32.mrf.mxu0
      %1987 = vmatprep.mubr.bf16.mxu0 0
      %1988 = vmatmul.mubr.bf16.gmra.mxu0 %v1225
      %v1989 = vpop.f32.mrf.mxu0
      %v1990 = vadd.f32 0.0, %v1989
      %v1991 = vpop.f32.mrf.mxu0
      %v1992 = vpop.f32.mrf.mxu0
      %v1993 = vadd.f32 0.0, %v1992
      %v1994 = vpop.f32.mrf.mxu0
      %1995 = vmatprep.mubr.bf16.mxu0 0
      %1996 = vmatmul.mubr.bf16.gmra.mxu0 %v1228
      %v1997 = vpop.f32.mrf.mxu0
      %v1998 = vadd.f32 0.0, %v1997
      %v1999 = vpop.f32.mrf.mxu0
      %v2000 = vpop.f32.mrf.mxu0
      %v2001 = vadd.f32 0.0, %v2000
      %v2002 = vpop.f32.mrf.mxu0
      %2003 = vmatprep.mubr.bf16.mxu0 0
      %2004 = vmatmul.mubr.bf16.gmra.mxu0 %v1231
      %v2005 = vpop.f32.mrf.mxu0
      %v2006 = vadd.f32 0.0, %v2005
      %v2007 = vpop.f32.mrf.mxu0
      %v2008 = vpop.f32.mrf.mxu0
      %v2009 = vadd.f32 0.0, %v2008
      %v2010 = vpop.f32.mrf.mxu0
      %2011 = vmatprep.mubr.bf16.mxu0 0
      %2012 = vmatmul.mubr.bf16.gmra.mxu0 %v1854
      %v2013 = vpop.f32.mrf.mxu0
      %v2014 = vadd.f32 0.0, %v2013
      %v2015 = vpop.f32.mrf.mxu0
      %v2016 = vpop.f32.mrf.mxu0
      %v2017 = vadd.f32 0.0, %v2016
      %v2018 = vpop.f32.mrf.mxu0
      %2019 = vdwg.mxu0
      %v2020 = vadd.f32 %v1811, %v1894
      %v2021 = vadd.f32 %v1812, %v1897
      %v2022 = vadd.f32 %v1813, %v1902
      %v2023 = vadd.f32 %v1814, %v1905
      %v2024 = vadd.f32 %v1815, %v1910
      %v2025 = vadd.f32 %v1816, %v1913
      %v2026 = vadd.f32 %v1817, %v1918
      %v2027 = vadd.f32 %v1818, %v1921
      %v2028 = vadd.f32 %v1819, %v1926
      %v2029 = vadd.f32 %v1820, %v1929
      %v2030 = vadd.f32 %v1821, %v1934
      %v2031 = vadd.f32 %v1822, %v1937
      %v2032 = vadd.f32 %v1823, %v1942
      %v2033 = vadd.f32 %v1824, %v1945
      %v2034 = vadd.f32 %v1825, %v1950
      %v2035 = vadd.f32 %v1826, %v1953
      %v2036 = vadd.f32 %v1827, %v1958
      %v2037 = vadd.f32 %v1828, %v1961
      %v2038 = vadd.f32 %v1829, %v1966
      %v2039 = vadd.f32 %v1830, %v1969
      %v2040 = vadd.f32 %v1831, %v1974
      %v2041 = vadd.f32 %v1832, %v1977
      %v2042 = vadd.f32 %v1833, %v1982
      %v2043 = vadd.f32 %v1834, %v1985
      %v2044 = vadd.f32 %v1835, %v1990
      %v2045 = vadd.f32 %v1836, %v1993
      %v2046 = vadd.f32 %v1837, %v1998
      %v2047 = vadd.f32 %v1838, %v2001
      %v2048 = vadd.f32 %v1839, %v2006
      %v2049 = vadd.f32 %v1840, %v2009
      %v2050 = vadd.f32 %v1841, %v2014
      %v2051 = vadd.f32 %v1842, %v2017
      %v2052 = vpack.c.bf16 %v431, %v430
      %s2053 = scalar_lea.vmem %s1, 24
      %v2054 = vld [vmem:[%s2053] sm:$0xf]
      %v2056 = vsel %vm226, %v2052, 0
      %v2059 = vsel %vm677, %v2054, 0
      %2061 = vmatprep.subr.bf16.mxu0 0
      %2062 = vmatpush1.bf16.msra.mxu0 0
      %2063 = vmatprep.subr.bf16.mxu0 0
      %2064 = vmatpush1.bf16.msra.mxu0 0
      %2065 = vmatprep.subr.bf16.mxu0 0
      %2066 = vmatpush1.bf16.msra.mxu0 0
      %2067 = vmatprep.subr.bf16.mxu0 0
      %2068 = vmatpush1.bf16.msra.mxu0 0
      %2069 = vmatprep.subr.bf16.mxu0 0
      %2070 = vmatpush1.bf16.msra.mxu0 0
      %2071 = vmatprep.subr.bf16.mxu0 0
      %2072 = vmatpush1.bf16.msra.mxu0 0
      %2073 = vmatprep.subr.bf16.mxu0 0
      %2074 = vmatpush1.bf16.msra.mxu0 0
      %2075 = vmatprep.subr.bf16.mxu0 0
      %2076 = vmatpush1.bf16.msra.mxu0 %v2059
      %2077 = vmatprep.subr.bf16.mxu0 0
      %2078 = vmatpush2.bf16.msra.mxu0 0
      %2079 = vmatprep.subr.bf16.mxu0 0
      %2080 = vmatpush2.bf16.msra.mxu0 0
      %2081 = vmatprep.subr.bf16.mxu0 0
      %2082 = vmatpush2.bf16.msra.mxu0 0
      %2083 = vmatprep.subr.bf16.mxu0 0
      %2084 = vmatpush2.bf16.msra.mxu0 0
      %2085 = vmatprep.subr.bf16.mxu0 0
      %2086 = vmatpush2.bf16.msra.mxu0 0
      %2087 = vmatprep.subr.bf16.mxu0 0
      %2088 = vmatpush2.bf16.msra.mxu0 0
      %2089 = vmatprep.subr.bf16.mxu0 0
      %2090 = vmatpush2.bf16.msra.mxu0 0
      %2091 = vmatprep.subr.bf16.mxu0 0
      %2092 = vmatpush2.bf16.msra.mxu0 0
      %2093 = vmatprep.mubr.bf16.mxu0 0
      %2094 = vmatmul.mubr.bf16.gmra.mxu0 %v849
      %v2095 = vpop.f32.mrf.mxu0
      %v2096 = vadd.f32 0.0, %v2095
      %v2097 = vpop.f32.mrf.mxu0
      %v2098 = vpop.f32.mrf.mxu0
      %v2099 = vadd.f32 0.0, %v2098
      %v2100 = vpop.f32.mrf.mxu0
      %2101 = vmatprep.mubr.bf16.mxu0 0
      %2102 = vmatmul.mubr.bf16.gmra.mxu0 %v852
      %v2103 = vpop.f32.mrf.mxu0
      %v2104 = vadd.f32 0.0, %v2103
      %v2105 = vpop.f32.mrf.mxu0
      %v2106 = vpop.f32.mrf.mxu0
      %v2107 = vadd.f32 0.0, %v2106
      %v2108 = vpop.f32.mrf.mxu0
      %2109 = vmatprep.mubr.bf16.mxu0 0
      %2110 = vmatmul.mubr.bf16.gmra.mxu0 %v855
      %v2111 = vpop.f32.mrf.mxu0
      %v2112 = vadd.f32 0.0, %v2111
      %v2113 = vpop.f32.mrf.mxu0
      %v2114 = vpop.f32.mrf.mxu0
      %v2115 = vadd.f32 0.0, %v2114
      %v2116 = vpop.f32.mrf.mxu0
      %2117 = vmatprep.mubr.bf16.mxu0 0
      %2118 = vmatmul.mubr.bf16.gmra.mxu0 %v858
      %v2119 = vpop.f32.mrf.mxu0
      %v2120 = vadd.f32 0.0, %v2119
      %v2121 = vpop.f32.mrf.mxu0
      %v2122 = vpop.f32.mrf.mxu0
      %v2123 = vadd.f32 0.0, %v2122
      %v2124 = vpop.f32.mrf.mxu0
      %2125 = vmatprep.mubr.bf16.mxu0 0
      %2126 = vmatmul.mubr.bf16.gmra.mxu0 %v861
      %v2127 = vpop.f32.mrf.mxu0
      %v2128 = vadd.f32 0.0, %v2127
      %v2129 = vpop.f32.mrf.mxu0
      %v2130 = vpop.f32.mrf.mxu0
      %v2131 = vadd.f32 0.0, %v2130
      %v2132 = vpop.f32.mrf.mxu0
      %2133 = vmatprep.mubr.bf16.mxu0 0
      %2134 = vmatmul.mubr.bf16.gmra.mxu0 %v864
      %v2135 = vpop.f32.mrf.mxu0
      %v2136 = vadd.f32 0.0, %v2135
      %v2137 = vpop.f32.mrf.mxu0
      %v2138 = vpop.f32.mrf.mxu0
      %v2139 = vadd.f32 0.0, %v2138
      %v2140 = vpop.f32.mrf.mxu0
      %2141 = vmatprep.mubr.bf16.mxu0 0
      %2142 = vmatmul.mubr.bf16.gmra.mxu0 %v867
      %v2143 = vpop.f32.mrf.mxu0
      %v2144 = vadd.f32 0.0, %v2143
      %v2145 = vpop.f32.mrf.mxu0
      %v2146 = vpop.f32.mrf.mxu0
      %v2147 = vadd.f32 0.0, %v2146
      %v2148 = vpop.f32.mrf.mxu0
      %2149 = vmatprep.mubr.bf16.mxu0 0
      %2150 = vmatmul.mubr.bf16.gmra.mxu0 %v870
      %v2151 = vpop.f32.mrf.mxu0
      %v2152 = vadd.f32 0.0, %v2151
      %v2153 = vpop.f32.mrf.mxu0
      %v2154 = vpop.f32.mrf.mxu0
      %v2155 = vadd.f32 0.0, %v2154
      %v2156 = vpop.f32.mrf.mxu0
      %2157 = vmatprep.mubr.bf16.mxu0 0
      %2158 = vmatmul.mubr.bf16.gmra.mxu0 %v873
      %v2159 = vpop.f32.mrf.mxu0
      %v2160 = vadd.f32 0.0, %v2159
      %v2161 = vpop.f32.mrf.mxu0
      %v2162 = vpop.f32.mrf.mxu0
      %v2163 = vadd.f32 0.0, %v2162
      %v2164 = vpop.f32.mrf.mxu0
      %2165 = vmatprep.mubr.bf16.mxu0 0
      %2166 = vmatmul.mubr.bf16.gmra.mxu0 %v876
      %v2167 = vpop.f32.mrf.mxu0
      %v2168 = vadd.f32 0.0, %v2167
      %v2169 = vpop.f32.mrf.mxu0
      %v2170 = vpop.f32.mrf.mxu0
      %v2171 = vadd.f32 0.0, %v2170
      %v2172 = vpop.f32.mrf.mxu0
      %2173 = vmatprep.mubr.bf16.mxu0 0
      %2174 = vmatmul.mubr.bf16.gmra.mxu0 %v879
      %v2175 = vpop.f32.mrf.mxu0
      %v2176 = vadd.f32 0.0, %v2175
      %v2177 = vpop.f32.mrf.mxu0
      %v2178 = vpop.f32.mrf.mxu0
      %v2179 = vadd.f32 0.0, %v2178
      %v2180 = vpop.f32.mrf.mxu0
      %2181 = vmatprep.mubr.bf16.mxu0 0
      %2182 = vmatmul.mubr.bf16.gmra.mxu0 %v882
      %v2183 = vpop.f32.mrf.mxu0
      %v2184 = vadd.f32 0.0, %v2183
      %v2185 = vpop.f32.mrf.mxu0
      %v2186 = vpop.f32.mrf.mxu0
      %v2187 = vadd.f32 0.0, %v2186
      %v2188 = vpop.f32.mrf.mxu0
      %2189 = vmatprep.mubr.bf16.mxu0 0
      %2190 = vmatmul.mubr.bf16.gmra.mxu0 %v885
      %v2191 = vpop.f32.mrf.mxu0
      %v2192 = vadd.f32 0.0, %v2191
      %v2193 = vpop.f32.mrf.mxu0
      %v2194 = vpop.f32.mrf.mxu0
      %v2195 = vadd.f32 0.0, %v2194
      %v2196 = vpop.f32.mrf.mxu0
      %2197 = vmatprep.mubr.bf16.mxu0 0
      %2198 = vmatmul.mubr.bf16.gmra.mxu0 %v888
      %v2199 = vpop.f32.mrf.mxu0
      %v2200 = vadd.f32 0.0, %v2199
      %v2201 = vpop.f32.mrf.mxu0
      %v2202 = vpop.f32.mrf.mxu0
      %v2203 = vadd.f32 0.0, %v2202
      %v2204 = vpop.f32.mrf.mxu0
      %2205 = vmatprep.mubr.bf16.mxu0 0
      %2206 = vmatmul.mubr.bf16.gmra.mxu0 %v1433
      %v2207 = vpop.f32.mrf.mxu0
      %v2208 = vadd.f32 0.0, %v2207
      %v2209 = vpop.f32.mrf.mxu0
      %v2210 = vpop.f32.mrf.mxu0
      %v2211 = vadd.f32 0.0, %v2210
      %v2212 = vpop.f32.mrf.mxu0
      %2213 = vmatprep.mubr.bf16.mxu0 0
      %2214 = vmatmul.mubr.bf16.gmra.mxu0 %v2056
      %v2215 = vpop.f32.mrf.mxu0
      %v2216 = vadd.f32 0.0, %v2215
      %v2217 = vpop.f32.mrf.mxu0
      %v2218 = vpop.f32.mrf.mxu0
      %v2219 = vadd.f32 0.0, %v2218
      %v2220 = vpop.f32.mrf.mxu0
      %2221 = vdwg.mxu0
      %v2222 = vadd.f32 %v2020, %v2096
      %v2223 = vadd.f32 %v2021, %v2099
      %v2224 = vadd.f32 %v2022, %v2104
      %v2225 = vadd.f32 %v2023, %v2107
      %v2226 = vadd.f32 %v2024, %v2112
      %v2227 = vadd.f32 %v2025, %v2115
      %v2228 = vadd.f32 %v2026, %v2120
      %v2229 = vadd.f32 %v2027, %v2123
      %v2230 = vadd.f32 %v2028, %v2128
      %v2231 = vadd.f32 %v2029, %v2131
      %v2232 = vadd.f32 %v2030, %v2136
      %v2233 = vadd.f32 %v2031, %v2139
      %v2234 = vadd.f32 %v2032, %v2144
      %v2235 = vadd.f32 %v2033, %v2147
      %v2236 = vadd.f32 %v2034, %v2152
      %v2237 = vadd.f32 %v2035, %v2155
      %v2238 = vadd.f32 %v2036, %v2160
      %v2239 = vadd.f32 %v2037, %v2163
      %v2240 = vadd.f32 %v2038, %v2168
      %v2241 = vadd.f32 %v2039, %v2171
      %v2242 = vadd.f32 %v2040, %v2176
      %v2243 = vadd.f32 %v2041, %v2179
      %v2244 = vadd.f32 %v2042, %v2184
      %v2245 = vadd.f32 %v2043, %v2187
      %v2246 = vadd.f32 %v2044, %v2192
      %v2247 = vadd.f32 %v2045, %v2195
      %v2248 = vadd.f32 %v2046, %v2200
      %v2249 = vadd.f32 %v2047, %v2203
      %v2250 = vadd.f32 %v2048, %v2208
      %v2251 = vadd.f32 %v2049, %v2211
      %v2252 = vadd.f32 %v2050, %v2216
      %v2253 = vadd.f32 %v2051, %v2219
      %v2257 = vrot.slane %v430, 1
      %v2258 = vrot.slane %v431, 1
      %v2259 = vsel %vm498, %v2257, %v2258
      %v2260 = vrot.slane %v432, 1
      %v2261 = vsel %vm498, %v2258, %v2260
      %v2264 = vpack.c.bf16 %v2261, %v2259
      %s2265 = scalar_lea.vmem %s1, 28
      %v2266 = vld [vmem:[%s2265] sm:$0xf]
      %v2268 = vsel %vm226, %v2264, 0
      %v2271 = vsel %vm677, %v2266, 0
      %2273 = vmatprep.subr.bf16.mxu0 0
      %2274 = vmatpush1.bf16.msra.mxu0 0
      %2275 = vmatprep.subr.bf16.mxu0 0
      %2276 = vmatpush1.bf16.msra.mxu0 0
      %2277 = vmatprep.subr.bf16.mxu0 0
      %2278 = vmatpush1.bf16.msra.mxu0 0
      %2279 = vmatprep.subr.bf16.mxu0 0
      %2280 = vmatpush1.bf16.msra.mxu0 0
      %2281 = vmatprep.subr.bf16.mxu0 0
      %2282 = vmatpush1.bf16.msra.mxu0 0
      %2283 = vmatprep.subr.bf16.mxu0 0
      %2284 = vmatpush1.bf16.msra.mxu0 0
      %2285 = vmatprep.subr.bf16.mxu0 0
      %2286 = vmatpush1.bf16.msra.mxu0 0
      %2287 = vmatprep.subr.bf16.mxu0 0
      %2288 = vmatpush1.bf16.msra.mxu0 %v2271
      %2289 = vmatprep.subr.bf16.mxu0 0
      %2290 = vmatpush2.bf16.msra.mxu0 0
      %2291 = vmatprep.subr.bf16.mxu0 0
      %2292 = vmatpush2.bf16.msra.mxu0 0
      %2293 = vmatprep.subr.bf16.mxu0 0
      %2294 = vmatpush2.bf16.msra.mxu0 0
      %2295 = vmatprep.subr.bf16.mxu0 0
      %2296 = vmatpush2.bf16.msra.mxu0 0
      %2297 = vmatprep.subr.bf16.mxu0 0
      %2298 = vmatpush2.bf16.msra.mxu0 0
      %2299 = vmatprep.subr.bf16.mxu0 0
      %2300 = vmatpush2.bf16.msra.mxu0 0
      %2301 = vmatprep.subr.bf16.mxu0 0
      %2302 = vmatpush2.bf16.msra.mxu0 0
      %2303 = vmatprep.subr.bf16.mxu0 0
      %2304 = vmatpush2.bf16.msra.mxu0 0
      %2305 = vmatprep.mubr.bf16.mxu0 0
      %2306 = vmatmul.mubr.bf16.gmra.mxu0 %v636
      %v2307 = vpop.f32.mrf.mxu0
      %v2308 = vadd.f32 0.0, %v2307
      %v2309 = vpop.f32.mrf.mxu0
      %v2310 = vpop.f32.mrf.mxu0
      %v2311 = vadd.f32 0.0, %v2310
      %v2312 = vpop.f32.mrf.mxu0
      %2313 = vmatprep.mubr.bf16.mxu0 0
      %2314 = vmatmul.mubr.bf16.gmra.mxu0 %v639
      %v2315 = vpop.f32.mrf.mxu0
      %v2316 = vadd.f32 0.0, %v2315
      %v2317 = vpop.f32.mrf.mxu0
      %v2318 = vpop.f32.mrf.mxu0
      %v2319 = vadd.f32 0.0, %v2318
      %v2320 = vpop.f32.mrf.mxu0
      %2321 = vmatprep.mubr.bf16.mxu0 0
      %2322 = vmatmul.mubr.bf16.gmra.mxu0 %v642
      %v2323 = vpop.f32.mrf.mxu0
      %v2324 = vadd.f32 0.0, %v2323
      %v2325 = vpop.f32.mrf.mxu0
      %v2326 = vpop.f32.mrf.mxu0
      %v2327 = vadd.f32 0.0, %v2326
      %v2328 = vpop.f32.mrf.mxu0
      %2329 = vmatprep.mubr.bf16.mxu0 0
      %2330 = vmatmul.mubr.bf16.gmra.mxu0 %v645
      %v2331 = vpop.f32.mrf.mxu0
      %v2332 = vadd.f32 0.0, %v2331
      %v2333 = vpop.f32.mrf.mxu0
      %v2334 = vpop.f32.mrf.mxu0
      %v2335 = vadd.f32 0.0, %v2334
      %v2336 = vpop.f32.mrf.mxu0
      %2337 = vmatprep.mubr.bf16.mxu0 0
      %2338 = vmatmul.mubr.bf16.gmra.mxu0 %v648
      %v2339 = vpop.f32.mrf.mxu0
      %v2340 = vadd.f32 0.0, %v2339
      %v2341 = vpop.f32.mrf.mxu0
      %v2342 = vpop.f32.mrf.mxu0
      %v2343 = vadd.f32 0.0, %v2342
      %v2344 = vpop.f32.mrf.mxu0
      %2345 = vmatprep.mubr.bf16.mxu0 0
      %2346 = vmatmul.mubr.bf16.gmra.mxu0 %v651
      %v2347 = vpop.f32.mrf.mxu0
      %v2348 = vadd.f32 0.0, %v2347
      %v2349 = vpop.f32.mrf.mxu0
      %v2350 = vpop.f32.mrf.mxu0
      %v2351 = vadd.f32 0.0, %v2350
      %v2352 = vpop.f32.mrf.mxu0
      %2353 = vmatprep.mubr.bf16.mxu0 0
      %2354 = vmatmul.mubr.bf16.gmra.mxu0 %v654
      %v2355 = vpop.f32.mrf.mxu0
      %v2356 = vadd.f32 0.0, %v2355
      %v2357 = vpop.f32.mrf.mxu0
      %v2358 = vpop.f32.mrf.mxu0
      %v2359 = vadd.f32 0.0, %v2358
      %v2360 = vpop.f32.mrf.mxu0
      %2361 = vmatprep.mubr.bf16.mxu0 0
      %2362 = vmatmul.mubr.bf16.gmra.mxu0 %v657
      %v2363 = vpop.f32.mrf.mxu0
      %v2364 = vadd.f32 0.0, %v2363
      %v2365 = vpop.f32.mrf.mxu0
      %v2366 = vpop.f32.mrf.mxu0
      %v2367 = vadd.f32 0.0, %v2366
      %v2368 = vpop.f32.mrf.mxu0
      %2369 = vmatprep.mubr.bf16.mxu0 0
      %2370 = vmatmul.mubr.bf16.gmra.mxu0 %v660
      %v2371 = vpop.f32.mrf.mxu0
      %v2372 = vadd.f32 0.0, %v2371
      %v2373 = vpop.f32.mrf.mxu0
      %v2374 = vpop.f32.mrf.mxu0
      %v2375 = vadd.f32 0.0, %v2374
      %v2376 = vpop.f32.mrf.mxu0
      %2377 = vmatprep.mubr.bf16.mxu0 0
      %2378 = vmatmul.mubr.bf16.gmra.mxu0 %v663
      %v2379 = vpop.f32.mrf.mxu0
      %v2380 = vadd.f32 0.0, %v2379
      %v2381 = vpop.f32.mrf.mxu0
      %v2382 = vpop.f32.mrf.mxu0
      %v2383 = vadd.f32 0.0, %v2382
      %v2384 = vpop.f32.mrf.mxu0
      %2385 = vmatprep.mubr.bf16.mxu0 0
      %2386 = vmatmul.mubr.bf16.gmra.mxu0 %v666
      %v2387 = vpop.f32.mrf.mxu0
      %v2388 = vadd.f32 0.0, %v2387
      %v2389 = vpop.f32.mrf.mxu0
      %v2390 = vpop.f32.mrf.mxu0
      %v2391 = vadd.f32 0.0, %v2390
      %v2392 = vpop.f32.mrf.mxu0
      %2393 = vmatprep.mubr.bf16.mxu0 0
      %2394 = vmatmul.mubr.bf16.gmra.mxu0 %v669
      %v2395 = vpop.f32.mrf.mxu0
      %v2396 = vadd.f32 0.0, %v2395
      %v2397 = vpop.f32.mrf.mxu0
      %v2398 = vpop.f32.mrf.mxu0
      %v2399 = vadd.f32 0.0, %v2398
      %v2400 = vpop.f32.mrf.mxu0
      %2401 = vmatprep.mubr.bf16.mxu0 0
      %2402 = vmatmul.mubr.bf16.gmra.mxu0 %v672
      %v2403 = vpop.f32.mrf.mxu0
      %v2404 = vadd.f32 0.0, %v2403
      %v2405 = vpop.f32.mrf.mxu0
      %v2406 = vpop.f32.mrf.mxu0
      %v2407 = vadd.f32 0.0, %v2406
      %v2408 = vpop.f32.mrf.mxu0
      %2409 = vmatprep.mubr.bf16.mxu0 0
      %2410 = vmatmul.mubr.bf16.gmra.mxu0 %v675
      %v2411 = vpop.f32.mrf.mxu0
      %v2412 = vadd.f32 0.0, %v2411
      %v2413 = vpop.f32.mrf.mxu0
      %v2414 = vpop.f32.mrf.mxu0
      %v2415 = vadd.f32 0.0, %v2414
      %v2416 = vpop.f32.mrf.mxu0
      %2417 = vmatprep.mubr.bf16.mxu0 0
      %2418 = vmatmul.mubr.bf16.gmra.mxu0 %v1645
      %v2419 = vpop.f32.mrf.mxu0
      %v2420 = vadd.f32 0.0, %v2419
      %v2421 = vpop.f32.mrf.mxu0
      %v2422 = vpop.f32.mrf.mxu0
      %v2423 = vadd.f32 0.0, %v2422
      %v2424 = vpop.f32.mrf.mxu0
      %2425 = vmatprep.mubr.bf16.mxu0 0
      %2426 = vmatmul.mubr.bf16.gmra.mxu0 %v2268
      %v2427 = vpop.f32.mrf.mxu0
      %v2428 = vadd.f32 0.0, %v2427
      %v2429 = vpop.f32.mrf.mxu0
      %v2430 = vpop.f32.mrf.mxu0
      %v2431 = vadd.f32 0.0, %v2430
      %v2432 = vpop.f32.mrf.mxu0
      %2433 = vdwg.mxu0
      %v2434 = vadd.f32 %v2222, %v2308
      %v2435 = vadd.f32 %v2223, %v2311
      %v2436 = vadd.f32 %v2224, %v2316
      %v2437 = vadd.f32 %v2225, %v2319
      %v2438 = vadd.f32 %v2226, %v2324
      %v2439 = vadd.f32 %v2227, %v2327
      %v2440 = vadd.f32 %v2228, %v2332
      %v2441 = vadd.f32 %v2229, %v2335
      %v2442 = vadd.f32 %v2230, %v2340
      %v2443 = vadd.f32 %v2231, %v2343
      %v2444 = vadd.f32 %v2232, %v2348
      %v2445 = vadd.f32 %v2233, %v2351
      %v2446 = vadd.f32 %v2234, %v2356
      %v2447 = vadd.f32 %v2235, %v2359
      %v2448 = vadd.f32 %v2236, %v2364
      %v2449 = vadd.f32 %v2237, %v2367
      %v2450 = vadd.f32 %v2238, %v2372
      %v2451 = vadd.f32 %v2239, %v2375
      %v2452 = vadd.f32 %v2240, %v2380
      %v2453 = vadd.f32 %v2241, %v2383
      %v2454 = vadd.f32 %v2242, %v2388
      %v2455 = vadd.f32 %v2243, %v2391
      %v2456 = vadd.f32 %v2244, %v2396
      %v2457 = vadd.f32 %v2245, %v2399
      %v2458 = vadd.f32 %v2246, %v2404
      %v2459 = vadd.f32 %v2247, %v2407
      %v2460 = vadd.f32 %v2248, %v2412
      %v2461 = vadd.f32 %v2249, %v2415
      %v2462 = vadd.f32 %v2250, %v2420
      %v2463 = vadd.f32 %v2251, %v2423
      %v2464 = vadd.f32 %v2252, %v2428
      %v2465 = vadd.f32 %v2253, %v2431
      %v2466 = vrot.slane %v430, 2
      %v2467 = vrot.slane %v431, 2
      %v2468 = vsel %vm1054, %v2466, %v2467
      %v2469 = vrot.slane %v432, 2
      %v2470 = vsel %vm1054, %v2467, %v2469
      %v2473 = vpack.c.bf16 %v2470, %v2468
      %s2474 = scalar_lea.vmem %s1, 32
      %v2475 = vld [vmem:[%s2474] sm:$0xf]
      %v2477 = vsel %vm226, %v2473, 0
      %v2480 = vsel %vm677, %v2475, 0
      %2482 = vmatprep.subr.bf16.mxu0 0
      %2483 = vmatpush1.bf16.msra.mxu0 0
      %2484 = vmatprep.subr.bf16.mxu0 0
      %2485 = vmatpush1.bf16.msra.mxu0 0
      %2486 = vmatprep.subr.bf16.mxu0 0
      %2487 = vmatpush1.bf16.msra.mxu0 0
      %2488 = vmatprep.subr.bf16.mxu0 0
      %2489 = vmatpush1.bf16.msra.mxu0 0
      %2490 = vmatprep.subr.bf16.mxu0 0
      %2491 = vmatpush1.bf16.msra.mxu0 0
      %2492 = vmatprep.subr.bf16.mxu0 0
      %2493 = vmatpush1.bf16.msra.mxu0 0
      %2494 = vmatprep.subr.bf16.mxu0 0
      %2495 = vmatpush1.bf16.msra.mxu0 0
      %2496 = vmatprep.subr.bf16.mxu0 0
      %2497 = vmatpush1.bf16.msra.mxu0 %v2480
      %2498 = vmatprep.subr.bf16.mxu0 0
      %2499 = vmatpush2.bf16.msra.mxu0 0
      %2500 = vmatprep.subr.bf16.mxu0 0
      %2501 = vmatpush2.bf16.msra.mxu0 0
      %2502 = vmatprep.subr.bf16.mxu0 0
      %2503 = vmatpush2.bf16.msra.mxu0 0
      %2504 = vmatprep.subr.bf16.mxu0 0
      %2505 = vmatpush2.bf16.msra.mxu0 0
      %2506 = vmatprep.subr.bf16.mxu0 0
      %2507 = vmatpush2.bf16.msra.mxu0 0
      %2508 = vmatprep.subr.bf16.mxu0 0
      %2509 = vmatpush2.bf16.msra.mxu0 0
      %2510 = vmatprep.subr.bf16.mxu0 0
      %2511 = vmatpush2.bf16.msra.mxu0 0
      %2512 = vmatprep.subr.bf16.mxu0 0
      %2513 = vmatpush2.bf16.msra.mxu0 0
      %2514 = vmatprep.mubr.bf16.mxu0 0
      %2515 = vmatmul.mubr.bf16.gmra.mxu0 %v1192
      %v2516 = vpop.f32.mrf.mxu0
      %v2517 = vadd.f32 0.0, %v2516
      %v2518 = vpop.f32.mrf.mxu0
      %v2519 = vpop.f32.mrf.mxu0
      %v2520 = vadd.f32 0.0, %v2519
      %v2521 = vpop.f32.mrf.mxu0
      %2522 = vmatprep.mubr.bf16.mxu0 0
      %2523 = vmatmul.mubr.bf16.gmra.mxu0 %v1195
      %v2524 = vpop.f32.mrf.mxu0
      %v2525 = vadd.f32 0.0, %v2524
      %v2526 = vpop.f32.mrf.mxu0
      %v2527 = vpop.f32.mrf.mxu0
      %v2528 = vadd.f32 0.0, %v2527
      %v2529 = vpop.f32.mrf.mxu0
      %2530 = vmatprep.mubr.bf16.mxu0 0
      %2531 = vmatmul.mubr.bf16.gmra.mxu0 %v1198
      %v2532 = vpop.f32.mrf.mxu0
      %v2533 = vadd.f32 0.0, %v2532
      %v2534 = vpop.f32.mrf.mxu0
      %v2535 = vpop.f32.mrf.mxu0
      %v2536 = vadd.f32 0.0, %v2535
      %v2537 = vpop.f32.mrf.mxu0
      %2538 = vmatprep.mubr.bf16.mxu0 0
      %2539 = vmatmul.mubr.bf16.gmra.mxu0 %v1201
      %v2540 = vpop.f32.mrf.mxu0
      %v2541 = vadd.f32 0.0, %v2540
      %v2542 = vpop.f32.mrf.mxu0
      %v2543 = vpop.f32.mrf.mxu0
      %v2544 = vadd.f32 0.0, %v2543
      %v2545 = vpop.f32.mrf.mxu0
      %2546 = vmatprep.mubr.bf16.mxu0 0
      %2547 = vmatmul.mubr.bf16.gmra.mxu0 %v1204
      %v2548 = vpop.f32.mrf.mxu0
      %v2549 = vadd.f32 0.0, %v2548
      %v2550 = vpop.f32.mrf.mxu0
      %v2551 = vpop.f32.mrf.mxu0
      %v2552 = vadd.f32 0.0, %v2551
      %v2553 = vpop.f32.mrf.mxu0
      %2554 = vmatprep.mubr.bf16.mxu0 0
      %2555 = vmatmul.mubr.bf16.gmra.mxu0 %v1207
      %v2556 = vpop.f32.mrf.mxu0
      %v2557 = vadd.f32 0.0, %v2556
      %v2558 = vpop.f32.mrf.mxu0
      %v2559 = vpop.f32.mrf.mxu0
      %v2560 = vadd.f32 0.0, %v2559
      %v2561 = vpop.f32.mrf.mxu0
      %2562 = vmatprep.mubr.bf16.mxu0 0
      %2563 = vmatmul.mubr.bf16.gmra.mxu0 %v1210
      %v2564 = vpop.f32.mrf.mxu0
      %v2565 = vadd.f32 0.0, %v2564
      %v2566 = vpop.f32.mrf.mxu0
      %v2567 = vpop.f32.mrf.mxu0
      %v2568 = vadd.f32 0.0, %v2567
      %v2569 = vpop.f32.mrf.mxu0
      %2570 = vmatprep.mubr.bf16.mxu0 0
      %2571 = vmatmul.mubr.bf16.gmra.mxu0 %v1213
      %v2572 = vpop.f32.mrf.mxu0
      %v2573 = vadd.f32 0.0, %v2572
      %v2574 = vpop.f32.mrf.mxu0
      %v2575 = vpop.f32.mrf.mxu0
      %v2576 = vadd.f32 0.0, %v2575
      %v2577 = vpop.f32.mrf.mxu0
      %2578 = vmatprep.mubr.bf16.mxu0 0
      %2579 = vmatmul.mubr.bf16.gmra.mxu0 %v1216
      %v2580 = vpop.f32.mrf.mxu0
      %v2581 = vadd.f32 0.0, %v2580
      %v2582 = vpop.f32.mrf.mxu0
      %v2583 = vpop.f32.mrf.mxu0
      %v2584 = vadd.f32 0.0, %v2583
      %v2585 = vpop.f32.mrf.mxu0
      %2586 = vmatprep.mubr.bf16.mxu0 0
      %2587 = vmatmul.mubr.bf16.gmra.mxu0 %v1219
      %v2588 = vpop.f32.mrf.mxu0
      %v2589 = vadd.f32 0.0, %v2588
      %v2590 = vpop.f32.mrf.mxu0
      %v2591 = vpop.f32.mrf.mxu0
      %v2592 = vadd.f32 0.0, %v2591
      %v2593 = vpop.f32.mrf.mxu0
      %2594 = vmatprep.mubr.bf16.mxu0 0
      %2595 = vmatmul.mubr.bf16.gmra.mxu0 %v1222
      %v2596 = vpop.f32.mrf.mxu0
      %v2597 = vadd.f32 0.0, %v2596
      %v2598 = vpop.f32.mrf.mxu0
      %v2599 = vpop.f32.mrf.mxu0
      %v2600 = vadd.f32 0.0, %v2599
      %v2601 = vpop.f32.mrf.mxu0
      %2602 = vmatprep.mubr.bf16.mxu0 0
      %2603 = vmatmul.mubr.bf16.gmra.mxu0 %v1225
      %v2604 = vpop.f32.mrf.mxu0
      %v2605 = vadd.f32 0.0, %v2604
      %v2606 = vpop.f32.mrf.mxu0
      %v2607 = vpop.f32.mrf.mxu0
      %v2608 = vadd.f32 0.0, %v2607
      %v2609 = vpop.f32.mrf.mxu0
      %2610 = vmatprep.mubr.bf16.mxu0 0
      %2611 = vmatmul.mubr.bf16.gmra.mxu0 %v1228
      %v2612 = vpop.f32.mrf.mxu0
      %v2613 = vadd.f32 0.0, %v2612
      %v2614 = vpop.f32.mrf.mxu0
      %v2615 = vpop.f32.mrf.mxu0
      %v2616 = vadd.f32 0.0, %v2615
      %v2617 = vpop.f32.mrf.mxu0
      %2618 = vmatprep.mubr.bf16.mxu0 0
      %2619 = vmatmul.mubr.bf16.gmra.mxu0 %v1231
      %v2620 = vpop.f32.mrf.mxu0
      %v2621 = vadd.f32 0.0, %v2620
      %v2622 = vpop.f32.mrf.mxu0
      %v2623 = vpop.f32.mrf.mxu0
      %v2624 = vadd.f32 0.0, %v2623
      %v2625 = vpop.f32.mrf.mxu0
      %2626 = vmatprep.mubr.bf16.mxu0 0
      %2627 = vmatmul.mubr.bf16.gmra.mxu0 %v1854
      %v2628 = vpop.f32.mrf.mxu0
      %v2629 = vadd.f32 0.0, %v2628
      %v2630 = vpop.f32.mrf.mxu0
      %v2631 = vpop.f32.mrf.mxu0
      %v2632 = vadd.f32 0.0, %v2631
      %v2633 = vpop.f32.mrf.mxu0
      %2634 = vmatprep.mubr.bf16.mxu0 0
      %2635 = vmatmul.mubr.bf16.gmra.mxu0 %v2477
      %v2636 = vpop.f32.mrf.mxu0
      %v2637 = vadd.f32 0.0, %v2636
      %v2638 = vpop.f32.mrf.mxu0
      %v2639 = vpop.f32.mrf.mxu0
      %v2640 = vadd.f32 0.0, %v2639
      %v2641 = vpop.f32.mrf.mxu0
      %2642 = vdwg.mxu0
      %v2643 = vadd.f32 %v2434, %v2517
      %v2644 = vadd.f32 %v2435, %v2520
      %v2645 = vadd.f32 %v2436, %v2525
      %v2646 = vadd.f32 %v2437, %v2528
      %v2647 = vadd.f32 %v2438, %v2533
      %v2648 = vadd.f32 %v2439, %v2536
      %v2649 = vadd.f32 %v2440, %v2541
      %v2650 = vadd.f32 %v2441, %v2544
      %v2651 = vadd.f32 %v2442, %v2549
      %v2652 = vadd.f32 %v2443, %v2552
      %v2653 = vadd.f32 %v2444, %v2557
      %v2654 = vadd.f32 %v2445, %v2560
      %v2655 = vadd.f32 %v2446, %v2565
      %v2656 = vadd.f32 %v2447, %v2568
      %v2657 = vadd.f32 %v2448, %v2573
      %v2658 = vadd.f32 %v2449, %v2576
      %v2659 = vadd.f32 %v2450, %v2581
      %v2660 = vadd.f32 %v2451, %v2584
      %v2661 = vadd.f32 %v2452, %v2589
      %v2662 = vadd.f32 %v2453, %v2592
      %v2663 = vadd.f32 %v2454, %v2597
      %v2664 = vadd.f32 %v2455, %v2600
      %v2665 = vadd.f32 %v2456, %v2605
      %v2666 = vadd.f32 %v2457, %v2608
      %v2667 = vadd.f32 %v2458, %v2613
      %v2668 = vadd.f32 %v2459, %v2616
      %v2669 = vadd.f32 %v2460, %v2621
      %v2670 = vadd.f32 %v2461, %v2624
      %v2671 = vadd.f32 %v2462, %v2629
      %v2672 = vadd.f32 %v2463, %v2632
      %v2673 = vadd.f32 %v2464, %v2637
      %v2674 = vadd.f32 %v2465, %v2640
      %v2675 = vld [vmem:[%s2] sm:$0x1]
      %v2677 = vlaneseq
      %v2678 = vshrl.u32 %v2677, 7
      %v2679 = vsub.s32 0, %v2678
      %v2680 = vrot.slane %v2675, %v2679
      %v2682 = vadd.f32 %v2643, %v2680
      %v2683 = vadd.f32 %v2644, %v2680
      %v2684 = vadd.f32 %v2645, %v2680
      %v2685 = vadd.f32 %v2646, %v2680
      %v2686 = vadd.f32 %v2647, %v2680
      %v2687 = vadd.f32 %v2648, %v2680
      %v2688 = vadd.f32 %v2649, %v2680
      %v2689 = vadd.f32 %v2650, %v2680
      %v2690 = vadd.f32 %v2651, %v2680
      %v2691 = vadd.f32 %v2652, %v2680
      %v2692 = vadd.f32 %v2653, %v2680
      %v2693 = vadd.f32 %v2654, %v2680
      %v2694 = vadd.f32 %v2655, %v2680
      %v2695 = vadd.f32 %v2656, %v2680
      %v2696 = vadd.f32 %v2657, %v2680
      %v2697 = vadd.f32 %v2658, %v2680
      %v2698 = vadd.f32 %v2659, %v2680
      %v2699 = vadd.f32 %v2660, %v2680
      %v2700 = vadd.f32 %v2661, %v2680
      %v2701 = vadd.f32 %v2662, %v2680
      %v2702 = vadd.f32 %v2663, %v2680
      %v2703 = vadd.f32 %v2664, %v2680
      %v2704 = vadd.f32 %v2665, %v2680
      %v2705 = vadd.f32 %v2666, %v2680
      %v2706 = vadd.f32 %v2667, %v2680
      %v2707 = vadd.f32 %v2668, %v2680
      %v2708 = vadd.f32 %v2669, %v2680
      %v2709 = vadd.f32 %v2670, %v2680
      %v2710 = vadd.f32 %v2671, %v2680
      %v2711 = vadd.f32 %v2672, %v2680
      %v2712 = vadd.f32 %v2673, %v2680
      %v2713 = vadd.f32 %v2674, %v2680
      %v2714 = vmax.f32 %v2682, 0.0
      %v2715 = vmax.f32 %v2683, 0.0
      %v2716 = vmax.f32 %v2684, 0.0
      %v2717 = vmax.f32 %v2685, 0.0
      %v2718 = vmax.f32 %v2686, 0.0
      %v2719 = vmax.f32 %v2687, 0.0
      %v2720 = vmax.f32 %v2688, 0.0
      %v2721 = vmax.f32 %v2689, 0.0
      %v2722 = vmax.f32 %v2690, 0.0
      %v2723 = vmax.f32 %v2691, 0.0
      %v2724 = vmax.f32 %v2692, 0.0
      %v2725 = vmax.f32 %v2693, 0.0
      %v2726 = vmax.f32 %v2694, 0.0
      %v2727 = vmax.f32 %v2695, 0.0
      %v2728 = vmax.f32 %v2696, 0.0
      %v2729 = vmax.f32 %v2697, 0.0
      %v2730 = vmax.f32 %v2698, 0.0
      %v2731 = vmax.f32 %v2699, 0.0
      %v2732 = vmax.f32 %v2700, 0.0
      %v2733 = vmax.f32 %v2701, 0.0
      %v2734 = vmax.f32 %v2702, 0.0
      %v2735 = vmax.f32 %v2703, 0.0
      %v2736 = vmax.f32 %v2704, 0.0
      %v2737 = vmax.f32 %v2705, 0.0
      %v2738 = vmax.f32 %v2706, 0.0
      %v2739 = vmax.f32 %v2707, 0.0
      %v2740 = vmax.f32 %v2708, 0.0
      %v2741 = vmax.f32 %v2709, 0.0
      %v2742 = vmax.f32 %v2710, 0.0
      %v2743 = vmax.f32 %v2711, 0.0
      %v2744 = vmax.f32 %v2712, 0.0
      %v2745 = vmax.f32 %v2713, 0.0
      %2746 = vst.msk [vmem:[#allocation3] sm:$0xff] %vm226, 0.0
      %2747 = vst.msk [vmem:[#allocation3 + $0x8] sm:$0xff] %vm226, 0.0
      %2748 = vst.msk [vmem:[#allocation3 + $0x10] sm:$0x3] %vm229, 0.0
      %2749 = vst.msk [vmem:[#allocation3 + $0x18] sm:$0xff] %vm226, 0.0
      %2750 = vst.msk [vmem:[#allocation3 + $0x20] sm:$0xff] %vm226, 0.0
      %2751 = vst.msk [vmem:[#allocation3 + $0x28] sm:$0x3] %vm229, 0.0
      %2752 = vst.msk [vmem:[#allocation3 + $0x30] sm:$0xff] %vm226, 0.0
      %2753 = vst.msk [vmem:[#allocation3 + $0x38] sm:$0xff] %vm226, 0.0
      %2754 = vst.msk [vmem:[#allocation3 + $0x40] sm:$0x3] %vm229, 0.0
      %2755 = vst.msk [vmem:[#allocation3 + $0x48] sm:$0xff] %vm226, 0.0
      %2756 = vst.msk [vmem:[#allocation3 + $0x50] sm:$0xff] %vm226, 0.0
      %2757 = vst.msk [vmem:[#allocation3 + $0x58] sm:$0x3] %vm229, 0.0
      %2758 = vst.msk [vmem:[#allocation3 + $0x60] sm:$0xff] %vm226, 0.0
      %2759 = vst.msk [vmem:[#allocation3 + $0x68] sm:$0xff] %vm226, 0.0
      %2760 = vst.msk [vmem:[#allocation3 + $0x70] sm:$0x3] %vm229, 0.0
      %2761 = vst.msk [vmem:[#allocation3 + $0x78] sm:$0xff] %vm226, 0.0
      %2762 = vst.msk [vmem:[#allocation3 + $0x80] sm:$0xff] %vm226, 0.0
      %2763 = vst.msk [vmem:[#allocation3 + $0x88] sm:$0x3] %vm229, 0.0
      %2764 = vst.msk [vmem:[#allocation3 + $0x90] sm:$0xff] %vm226, 0.0
      %2765 = vst.msk [vmem:[#allocation3 + $0x98] sm:$0xff] %vm226, 0.0
      %2766 = vst.msk [vmem:[#allocation3 + $0xa0] sm:$0x3] %vm229, 0.0
      %2767 = vst.msk [vmem:[#allocation3 + $0xa8] sm:$0xff] %vm226, 0.0
      %2768 = vst.msk [vmem:[#allocation3 + $0xb0] sm:$0xff] %vm226, 0.0
      %2769 = vst.msk [vmem:[#allocation3 + $0xb8] sm:$0x3] %vm229, 0.0
      %2770 = vst.msk [vmem:[#allocation3 + $0xc0] sm:$0xff] %vm226, 0.0
      %2771 = vst.msk [vmem:[#allocation3 + $0xc8] sm:$0xff] %vm226, 0.0
      %2772 = vst.msk [vmem:[#allocation3 + $0xd0] sm:$0x3] %vm229, 0.0
      %2773 = vst.msk [vmem:[#allocation3 + $0xd8] sm:$0xff] %vm226, 0.0
      %2774 = vst.msk [vmem:[#allocation3 + $0xe0] sm:$0xff] %vm226, 0.0
      %2775 = vst.msk [vmem:[#allocation3 + $0xe8] sm:$0x3] %vm229, 0.0
      %2776 = vst.msk [vmem:[#allocation3 + $0xf0] sm:$0xff] %vm226, 0.0
      %2777 = vst.msk [vmem:[#allocation3 + $0xf8] sm:$0xff] %vm226, 0.0
      %2778 = vst.msk [vmem:[#allocation3 + $0x100] sm:$0x3] %vm229, 0.0
      %2779 = vst.msk [vmem:[#allocation3 + $0x108] sm:$0xff] %vm226, 0.0
      %2780 = vst.msk [vmem:[#allocation3 + $0x110] sm:$0xff] %vm226, 0.0
      %2781 = vst.msk [vmem:[#allocation3 + $0x118] sm:$0x3] %vm229, 0.0
      %2782 = vst.msk [vmem:[#allocation3 + $0x120] sm:$0xff] %vm226, 0.0
      %2783 = vst.msk [vmem:[#allocation3 + $0x128] sm:$0xff] %vm226, 0.0
      %2784 = vst.msk [vmem:[#allocation3 + $0x130] sm:$0x3] %vm229, 0.0
      %2785 = vst.msk [vmem:[#allocation3 + $0x138] sm:$0xff] %vm226, 0.0
      %2786 = vst.msk [vmem:[#allocation3 + $0x140] sm:$0xff] %vm226, 0.0
      %2787 = vst.msk [vmem:[#allocation3 + $0x148] sm:$0x3] %vm229, 0.0
      %2788 = vst.msk [vmem:[#allocation3 + $0x150] sm:$0xff] %vm226, 0.0
      %2789 = vst.msk [vmem:[#allocation3 + $0x158] sm:$0xff] %vm226, 0.0
      %2790 = vst.msk [vmem:[#allocation3 + $0x160] sm:$0x3] %vm229, 0.0
      %2791 = vst.msk [vmem:[#allocation3 + $0x168] sm:$0xff] %vm226, 0.0
      %2792 = vst.msk [vmem:[#allocation3 + $0x170] sm:$0xff] %vm226, 0.0
      %2793 = vst.msk [vmem:[#allocation3 + $0x178] sm:$0x3] %vm229, 0.0
      %2794 = vst.msk [vmem:[#allocation3 + $0x180] sm:$0xff] %vm226, 0.0
      %2795 = vst.msk [vmem:[#allocation3 + $0x188] sm:$0xff] %vm226, 0.0
      %2796 = vst.msk [vmem:[#allocation3 + $0x190] sm:$0x3] %vm229, 0.0
      %2797 = vst.msk [vmem:[#allocation3 + $0x198] sm:$0xff] %vm226, 0.0
      %2798 = vst.msk [vmem:[#allocation3 + $0x1a0] sm:$0xff] %vm226, 0.0
      %2799 = vst.msk [vmem:[#allocation3 + $0x1a8] sm:$0x3] %vm229, 0.0
      %s2800 = scalar_lea.vmem [#allocation3], 24
      %2801 = vst.msk [vmem:[%s2800 + $0x1] sm:$0xff] %vm226, %v2714
      %2802 = vst.msk [vmem:[%s2800 + $0x9] sm:$0xff] %vm226, %v2715
      %2803 = vst.msk [vmem:[%s2800 + $0x19] sm:$0xff] %vm226, %v2716
      %2804 = vst.msk [vmem:[%s2800 + $0x21] sm:$0xff] %vm226, %v2717
      %2805 = vst.msk [vmem:[%s2800 + $0x31] sm:$0xff] %vm226, %v2718
      %2806 = vst.msk [vmem:[%s2800 + $0x39] sm:$0xff] %vm226, %v2719
      %2807 = vst.msk [vmem:[%s2800 + $0x49] sm:$0xff] %vm226, %v2720
      %2808 = vst.msk [vmem:[%s2800 + $0x51] sm:$0xff] %vm226, %v2721
      %2809 = vst.msk [vmem:[%s2800 + $0x61] sm:$0xff] %vm226, %v2722
      %2810 = vst.msk [vmem:[%s2800 + $0x69] sm:$0xff] %vm226, %v2723
      %2811 = vst.msk [vmem:[%s2800 + $0x79] sm:$0xff] %vm226, %v2724
      %2812 = vst.msk [vmem:[%s2800 + $0x81] sm:$0xff] %vm226, %v2725
      %2813 = vst.msk [vmem:[%s2800 + $0x91] sm:$0xff] %vm226, %v2726
      %2814 = vst.msk [vmem:[%s2800 + $0x99] sm:$0xff] %vm226, %v2727
      %2815 = vst.msk [vmem:[%s2800 + $0xa9] sm:$0xff] %vm226, %v2728
      %2816 = vst.msk [vmem:[%s2800 + $0xb1] sm:$0xff] %vm226, %v2729
      %2817 = vst.msk [vmem:[%s2800 + $0xc1] sm:$0xff] %vm226, %v2730
      %2818 = vst.msk [vmem:[%s2800 + $0xc9] sm:$0xff] %vm226, %v2731
      %2819 = vst.msk [vmem:[%s2800 + $0xd9] sm:$0xff] %vm226, %v2732
      %2820 = vst.msk [vmem:[%s2800 + $0xe1] sm:$0xff] %vm226, %v2733
      %2821 = vst.msk [vmem:[%s2800 + $0xf1] sm:$0xff] %vm226, %v2734
      %2822 = vst.msk [vmem:[%s2800 + $0xf9] sm:$0xff] %vm226, %v2735
      %2823 = vst.msk [vmem:[%s2800 + $0x109] sm:$0xff] %vm226, %v2736
      %2824 = vst.msk [vmem:[%s2800 + $0x111] sm:$0xff] %vm226, %v2737
      %2825 = vst.msk [vmem:[%s2800 + $0x121] sm:$0xff] %vm226, %v2738
      %2826 = vst.msk [vmem:[%s2800 + $0x129] sm:$0xff] %vm226, %v2739
      %2827 = vst.msk [vmem:[%s2800 + $0x139] sm:$0xff] %vm226, %v2740
      %2828 = vst.msk [vmem:[%s2800 + $0x141] sm:$0xff] %vm226, %v2741
      %2829 = vst.msk [vmem:[%s2800 + $0x151] sm:$0xff] %vm226, %v2742
      %2830 = vst.msk [vmem:[%s2800 + $0x159] sm:$0xff] %vm226, %v2743
      %2831 = vst.msk [vmem:[%s2800 + $0x169] sm:$0xff] %vm226, %v2744
      %2832 = vst.msk [vmem:[%s2800 + $0x171] sm:$0xff] %vm226, %v2745
      %v2833 = vld [vmem:[#allocation3] sm:$0xff]
      %v2834 = vld [vmem:[#allocation3 + $0x8] sm:$0xff]
      %v2835 = vld [vmem:[#allocation3 + $0x10] sm:$0x3]
      %v2836 = vld [vmem:[#allocation3 + $0x18] sm:$0xff]
      %v2837 = vld [vmem:[#allocation3 + $0x20] sm:$0xff]
      %v2838 = vld [vmem:[#allocation3 + $0x28] sm:$0x3]
      %v2839 = vld [vmem:[#allocation3 + $0x30] sm:$0xff]
      %v2840 = vld [vmem:[#allocation3 + $0x38] sm:$0xff]
      %v2841 = vld [vmem:[#allocation3 + $0x40] sm:$0x3]
      %v2842 = vld [vmem:[#allocation3 + $0x48] sm:$0xff]
      %v2843 = vld [vmem:[#allocation3 + $0x50] sm:$0xff]
      %v2844 = vld [vmem:[#allocation3 + $0x58] sm:$0x3]
      %v2845 = vld [vmem:[#allocation3 + $0x60] sm:$0xff]
      %v2846 = vld [vmem:[#allocation3 + $0x68] sm:$0xff]
      %v2847 = vld [vmem:[#allocation3 + $0x70] sm:$0x3]
      %v2848 = vld [vmem:[#allocation3 + $0x78] sm:$0xff]
      %v2849 = vld [vmem:[#allocation3 + $0x80] sm:$0xff]
      %v2850 = vld [vmem:[#allocation3 + $0x88] sm:$0x3]
      %v2851 = vld [vmem:[#allocation3 + $0x90] sm:$0xff]
      %v2852 = vld [vmem:[#allocation3 + $0x98] sm:$0xff]
      %v2853 = vld [vmem:[#allocation3 + $0xa0] sm:$0x3]
      %v2854 = vld [vmem:[#allocation3 + $0xa8] sm:$0xff]
      %v2855 = vld [vmem:[#allocation3 + $0xb0] sm:$0xff]
      %v2856 = vld [vmem:[#allocation3 + $0xb8] sm:$0x3]
      %v2857 = vld [vmem:[#allocation3 + $0xc0] sm:$0xff]
      %v2858 = vld [vmem:[#allocation3 + $0xc8] sm:$0xff]
      %v2859 = vld [vmem:[#allocation3 + $0xd0] sm:$0x3]
      %v2860 = vld [vmem:[#allocation3 + $0xd8] sm:$0xff]
      %v2861 = vld [vmem:[#allocation3 + $0xe0] sm:$0xff]
      %v2862 = vld [vmem:[#allocation3 + $0xe8] sm:$0x3]
      %v2863 = vld [vmem:[#allocation3 + $0xf0] sm:$0xff]
      %v2864 = vld [vmem:[#allocation3 + $0xf8] sm:$0xff]
      %v2865 = vld [vmem:[#allocation3 + $0x100] sm:$0x3]
      %v2866 = vld [vmem:[#allocation3 + $0x108] sm:$0xff]
      %v2867 = vld [vmem:[#allocation3 + $0x110] sm:$0xff]
      %v2868 = vld [vmem:[#allocation3 + $0x118] sm:$0x3]
      %v2869 = vld [vmem:[#allocation3 + $0x120] sm:$0xff]
      %v2870 = vld [vmem:[#allocation3 + $0x128] sm:$0xff]
      %v2871 = vld [vmem:[#allocation3 + $0x130] sm:$0x3]
      %v2872 = vld [vmem:[#allocation3 + $0x138] sm:$0xff]
      %v2873 = vld [vmem:[#allocation3 + $0x140] sm:$0xff]
      %v2874 = vld [vmem:[#allocation3 + $0x148] sm:$0x3]
      %v2875 = vld [vmem:[#allocation3 + $0x150] sm:$0xff]
      %v2876 = vld [vmem:[#allocation3 + $0x158] sm:$0xff]
      %v2877 = vld [vmem:[#allocation3 + $0x160] sm:$0x3]
      %v2878 = vld [vmem:[#allocation3 + $0x168] sm:$0xff]
      %v2879 = vld [vmem:[#allocation3 + $0x170] sm:$0xff]
      %v2880 = vld [vmem:[#allocation3 + $0x178] sm:$0x3]
      %v2881 = vld [vmem:[#allocation3 + $0x180] sm:$0xff]
      %v2882 = vld [vmem:[#allocation3 + $0x188] sm:$0xff]
      %v2883 = vld [vmem:[#allocation3 + $0x190] sm:$0x3]
      %v2884 = vld [vmem:[#allocation3 + $0x198] sm:$0xff]
      %v2885 = vld [vmem:[#allocation3 + $0x1a0] sm:$0xff]
      %v2886 = vld [vmem:[#allocation3 + $0x1a8] sm:$0x3]
      %v2887 = vpack.c.bf16 %v2834, %v2833
      %v2888 = vpack.c.bf16 %v2837, %v2836
      %v2889 = vpack.c.bf16 %v2840, %v2839
      %v2890 = vpack.c.bf16 %v2843, %v2842
      %v2891 = vpack.c.bf16 %v2846, %v2845
      %v2892 = vpack.c.bf16 %v2849, %v2848
      %v2893 = vpack.c.bf16 %v2852, %v2851
      %v2894 = vpack.c.bf16 %v2855, %v2854
      %v2895 = vpack.c.bf16 %v2858, %v2857
      %v2896 = vpack.c.bf16 %v2861, %v2860
      %v2897 = vpack.c.bf16 %v2864, %v2863
      %v2898 = vpack.c.bf16 %v2867, %v2866
      %v2899 = vpack.c.bf16 %v2870, %v2869
      %v2900 = vpack.c.bf16 %v2873, %v2872
      %v2901 = vpack.c.bf16 %v2876, %v2875
      %v2902 = vpack.c.bf16 %v2879, %v2878
      %v2903 = vld [vmem:[%s3] sm:$0xf]
      %v2952 = vrot.slane %v2833, 1
      %v2953 = vrot.slane %v2834, 1
      %v2954 = vsel %vm498, %v2952, %v2953
      %v2955 = vrot.slane %v2835, 1
      %v2956 = vsel %vm498, %v2953, %v2955
      %v2957 = vrot.slane %v2836, 1
      %v2958 = vrot.slane %v2837, 1
      %v2959 = vsel %vm498, %v2957, %v2958
      %v2960 = vrot.slane %v2838, 1
      %v2961 = vsel %vm498, %v2958, %v2960
      %v2962 = vrot.slane %v2839, 1
      %v2963 = vrot.slane %v2840, 1
      %v2964 = vsel %vm498, %v2962, %v2963
      %v2965 = vrot.slane %v2841, 1
      %v2966 = vsel %vm498, %v2963, %v2965
      %v2967 = vrot.slane %v2842, 1
      %v2968 = vrot.slane %v2843, 1
      %v2969 = vsel %vm498, %v2967, %v2968
      %v2970 = vrot.slane %v2844, 1
      %v2971 = vsel %vm498, %v2968, %v2970
      %v2972 = vrot.slane %v2845, 1
      %v2973 = vrot.slane %v2846, 1
      %v2974 = vsel %vm498, %v2972, %v2973
      %v2975 = vrot.slane %v2847, 1
      %v2976 = vsel %vm498, %v2973, %v2975
      %v2977 = vrot.slane %v2848, 1
      %v2978 = vrot.slane %v2849, 1
      %v2979 = vsel %vm498, %v2977, %v2978
      %v2980 = vrot.slane %v2850, 1
      %v2981 = vsel %vm498, %v2978, %v2980
      %v2982 = vrot.slane %v2851, 1
      %v2983 = vrot.slane %v2852, 1
      %v2984 = vsel %vm498, %v2982, %v2983
      %v2985 = vrot.slane %v2853, 1
      %v2986 = vsel %vm498, %v2983, %v2985
      %v2987 = vrot.slane %v2854, 1
      %v2988 = vrot.slane %v2855, 1
      %v2989 = vsel %vm498, %v2987, %v2988
      %v2990 = vrot.slane %v2856, 1
      %v2991 = vsel %vm498, %v2988, %v2990
      %v2992 = vrot.slane %v2857, 1
      %v2993 = vrot.slane %v2858, 1
      %v2994 = vsel %vm498, %v2992, %v2993
      %v2995 = vrot.slane %v2859, 1
      %v2996 = vsel %vm498, %v2993, %v2995
      %v2997 = vrot.slane %v2860, 1
      %v2998 = vrot.slane %v2861, 1
      %v2999 = vsel %vm498, %v2997, %v2998
      %v3000 = vrot.slane %v2862, 1
      %v3001 = vsel %vm498, %v2998, %v3000
      %v3002 = vrot.slane %v2863, 1
      %v3003 = vrot.slane %v2864, 1
      %v3004 = vsel %vm498, %v3002, %v3003
      %v3005 = vrot.slane %v2865, 1
      %v3006 = vsel %vm498, %v3003, %v3005
      %v3007 = vrot.slane %v2866, 1
      %v3008 = vrot.slane %v2867, 1
      %v3009 = vsel %vm498, %v3007, %v3008
      %v3010 = vrot.slane %v2868, 1
      %v3011 = vsel %vm498, %v3008, %v3010
      %v3012 = vrot.slane %v2869, 1
      %v3013 = vrot.slane %v2870, 1
      %v3014 = vsel %vm498, %v3012, %v3013
      %v3015 = vrot.slane %v2871, 1
      %v3016 = vsel %vm498, %v3013, %v3015
      %v3017 = vrot.slane %v2872, 1
      %v3018 = vrot.slane %v2873, 1
      %v3019 = vsel %vm498, %v3017, %v3018
      %v3020 = vrot.slane %v2874, 1
      %v3021 = vsel %vm498, %v3018, %v3020
      %v3022 = vrot.slane %v2875, 1
      %v3023 = vrot.slane %v2876, 1
      %v3024 = vsel %vm498, %v3022, %v3023
      %v3025 = vrot.slane %v2877, 1
      %v3026 = vsel %vm498, %v3023, %v3025
      %v3027 = vrot.slane %v2878, 1
      %v3028 = vrot.slane %v2879, 1
      %v3029 = vsel %vm498, %v3027, %v3028
      %v3030 = vrot.slane %v2880, 1
      %v3031 = vsel %vm498, %v3028, %v3030
      %v3064 = vpack.c.bf16 %v2956, %v2954
      %v3065 = vpack.c.bf16 %v2961, %v2959
      %v3066 = vpack.c.bf16 %v2966, %v2964
      %v3067 = vpack.c.bf16 %v2971, %v2969
      %v3068 = vpack.c.bf16 %v2976, %v2974
      %v3069 = vpack.c.bf16 %v2981, %v2979
      %v3070 = vpack.c.bf16 %v2986, %v2984
      %v3071 = vpack.c.bf16 %v2991, %v2989
      %v3072 = vpack.c.bf16 %v2996, %v2994
      %v3073 = vpack.c.bf16 %v3001, %v2999
      %v3074 = vpack.c.bf16 %v3006, %v3004
      %v3075 = vpack.c.bf16 %v3011, %v3009
      %v3076 = vpack.c.bf16 %v3016, %v3014
      %v3077 = vpack.c.bf16 %v3021, %v3019
      %v3078 = vpack.c.bf16 %v3026, %v3024
      %v3079 = vpack.c.bf16 %v3031, %v3029
      %s3080 = scalar_lea.vmem %s3, 4
      %v3081 = vld [vmem:[%s3080] sm:$0xf]
      %v3083 = vsel %vm226, %v3064, 0
      %v3086 = vsel %vm226, %v3065, 0
      %v3089 = vsel %vm226, %v3066, 0
      %v3092 = vsel %vm226, %v3067, 0
      %v3095 = vsel %vm226, %v3068, 0
      %v3098 = vsel %vm226, %v3069, 0
      %v3101 = vsel %vm226, %v3070, 0
      %v3104 = vsel %vm226, %v3071, 0
      %v3107 = vsel %vm226, %v3072, 0
      %v3110 = vsel %vm226, %v3073, 0
      %v3113 = vsel %vm226, %v3074, 0
      %v3116 = vsel %vm226, %v3075, 0
      %v3119 = vsel %vm226, %v3076, 0
      %v3122 = vsel %vm226, %v3077, 0
      %v3125 = vsel %vm226, %v3078, 0
      %v3128 = vsel %vm226, %v3079, 0
      %v3131 = vsel %vm677, %v3081, 0
      %3133 = vmatprep.subr.bf16.mxu0 0
      %3134 = vmatpush1.bf16.msra.mxu0 0
      %3135 = vmatprep.subr.bf16.mxu0 0
      %3136 = vmatpush1.bf16.msra.mxu0 0
      %3137 = vmatprep.subr.bf16.mxu0 0
      %3138 = vmatpush1.bf16.msra.mxu0 0
      %3139 = vmatprep.subr.bf16.mxu0 0
      %3140 = vmatpush1.bf16.msra.mxu0 0
      %3141 = vmatprep.subr.bf16.mxu0 0
      %3142 = vmatpush1.bf16.msra.mxu0 0
      %3143 = vmatprep.subr.bf16.mxu0 0
      %3144 = vmatpush1.bf16.msra.mxu0 0
      %3145 = vmatprep.subr.bf16.mxu0 0
      %3146 = vmatpush1.bf16.msra.mxu0 0
      %3147 = vmatprep.subr.bf16.mxu0 0
      %3148 = vmatpush1.bf16.msra.mxu0 %v3131
      %3149 = vmatprep.subr.bf16.mxu0 0
      %3150 = vmatpush2.bf16.msra.mxu0 0
      %3151 = vmatprep.subr.bf16.mxu0 0
      %3152 = vmatpush2.bf16.msra.mxu0 0
      %3153 = vmatprep.subr.bf16.mxu0 0
      %3154 = vmatpush2.bf16.msra.mxu0 0
      %3155 = vmatprep.subr.bf16.mxu0 0
      %3156 = vmatpush2.bf16.msra.mxu0 0
      %3157 = vmatprep.subr.bf16.mxu0 0
      %3158 = vmatpush2.bf16.msra.mxu0 0
      %3159 = vmatprep.subr.bf16.mxu0 0
      %3160 = vmatpush2.bf16.msra.mxu0 0
      %3161 = vmatprep.subr.bf16.mxu0 0
      %3162 = vmatpush2.bf16.msra.mxu0 0
      %3163 = vmatprep.subr.bf16.mxu0 0
      %3164 = vmatpush2.bf16.msra.mxu0 0
      %3165 = vmatprep.mubr.bf16.mxu0 0
      %3166 = vmatmul.mubr.bf16.gmra.mxu0 %v3083
      %v3167 = vpop.f32.mrf.mxu0
      %v3168 = vadd.f32 0.0, %v3167
      %v3169 = vpop.f32.mrf.mxu0
      %v3170 = vpop.f32.mrf.mxu0
      %v3171 = vadd.f32 0.0, %v3170
      %v3172 = vpop.f32.mrf.mxu0
      %3173 = vmatprep.mubr.bf16.mxu0 0
      %3174 = vmatmul.mubr.bf16.gmra.mxu0 %v3086
      %v3175 = vpop.f32.mrf.mxu0
      %v3176 = vadd.f32 0.0, %v3175
      %v3177 = vpop.f32.mrf.mxu0
      %v3178 = vpop.f32.mrf.mxu0
      %v3179 = vadd.f32 0.0, %v3178
      %v3180 = vpop.f32.mrf.mxu0
      %3181 = vmatprep.mubr.bf16.mxu0 0
      %3182 = vmatmul.mubr.bf16.gmra.mxu0 %v3089
      %v3183 = vpop.f32.mrf.mxu0
      %v3184 = vadd.f32 0.0, %v3183
      %v3185 = vpop.f32.mrf.mxu0
      %v3186 = vpop.f32.mrf.mxu0
      %v3187 = vadd.f32 0.0, %v3186
      %v3188 = vpop.f32.mrf.mxu0
      %3189 = vmatprep.mubr.bf16.mxu0 0
      %3190 = vmatmul.mubr.bf16.gmra.mxu0 %v3092
      %v3191 = vpop.f32.mrf.mxu0
      %v3192 = vadd.f32 0.0, %v3191
      %v3193 = vpop.f32.mrf.mxu0
      %v3194 = vpop.f32.mrf.mxu0
      %v3195 = vadd.f32 0.0, %v3194
      %v3196 = vpop.f32.mrf.mxu0
      %3197 = vmatprep.mubr.bf16.mxu0 0
      %3198 = vmatmul.mubr.bf16.gmra.mxu0 %v3095
      %v3199 = vpop.f32.mrf.mxu0
      %v3200 = vadd.f32 0.0, %v3199
      %v3201 = vpop.f32.mrf.mxu0
      %v3202 = vpop.f32.mrf.mxu0
      %v3203 = vadd.f32 0.0, %v3202
      %v3204 = vpop.f32.mrf.mxu0
      %3205 = vmatprep.mubr.bf16.mxu0 0
      %3206 = vmatmul.mubr.bf16.gmra.mxu0 %v3098
      %v3207 = vpop.f32.mrf.mxu0
      %v3208 = vadd.f32 0.0, %v3207
      %v3209 = vpop.f32.mrf.mxu0
      %v3210 = vpop.f32.mrf.mxu0
      %v3211 = vadd.f32 0.0, %v3210
      %v3212 = vpop.f32.mrf.mxu0
      %3213 = vmatprep.mubr.bf16.mxu0 0
      %3214 = vmatmul.mubr.bf16.gmra.mxu0 %v3101
      %v3215 = vpop.f32.mrf.mxu0
      %v3216 = vadd.f32 0.0, %v3215
      %v3217 = vpop.f32.mrf.mxu0
      %v3218 = vpop.f32.mrf.mxu0
      %v3219 = vadd.f32 0.0, %v3218
      %v3220 = vpop.f32.mrf.mxu0
      %3221 = vmatprep.mubr.bf16.mxu0 0
      %3222 = vmatmul.mubr.bf16.gmra.mxu0 %v3104
      %v3223 = vpop.f32.mrf.mxu0
      %v3224 = vadd.f32 0.0, %v3223
      %v3225 = vpop.f32.mrf.mxu0
      %v3226 = vpop.f32.mrf.mxu0
      %v3227 = vadd.f32 0.0, %v3226
      %v3228 = vpop.f32.mrf.mxu0
      %3229 = vmatprep.mubr.bf16.mxu0 0
      %3230 = vmatmul.mubr.bf16.gmra.mxu0 %v3107
      %v3231 = vpop.f32.mrf.mxu0
      %v3232 = vadd.f32 0.0, %v3231
      %v3233 = vpop.f32.mrf.mxu0
      %v3234 = vpop.f32.mrf.mxu0
      %v3235 = vadd.f32 0.0, %v3234
      %v3236 = vpop.f32.mrf.mxu0
      %3237 = vmatprep.mubr.bf16.mxu0 0
      %3238 = vmatmul.mubr.bf16.gmra.mxu0 %v3110
      %v3239 = vpop.f32.mrf.mxu0
      %v3240 = vadd.f32 0.0, %v3239
      %v3241 = vpop.f32.mrf.mxu0
      %v3242 = vpop.f32.mrf.mxu0
      %v3243 = vadd.f32 0.0, %v3242
      %v3244 = vpop.f32.mrf.mxu0
      %3245 = vmatprep.mubr.bf16.mxu0 0
      %3246 = vmatmul.mubr.bf16.gmra.mxu0 %v3113
      %v3247 = vpop.f32.mrf.mxu0
      %v3248 = vadd.f32 0.0, %v3247
      %v3249 = vpop.f32.mrf.mxu0
      %v3250 = vpop.f32.mrf.mxu0
      %v3251 = vadd.f32 0.0, %v3250
      %v3252 = vpop.f32.mrf.mxu0
      %3253 = vmatprep.mubr.bf16.mxu0 0
      %3254 = vmatmul.mubr.bf16.gmra.mxu0 %v3116
      %v3255 = vpop.f32.mrf.mxu0
      %v3256 = vadd.f32 0.0, %v3255
      %v3257 = vpop.f32.mrf.mxu0
      %v3258 = vpop.f32.mrf.mxu0
      %v3259 = vadd.f32 0.0, %v3258
      %v3260 = vpop.f32.mrf.mxu0
      %3261 = vmatprep.mubr.bf16.mxu0 0
      %3262 = vmatmul.mubr.bf16.gmra.mxu0 %v3119
      %v3263 = vpop.f32.mrf.mxu0
      %v3264 = vadd.f32 0.0, %v3263
      %v3265 = vpop.f32.mrf.mxu0
      %v3266 = vpop.f32.mrf.mxu0
      %v3267 = vadd.f32 0.0, %v3266
      %v3268 = vpop.f32.mrf.mxu0
      %3269 = vmatprep.mubr.bf16.mxu0 0
      %3270 = vmatmul.mubr.bf16.gmra.mxu0 %v3122
      %v3271 = vpop.f32.mrf.mxu0
      %v3272 = vadd.f32 0.0, %v3271
      %v3273 = vpop.f32.mrf.mxu0
      %v3274 = vpop.f32.mrf.mxu0
      %v3275 = vadd.f32 0.0, %v3274
      %v3276 = vpop.f32.mrf.mxu0
      %3277 = vmatprep.mubr.bf16.mxu0 0
      %3278 = vmatmul.mubr.bf16.gmra.mxu0 %v3125
      %v3279 = vpop.f32.mrf.mxu0
      %v3280 = vadd.f32 0.0, %v3279
      %v3281 = vpop.f32.mrf.mxu0
      %v3282 = vpop.f32.mrf.mxu0
      %v3283 = vadd.f32 0.0, %v3282
      %v3284 = vpop.f32.mrf.mxu0
      %3285 = vmatprep.mubr.bf16.mxu0 0
      %3286 = vmatmul.mubr.bf16.gmra.mxu0 %v3128
      %v3287 = vpop.f32.mrf.mxu0
      %v3288 = vadd.f32 0.0, %v3287
      %v3289 = vpop.f32.mrf.mxu0
      %v3290 = vpop.f32.mrf.mxu0
      %v3291 = vadd.f32 0.0, %v3290
      %v3292 = vpop.f32.mrf.mxu0
      %3293 = vdwg.mxu0
      %v3295 = vsel %vm226, %v2887, 0
      %v3298 = vsel %vm226, %v2888, 0
      %v3301 = vsel %vm226, %v2889, 0
      %v3304 = vsel %vm226, %v2890, 0
      %v3307 = vsel %vm226, %v2891, 0
      %v3310 = vsel %vm226, %v2892, 0
      %v3313 = vsel %vm226, %v2893, 0
      %v3316 = vsel %vm226, %v2894, 0
      %v3319 = vsel %vm226, %v2895, 0
      %v3322 = vsel %vm226, %v2896, 0
      %v3325 = vsel %vm226, %v2897, 0
      %v3328 = vsel %vm226, %v2898, 0
      %v3331 = vsel %vm226, %v2899, 0
      %v3334 = vsel %vm226, %v2900, 0
      %v3337 = vsel %vm226, %v2901, 0
      %v3340 = vsel %vm226, %v2902, 0
      %v3343 = vsel %vm677, %v2903, 0
      %3345 = vmatprep.subr.bf16.mxu0 0
      %3346 = vmatpush1.bf16.msra.mxu0 0
      %3347 = vmatprep.subr.bf16.mxu0 0
      %3348 = vmatpush1.bf16.msra.mxu0 0
      %3349 = vmatprep.subr.bf16.mxu0 0
      %3350 = vmatpush1.bf16.msra.mxu0 0
      %3351 = vmatprep.subr.bf16.mxu0 0
      %3352 = vmatpush1.bf16.msra.mxu0 0
      %3353 = vmatprep.subr.bf16.mxu0 0
      %3354 = vmatpush1.bf16.msra.mxu0 0
      %3355 = vmatprep.subr.bf16.mxu0 0
      %3356 = vmatpush1.bf16.msra.mxu0 0
      %3357 = vmatprep.subr.bf16.mxu0 0
      %3358 = vmatpush1.bf16.msra.mxu0 0
      %3359 = vmatprep.subr.bf16.mxu0 0
      %3360 = vmatpush1.bf16.msra.mxu0 %v3343
      %3361 = vmatprep.subr.bf16.mxu0 0
      %3362 = vmatpush2.bf16.msra.mxu0 0
      %3363 = vmatprep.subr.bf16.mxu0 0
      %3364 = vmatpush2.bf16.msra.mxu0 0
      %3365 = vmatprep.subr.bf16.mxu0 0
      %3366 = vmatpush2.bf16.msra.mxu0 0
      %3367 = vmatprep.subr.bf16.mxu0 0
      %3368 = vmatpush2.bf16.msra.mxu0 0
      %3369 = vmatprep.subr.bf16.mxu0 0
      %3370 = vmatpush2.bf16.msra.mxu0 0
      %3371 = vmatprep.subr.bf16.mxu0 0
      %3372 = vmatpush2.bf16.msra.mxu0 0
      %3373 = vmatprep.subr.bf16.mxu0 0
      %3374 = vmatpush2.bf16.msra.mxu0 0
      %3375 = vmatprep.subr.bf16.mxu0 0
      %3376 = vmatpush2.bf16.msra.mxu0 0
      %3377 = vmatprep.mubr.bf16.mxu0 0
      %3378 = vmatmul.mubr.bf16.gmra.mxu0 %v3295
      %v3379 = vpop.f32.mrf.mxu0
      %v3380 = vadd.f32 %v3168, %v3379
      %v3381 = vpop.f32.mrf.mxu0
      %v3382 = vpop.f32.mrf.mxu0
      %v3383 = vadd.f32 %v3171, %v3382
      %v3384 = vpop.f32.mrf.mxu0
      %3385 = vmatprep.mubr.bf16.mxu0 0
      %3386 = vmatmul.mubr.bf16.gmra.mxu0 %v3298
      %v3387 = vpop.f32.mrf.mxu0
      %v3388 = vadd.f32 %v3176, %v3387
      %v3389 = vpop.f32.mrf.mxu0
      %v3390 = vpop.f32.mrf.mxu0
      %v3391 = vadd.f32 %v3179, %v3390
      %v3392 = vpop.f32.mrf.mxu0
      %3393 = vmatprep.mubr.bf16.mxu0 0
      %3394 = vmatmul.mubr.bf16.gmra.mxu0 %v3301
      %v3395 = vpop.f32.mrf.mxu0
      %v3396 = vadd.f32 %v3184, %v3395
      %v3397 = vpop.f32.mrf.mxu0
      %v3398 = vpop.f32.mrf.mxu0
      %v3399 = vadd.f32 %v3187, %v3398
      %v3400 = vpop.f32.mrf.mxu0
      %3401 = vmatprep.mubr.bf16.mxu0 0
      %3402 = vmatmul.mubr.bf16.gmra.mxu0 %v3304
      %v3403 = vpop.f32.mrf.mxu0
      %v3404 = vadd.f32 %v3192, %v3403
      %v3405 = vpop.f32.mrf.mxu0
      %v3406 = vpop.f32.mrf.mxu0
      %v3407 = vadd.f32 %v3195, %v3406
      %v3408 = vpop.f32.mrf.mxu0
      %3409 = vmatprep.mubr.bf16.mxu0 0
      %3410 = vmatmul.mubr.bf16.gmra.mxu0 %v3307
      %v3411 = vpop.f32.mrf.mxu0
      %v3412 = vadd.f32 %v3200, %v3411
      %v3413 = vpop.f32.mrf.mxu0
      %v3414 = vpop.f32.mrf.mxu0
      %v3415 = vadd.f32 %v3203, %v3414
      %v3416 = vpop.f32.mrf.mxu0
      %3417 = vmatprep.mubr.bf16.mxu0 0
      %3418 = vmatmul.mubr.bf16.gmra.mxu0 %v3310
      %v3419 = vpop.f32.mrf.mxu0
      %v3420 = vadd.f32 %v3208, %v3419
      %v3421 = vpop.f32.mrf.mxu0
      %v3422 = vpop.f32.mrf.mxu0
      %v3423 = vadd.f32 %v3211, %v3422
      %v3424 = vpop.f32.mrf.mxu0
      %3425 = vmatprep.mubr.bf16.mxu0 0
      %3426 = vmatmul.mubr.bf16.gmra.mxu0 %v3313
      %v3427 = vpop.f32.mrf.mxu0
      %v3428 = vadd.f32 %v3216, %v3427
      %v3429 = vpop.f32.mrf.mxu0
      %v3430 = vpop.f32.mrf.mxu0
      %v3431 = vadd.f32 %v3219, %v3430
      %v3432 = vpop.f32.mrf.mxu0
      %3433 = vmatprep.mubr.bf16.mxu0 0
      %3434 = vmatmul.mubr.bf16.gmra.mxu0 %v3316
      %v3435 = vpop.f32.mrf.mxu0
      %v3436 = vadd.f32 %v3224, %v3435
      %v3437 = vpop.f32.mrf.mxu0
      %v3438 = vpop.f32.mrf.mxu0
      %v3439 = vadd.f32 %v3227, %v3438
      %v3440 = vpop.f32.mrf.mxu0
      %3441 = vmatprep.mubr.bf16.mxu0 0
      %3442 = vmatmul.mubr.bf16.gmra.mxu0 %v3319
      %v3443 = vpop.f32.mrf.mxu0
      %v3444 = vadd.f32 %v3232, %v3443
      %v3445 = vpop.f32.mrf.mxu0
      %v3446 = vpop.f32.mrf.mxu0
      %v3447 = vadd.f32 %v3235, %v3446
      %v3448 = vpop.f32.mrf.mxu0
      %3449 = vmatprep.mubr.bf16.mxu0 0
      %3450 = vmatmul.mubr.bf16.gmra.mxu0 %v3322
      %v3451 = vpop.f32.mrf.mxu0
      %v3452 = vadd.f32 %v3240, %v3451
      %v3453 = vpop.f32.mrf.mxu0
      %v3454 = vpop.f32.mrf.mxu0
      %v3455 = vadd.f32 %v3243, %v3454
      %v3456 = vpop.f32.mrf.mxu0
      %3457 = vmatprep.mubr.bf16.mxu0 0
      %3458 = vmatmul.mubr.bf16.gmra.mxu0 %v3325
      %v3459 = vpop.f32.mrf.mxu0
      %v3460 = vadd.f32 %v3248, %v3459
      %v3461 = vpop.f32.mrf.mxu0
      %v3462 = vpop.f32.mrf.mxu0
      %v3463 = vadd.f32 %v3251, %v3462
      %v3464 = vpop.f32.mrf.mxu0
      %3465 = vmatprep.mubr.bf16.mxu0 0
      %3466 = vmatmul.mubr.bf16.gmra.mxu0 %v3328
      %v3467 = vpop.f32.mrf.mxu0
      %v3468 = vadd.f32 %v3256, %v3467
      %v3469 = vpop.f32.mrf.mxu0
      %v3470 = vpop.f32.mrf.mxu0
      %v3471 = vadd.f32 %v3259, %v3470
      %v3472 = vpop.f32.mrf.mxu0
      %3473 = vmatprep.mubr.bf16.mxu0 0
      %3474 = vmatmul.mubr.bf16.gmra.mxu0 %v3331
      %v3475 = vpop.f32.mrf.mxu0
      %v3476 = vadd.f32 %v3264, %v3475
      %v3477 = vpop.f32.mrf.mxu0
      %v3478 = vpop.f32.mrf.mxu0
      %v3479 = vadd.f32 %v3267, %v3478
      %v3480 = vpop.f32.mrf.mxu0
      %3481 = vmatprep.mubr.bf16.mxu0 0
      %3482 = vmatmul.mubr.bf16.gmra.mxu0 %v3334
      %v3483 = vpop.f32.mrf.mxu0
      %v3484 = vadd.f32 %v3272, %v3483
      %v3485 = vpop.f32.mrf.mxu0
      %v3486 = vpop.f32.mrf.mxu0
      %v3487 = vadd.f32 %v3275, %v3486
      %v3488 = vpop.f32.mrf.mxu0
      %3489 = vmatprep.mubr.bf16.mxu0 0
      %3490 = vmatmul.mubr.bf16.gmra.mxu0 %v3337
      %v3491 = vpop.f32.mrf.mxu0
      %v3492 = vadd.f32 %v3280, %v3491
      %v3493 = vpop.f32.mrf.mxu0
      %v3494 = vpop.f32.mrf.mxu0
      %v3495 = vadd.f32 %v3283, %v3494
      %v3496 = vpop.f32.mrf.mxu0
      %3497 = vmatprep.mubr.bf16.mxu0 0
      %3498 = vmatmul.mubr.bf16.gmra.mxu0 %v3340
      %v3499 = vpop.f32.mrf.mxu0
      %v3500 = vadd.f32 %v3288, %v3499
      %v3501 = vpop.f32.mrf.mxu0
      %v3502 = vpop.f32.mrf.mxu0
      %v3503 = vadd.f32 %v3291, %v3502
      %v3504 = vpop.f32.mrf.mxu0
      %3505 = vdwg.mxu0
      %v3506 = vrot.slane %v2833, 2
      %v3507 = vrot.slane %v2834, 2
      %v3508 = vsel %vm1054, %v3506, %v3507
      %v3509 = vrot.slane %v2835, 2
      %v3510 = vsel %vm1054, %v3507, %v3509
      %v3511 = vrot.slane %v2836, 2
      %v3512 = vrot.slane %v2837, 2
      %v3513 = vsel %vm1054, %v3511, %v3512
      %v3514 = vrot.slane %v2838, 2
      %v3515 = vsel %vm1054, %v3512, %v3514
      %v3516 = vrot.slane %v2839, 2
      %v3517 = vrot.slane %v2840, 2
      %v3518 = vsel %vm1054, %v3516, %v3517
      %v3519 = vrot.slane %v2841, 2
      %v3520 = vsel %vm1054, %v3517, %v3519
      %v3521 = vrot.slane %v2842, 2
      %v3522 = vrot.slane %v2843, 2
      %v3523 = vsel %vm1054, %v3521, %v3522
      %v3524 = vrot.slane %v2844, 2
      %v3525 = vsel %vm1054, %v3522, %v3524
      %v3526 = vrot.slane %v2845, 2
      %v3527 = vrot.slane %v2846, 2
      %v3528 = vsel %vm1054, %v3526, %v3527
      %v3529 = vrot.slane %v2847, 2
      %v3530 = vsel %vm1054, %v3527, %v3529
      %v3531 = vrot.slane %v2848, 2
      %v3532 = vrot.slane %v2849, 2
      %v3533 = vsel %vm1054, %v3531, %v3532
      %v3534 = vrot.slane %v2850, 2
      %v3535 = vsel %vm1054, %v3532, %v3534
      %v3536 = vrot.slane %v2851, 2
      %v3537 = vrot.slane %v2852, 2
      %v3538 = vsel %vm1054, %v3536, %v3537
      %v3539 = vrot.slane %v2853, 2
      %v3540 = vsel %vm1054, %v3537, %v3539
      %v3541 = vrot.slane %v2854, 2
      %v3542 = vrot.slane %v2855, 2
      %v3543 = vsel %vm1054, %v3541, %v3542
      %v3544 = vrot.slane %v2856, 2
      %v3545 = vsel %vm1054, %v3542, %v3544
      %v3546 = vrot.slane %v2857, 2
      %v3547 = vrot.slane %v2858, 2
      %v3548 = vsel %vm1054, %v3546, %v3547
      %v3549 = vrot.slane %v2859, 2
      %v3550 = vsel %vm1054, %v3547, %v3549
      %v3551 = vrot.slane %v2860, 2
      %v3552 = vrot.slane %v2861, 2
      %v3553 = vsel %vm1054, %v3551, %v3552
      %v3554 = vrot.slane %v2862, 2
      %v3555 = vsel %vm1054, %v3552, %v3554
      %v3556 = vrot.slane %v2863, 2
      %v3557 = vrot.slane %v2864, 2
      %v3558 = vsel %vm1054, %v3556, %v3557
      %v3559 = vrot.slane %v2865, 2
      %v3560 = vsel %vm1054, %v3557, %v3559
      %v3561 = vrot.slane %v2866, 2
      %v3562 = vrot.slane %v2867, 2
      %v3563 = vsel %vm1054, %v3561, %v3562
      %v3564 = vrot.slane %v2868, 2
      %v3565 = vsel %vm1054, %v3562, %v3564
      %v3566 = vrot.slane %v2869, 2
      %v3567 = vrot.slane %v2870, 2
      %v3568 = vsel %vm1054, %v3566, %v3567
      %v3569 = vrot.slane %v2871, 2
      %v3570 = vsel %vm1054, %v3567, %v3569
      %v3571 = vrot.slane %v2872, 2
      %v3572 = vrot.slane %v2873, 2
      %v3573 = vsel %vm1054, %v3571, %v3572
      %v3574 = vrot.slane %v2874, 2
      %v3575 = vsel %vm1054, %v3572, %v3574
      %v3576 = vrot.slane %v2875, 2
      %v3577 = vrot.slane %v2876, 2
      %v3578 = vsel %vm1054, %v3576, %v3577
      %v3579 = vrot.slane %v2877, 2
      %v3580 = vsel %vm1054, %v3577, %v3579
      %v3581 = vrot.slane %v2878, 2
      %v3582 = vrot.slane %v2879, 2
      %v3583 = vsel %vm1054, %v3581, %v3582
      %v3584 = vrot.slane %v2880, 2
      %v3585 = vsel %vm1054, %v3582, %v3584
      %v3618 = vpack.c.bf16 %v3510, %v3508
      %v3619 = vpack.c.bf16 %v3515, %v3513
      %v3620 = vpack.c.bf16 %v3520, %v3518
      %v3621 = vpack.c.bf16 %v3525, %v3523
      %v3622 = vpack.c.bf16 %v3530, %v3528
      %v3623 = vpack.c.bf16 %v3535, %v3533
      %v3624 = vpack.c.bf16 %v3540, %v3538
      %v3625 = vpack.c.bf16 %v3545, %v3543
      %v3626 = vpack.c.bf16 %v3550, %v3548
      %v3627 = vpack.c.bf16 %v3555, %v3553
      %v3628 = vpack.c.bf16 %v3560, %v3558
      %v3629 = vpack.c.bf16 %v3565, %v3563
      %v3630 = vpack.c.bf16 %v3570, %v3568
      %v3631 = vpack.c.bf16 %v3575, %v3573
      %v3632 = vpack.c.bf16 %v3580, %v3578
      %v3633 = vpack.c.bf16 %v3585, %v3583
      %s3634 = scalar_lea.vmem %s3, 8
      %v3635 = vld [vmem:[%s3634] sm:$0xf]
      %v3637 = vsel %vm226, %v3618, 0
      %v3640 = vsel %vm226, %v3619, 0
      %v3643 = vsel %vm226, %v3620, 0
      %v3646 = vsel %vm226, %v3621, 0
      %v3649 = vsel %vm226, %v3622, 0
      %v3652 = vsel %vm226, %v3623, 0
      %v3655 = vsel %vm226, %v3624, 0
      %v3658 = vsel %vm226, %v3625, 0
      %v3661 = vsel %vm226, %v3626, 0
      %v3664 = vsel %vm226, %v3627, 0
      %v3667 = vsel %vm226, %v3628, 0
      %v3670 = vsel %vm226, %v3629, 0
      %v3673 = vsel %vm226, %v3630, 0
      %v3676 = vsel %vm226, %v3631, 0
      %v3679 = vsel %vm226, %v3632, 0
      %v3682 = vsel %vm226, %v3633, 0
      %v3685 = vsel %vm677, %v3635, 0
      %3687 = vmatprep.subr.bf16.mxu0 0
      %3688 = vmatpush1.bf16.msra.mxu0 0
      %3689 = vmatprep.subr.bf16.mxu0 0
      %3690 = vmatpush1.bf16.msra.mxu0 0
      %3691 = vmatprep.subr.bf16.mxu0 0
      %3692 = vmatpush1.bf16.msra.mxu0 0
      %3693 = vmatprep.subr.bf16.mxu0 0
      %3694 = vmatpush1.bf16.msra.mxu0 0
      %3695 = vmatprep.subr.bf16.mxu0 0
      %3696 = vmatpush1.bf16.msra.mxu0 0
      %3697 = vmatprep.subr.bf16.mxu0 0
      %3698 = vmatpush1.bf16.msra.mxu0 0
      %3699 = vmatprep.subr.bf16.mxu0 0
      %3700 = vmatpush1.bf16.msra.mxu0 0
      %3701 = vmatprep.subr.bf16.mxu0 0
      %3702 = vmatpush1.bf16.msra.mxu0 %v3685
      %3703 = vmatprep.subr.bf16.mxu0 0
      %3704 = vmatpush2.bf16.msra.mxu0 0
      %3705 = vmatprep.subr.bf16.mxu0 0
      %3706 = vmatpush2.bf16.msra.mxu0 0
      %3707 = vmatprep.subr.bf16.mxu0 0
      %3708 = vmatpush2.bf16.msra.mxu0 0
      %3709 = vmatprep.subr.bf16.mxu0 0
      %3710 = vmatpush2.bf16.msra.mxu0 0
      %3711 = vmatprep.subr.bf16.mxu0 0
      %3712 = vmatpush2.bf16.msra.mxu0 0
      %3713 = vmatprep.subr.bf16.mxu0 0
      %3714 = vmatpush2.bf16.msra.mxu0 0
      %3715 = vmatprep.subr.bf16.mxu0 0
      %3716 = vmatpush2.bf16.msra.mxu0 0
      %3717 = vmatprep.subr.bf16.mxu0 0
      %3718 = vmatpush2.bf16.msra.mxu0 0
      %3719 = vmatprep.mubr.bf16.mxu0 0
      %3720 = vmatmul.mubr.bf16.gmra.mxu0 %v3637
      %v3721 = vpop.f32.mrf.mxu0
      %v3722 = vadd.f32 0.0, %v3721
      %v3723 = vpop.f32.mrf.mxu0
      %v3724 = vpop.f32.mrf.mxu0
      %v3725 = vadd.f32 0.0, %v3724
      %v3726 = vpop.f32.mrf.mxu0
      %3727 = vmatprep.mubr.bf16.mxu0 0
      %3728 = vmatmul.mubr.bf16.gmra.mxu0 %v3640
      %v3729 = vpop.f32.mrf.mxu0
      %v3730 = vadd.f32 0.0, %v3729
      %v3731 = vpop.f32.mrf.mxu0
      %v3732 = vpop.f32.mrf.mxu0
      %v3733 = vadd.f32 0.0, %v3732
      %v3734 = vpop.f32.mrf.mxu0
      %3735 = vmatprep.mubr.bf16.mxu0 0
      %3736 = vmatmul.mubr.bf16.gmra.mxu0 %v3643
      %v3737 = vpop.f32.mrf.mxu0
      %v3738 = vadd.f32 0.0, %v3737
      %v3739 = vpop.f32.mrf.mxu0
      %v3740 = vpop.f32.mrf.mxu0
      %v3741 = vadd.f32 0.0, %v3740
      %v3742 = vpop.f32.mrf.mxu0
      %3743 = vmatprep.mubr.bf16.mxu0 0
      %3744 = vmatmul.mubr.bf16.gmra.mxu0 %v3646
      %v3745 = vpop.f32.mrf.mxu0
      %v3746 = vadd.f32 0.0, %v3745
      %v3747 = vpop.f32.mrf.mxu0
      %v3748 = vpop.f32.mrf.mxu0
      %v3749 = vadd.f32 0.0, %v3748
      %v3750 = vpop.f32.mrf.mxu0
      %3751 = vmatprep.mubr.bf16.mxu0 0
      %3752 = vmatmul.mubr.bf16.gmra.mxu0 %v3649
      %v3753 = vpop.f32.mrf.mxu0
      %v3754 = vadd.f32 0.0, %v3753
      %v3755 = vpop.f32.mrf.mxu0
      %v3756 = vpop.f32.mrf.mxu0
      %v3757 = vadd.f32 0.0, %v3756
      %v3758 = vpop.f32.mrf.mxu0
      %3759 = vmatprep.mubr.bf16.mxu0 0
      %3760 = vmatmul.mubr.bf16.gmra.mxu0 %v3652
      %v3761 = vpop.f32.mrf.mxu0
      %v3762 = vadd.f32 0.0, %v3761
      %v3763 = vpop.f32.mrf.mxu0
      %v3764 = vpop.f32.mrf.mxu0
      %v3765 = vadd.f32 0.0, %v3764
      %v3766 = vpop.f32.mrf.mxu0
      %3767 = vmatprep.mubr.bf16.mxu0 0
      %3768 = vmatmul.mubr.bf16.gmra.mxu0 %v3655
      %v3769 = vpop.f32.mrf.mxu0
      %v3770 = vadd.f32 0.0, %v3769
      %v3771 = vpop.f32.mrf.mxu0
      %v3772 = vpop.f32.mrf.mxu0
      %v3773 = vadd.f32 0.0, %v3772
      %v3774 = vpop.f32.mrf.mxu0
      %3775 = vmatprep.mubr.bf16.mxu0 0
      %3776 = vmatmul.mubr.bf16.gmra.mxu0 %v3658
      %v3777 = vpop.f32.mrf.mxu0
      %v3778 = vadd.f32 0.0, %v3777
      %v3779 = vpop.f32.mrf.mxu0
      %v3780 = vpop.f32.mrf.mxu0
      %v3781 = vadd.f32 0.0, %v3780
      %v3782 = vpop.f32.mrf.mxu0
      %3783 = vmatprep.mubr.bf16.mxu0 0
      %3784 = vmatmul.mubr.bf16.gmra.mxu0 %v3661
      %v3785 = vpop.f32.mrf.mxu0
      %v3786 = vadd.f32 0.0, %v3785
      %v3787 = vpop.f32.mrf.mxu0
      %v3788 = vpop.f32.mrf.mxu0
      %v3789 = vadd.f32 0.0, %v3788
      %v3790 = vpop.f32.mrf.mxu0
      %3791 = vmatprep.mubr.bf16.mxu0 0
      %3792 = vmatmul.mubr.bf16.gmra.mxu0 %v3664
      %v3793 = vpop.f32.mrf.mxu0
      %v3794 = vadd.f32 0.0, %v3793
      %v3795 = vpop.f32.mrf.mxu0
      %v3796 = vpop.f32.mrf.mxu0
      %v3797 = vadd.f32 0.0, %v3796
      %v3798 = vpop.f32.mrf.mxu0
      %3799 = vmatprep.mubr.bf16.mxu0 0
      %3800 = vmatmul.mubr.bf16.gmra.mxu0 %v3667
      %v3801 = vpop.f32.mrf.mxu0
      %v3802 = vadd.f32 0.0, %v3801
      %v3803 = vpop.f32.mrf.mxu0
      %v3804 = vpop.f32.mrf.mxu0
      %v3805 = vadd.f32 0.0, %v3804
      %v3806 = vpop.f32.mrf.mxu0
      %3807 = vmatprep.mubr.bf16.mxu0 0
      %3808 = vmatmul.mubr.bf16.gmra.mxu0 %v3670
      %v3809 = vpop.f32.mrf.mxu0
      %v3810 = vadd.f32 0.0, %v3809
      %v3811 = vpop.f32.mrf.mxu0
      %v3812 = vpop.f32.mrf.mxu0
      %v3813 = vadd.f32 0.0, %v3812
      %v3814 = vpop.f32.mrf.mxu0
      %3815 = vmatprep.mubr.bf16.mxu0 0
      %3816 = vmatmul.mubr.bf16.gmra.mxu0 %v3673
      %v3817 = vpop.f32.mrf.mxu0
      %v3818 = vadd.f32 0.0, %v3817
      %v3819 = vpop.f32.mrf.mxu0
      %v3820 = vpop.f32.mrf.mxu0
      %v3821 = vadd.f32 0.0, %v3820
      %v3822 = vpop.f32.mrf.mxu0
      %3823 = vmatprep.mubr.bf16.mxu0 0
      %3824 = vmatmul.mubr.bf16.gmra.mxu0 %v3676
      %v3825 = vpop.f32.mrf.mxu0
      %v3826 = vadd.f32 0.0, %v3825
      %v3827 = vpop.f32.mrf.mxu0
      %v3828 = vpop.f32.mrf.mxu0
      %v3829 = vadd.f32 0.0, %v3828
      %v3830 = vpop.f32.mrf.mxu0
      %3831 = vmatprep.mubr.bf16.mxu0 0
      %3832 = vmatmul.mubr.bf16.gmra.mxu0 %v3679
      %v3833 = vpop.f32.mrf.mxu0
      %v3834 = vadd.f32 0.0, %v3833
      %v3835 = vpop.f32.mrf.mxu0
      %v3836 = vpop.f32.mrf.mxu0
      %v3837 = vadd.f32 0.0, %v3836
      %v3838 = vpop.f32.mrf.mxu0
      %3839 = vmatprep.mubr.bf16.mxu0 0
      %3840 = vmatmul.mubr.bf16.gmra.mxu0 %v3682
      %v3841 = vpop.f32.mrf.mxu0
      %v3842 = vadd.f32 0.0, %v3841
      %v3843 = vpop.f32.mrf.mxu0
      %v3844 = vpop.f32.mrf.mxu0
      %v3845 = vadd.f32 0.0, %v3844
      %v3846 = vpop.f32.mrf.mxu0
      %3847 = vdwg.mxu0
      %v3848 = vadd.f32 %v3380, %v3722
      %v3849 = vadd.f32 %v3383, %v3725
      %v3850 = vadd.f32 %v3388, %v3730
      %v3851 = vadd.f32 %v3391, %v3733
      %v3852 = vadd.f32 %v3396, %v3738
      %v3853 = vadd.f32 %v3399, %v3741
      %v3854 = vadd.f32 %v3404, %v3746
      %v3855 = vadd.f32 %v3407, %v3749
      %v3856 = vadd.f32 %v3412, %v3754
      %v3857 = vadd.f32 %v3415, %v3757
      %v3858 = vadd.f32 %v3420, %v3762
      %v3859 = vadd.f32 %v3423, %v3765
      %v3860 = vadd.f32 %v3428, %v3770
      %v3861 = vadd.f32 %v3431, %v3773
      %v3862 = vadd.f32 %v3436, %v3778
      %v3863 = vadd.f32 %v3439, %v3781
      %v3864 = vadd.f32 %v3444, %v3786
      %v3865 = vadd.f32 %v3447, %v3789
      %v3866 = vadd.f32 %v3452, %v3794
      %v3867 = vadd.f32 %v3455, %v3797
      %v3868 = vadd.f32 %v3460, %v3802
      %v3869 = vadd.f32 %v3463, %v3805
      %v3870 = vadd.f32 %v3468, %v3810
      %v3871 = vadd.f32 %v3471, %v3813
      %v3872 = vadd.f32 %v3476, %v3818
      %v3873 = vadd.f32 %v3479, %v3821
      %v3874 = vadd.f32 %v3484, %v3826
      %v3875 = vadd.f32 %v3487, %v3829
      %v3876 = vadd.f32 %v3492, %v3834
      %v3877 = vadd.f32 %v3495, %v3837
      %v3878 = vadd.f32 %v3500, %v3842
      %v3879 = vadd.f32 %v3503, %v3845
      %v3880 = vpack.c.bf16 %v2882, %v2881
      %s3881 = scalar_lea.vmem %s3, 12
      %v3882 = vld [vmem:[%s3881] sm:$0xf]
      %v3884 = vsel %vm226, %v3880, 0
      %v3887 = vsel %vm677, %v3882, 0
      %3889 = vmatprep.subr.bf16.mxu0 0
      %3890 = vmatpush1.bf16.msra.mxu0 0
      %3891 = vmatprep.subr.bf16.mxu0 0
      %3892 = vmatpush1.bf16.msra.mxu0 0
      %3893 = vmatprep.subr.bf16.mxu0 0
      %3894 = vmatpush1.bf16.msra.mxu0 0
      %3895 = vmatprep.subr.bf16.mxu0 0
      %3896 = vmatpush1.bf16.msra.mxu0 0
      %3897 = vmatprep.subr.bf16.mxu0 0
      %3898 = vmatpush1.bf16.msra.mxu0 0
      %3899 = vmatprep.subr.bf16.mxu0 0
      %3900 = vmatpush1.bf16.msra.mxu0 0
      %3901 = vmatprep.subr.bf16.mxu0 0
      %3902 = vmatpush1.bf16.msra.mxu0 0
      %3903 = vmatprep.subr.bf16.mxu0 0
      %3904 = vmatpush1.bf16.msra.mxu0 %v3887
      %3905 = vmatprep.subr.bf16.mxu0 0
      %3906 = vmatpush2.bf16.msra.mxu0 0
      %3907 = vmatprep.subr.bf16.mxu0 0
      %3908 = vmatpush2.bf16.msra.mxu0 0
      %3909 = vmatprep.subr.bf16.mxu0 0
      %3910 = vmatpush2.bf16.msra.mxu0 0
      %3911 = vmatprep.subr.bf16.mxu0 0
      %3912 = vmatpush2.bf16.msra.mxu0 0
      %3913 = vmatprep.subr.bf16.mxu0 0
      %3914 = vmatpush2.bf16.msra.mxu0 0
      %3915 = vmatprep.subr.bf16.mxu0 0
      %3916 = vmatpush2.bf16.msra.mxu0 0
      %3917 = vmatprep.subr.bf16.mxu0 0
      %3918 = vmatpush2.bf16.msra.mxu0 0
      %3919 = vmatprep.subr.bf16.mxu0 0
      %3920 = vmatpush2.bf16.msra.mxu0 0
      %3921 = vmatprep.mubr.bf16.mxu0 0
      %3922 = vmatmul.mubr.bf16.gmra.mxu0 %v3298
      %v3923 = vpop.f32.mrf.mxu0
      %v3924 = vadd.f32 0.0, %v3923
      %v3925 = vpop.f32.mrf.mxu0
      %v3926 = vpop.f32.mrf.mxu0
      %v3927 = vadd.f32 0.0, %v3926
      %v3928 = vpop.f32.mrf.mxu0
      %3929 = vmatprep.mubr.bf16.mxu0 0
      %3930 = vmatmul.mubr.bf16.gmra.mxu0 %v3301
      %v3931 = vpop.f32.mrf.mxu0
      %v3932 = vadd.f32 0.0, %v3931
      %v3933 = vpop.f32.mrf.mxu0
      %v3934 = vpop.f32.mrf.mxu0
      %v3935 = vadd.f32 0.0, %v3934
      %v3936 = vpop.f32.mrf.mxu0
      %3937 = vmatprep.mubr.bf16.mxu0 0
      %3938 = vmatmul.mubr.bf16.gmra.mxu0 %v3304
      %v3939 = vpop.f32.mrf.mxu0
      %v3940 = vadd.f32 0.0, %v3939
      %v3941 = vpop.f32.mrf.mxu0
      %v3942 = vpop.f32.mrf.mxu0
      %v3943 = vadd.f32 0.0, %v3942
      %v3944 = vpop.f32.mrf.mxu0
      %3945 = vmatprep.mubr.bf16.mxu0 0
      %3946 = vmatmul.mubr.bf16.gmra.mxu0 %v3307
      %v3947 = vpop.f32.mrf.mxu0
      %v3948 = vadd.f32 0.0, %v3947
      %v3949 = vpop.f32.mrf.mxu0
      %v3950 = vpop.f32.mrf.mxu0
      %v3951 = vadd.f32 0.0, %v3950
      %v3952 = vpop.f32.mrf.mxu0
      %3953 = vmatprep.mubr.bf16.mxu0 0
      %3954 = vmatmul.mubr.bf16.gmra.mxu0 %v3310
      %v3955 = vpop.f32.mrf.mxu0
      %v3956 = vadd.f32 0.0, %v3955
      %v3957 = vpop.f32.mrf.mxu0
      %v3958 = vpop.f32.mrf.mxu0
      %v3959 = vadd.f32 0.0, %v3958
      %v3960 = vpop.f32.mrf.mxu0
      %3961 = vmatprep.mubr.bf16.mxu0 0
      %3962 = vmatmul.mubr.bf16.gmra.mxu0 %v3313
      %v3963 = vpop.f32.mrf.mxu0
      %v3964 = vadd.f32 0.0, %v3963
      %v3965 = vpop.f32.mrf.mxu0
      %v3966 = vpop.f32.mrf.mxu0
      %v3967 = vadd.f32 0.0, %v3966
      %v3968 = vpop.f32.mrf.mxu0
      %3969 = vmatprep.mubr.bf16.mxu0 0
      %3970 = vmatmul.mubr.bf16.gmra.mxu0 %v3316
      %v3971 = vpop.f32.mrf.mxu0
      %v3972 = vadd.f32 0.0, %v3971
      %v3973 = vpop.f32.mrf.mxu0
      %v3974 = vpop.f32.mrf.mxu0
      %v3975 = vadd.f32 0.0, %v3974
      %v3976 = vpop.f32.mrf.mxu0
      %3977 = vmatprep.mubr.bf16.mxu0 0
      %3978 = vmatmul.mubr.bf16.gmra.mxu0 %v3319
      %v3979 = vpop.f32.mrf.mxu0
      %v3980 = vadd.f32 0.0, %v3979
      %v3981 = vpop.f32.mrf.mxu0
      %v3982 = vpop.f32.mrf.mxu0
      %v3983 = vadd.f32 0.0, %v3982
      %v3984 = vpop.f32.mrf.mxu0
      %3985 = vmatprep.mubr.bf16.mxu0 0
      %3986 = vmatmul.mubr.bf16.gmra.mxu0 %v3322
      %v3987 = vpop.f32.mrf.mxu0
      %v3988 = vadd.f32 0.0, %v3987
      %v3989 = vpop.f32.mrf.mxu0
      %v3990 = vpop.f32.mrf.mxu0
      %v3991 = vadd.f32 0.0, %v3990
      %v3992 = vpop.f32.mrf.mxu0
      %3993 = vmatprep.mubr.bf16.mxu0 0
      %3994 = vmatmul.mubr.bf16.gmra.mxu0 %v3325
      %v3995 = vpop.f32.mrf.mxu0
      %v3996 = vadd.f32 0.0, %v3995
      %v3997 = vpop.f32.mrf.mxu0
      %v3998 = vpop.f32.mrf.mxu0
      %v3999 = vadd.f32 0.0, %v3998
      %v4000 = vpop.f32.mrf.mxu0
      %4001 = vmatprep.mubr.bf16.mxu0 0
      %4002 = vmatmul.mubr.bf16.gmra.mxu0 %v3328
      %v4003 = vpop.f32.mrf.mxu0
      %v4004 = vadd.f32 0.0, %v4003
      %v4005 = vpop.f32.mrf.mxu0
      %v4006 = vpop.f32.mrf.mxu0
      %v4007 = vadd.f32 0.0, %v4006
      %v4008 = vpop.f32.mrf.mxu0
      %4009 = vmatprep.mubr.bf16.mxu0 0
      %4010 = vmatmul.mubr.bf16.gmra.mxu0 %v3331
      %v4011 = vpop.f32.mrf.mxu0
      %v4012 = vadd.f32 0.0, %v4011
      %v4013 = vpop.f32.mrf.mxu0
      %v4014 = vpop.f32.mrf.mxu0
      %v4015 = vadd.f32 0.0, %v4014
      %v4016 = vpop.f32.mrf.mxu0
      %4017 = vmatprep.mubr.bf16.mxu0 0
      %4018 = vmatmul.mubr.bf16.gmra.mxu0 %v3334
      %v4019 = vpop.f32.mrf.mxu0
      %v4020 = vadd.f32 0.0, %v4019
      %v4021 = vpop.f32.mrf.mxu0
      %v4022 = vpop.f32.mrf.mxu0
      %v4023 = vadd.f32 0.0, %v4022
      %v4024 = vpop.f32.mrf.mxu0
      %4025 = vmatprep.mubr.bf16.mxu0 0
      %4026 = vmatmul.mubr.bf16.gmra.mxu0 %v3337
      %v4027 = vpop.f32.mrf.mxu0
      %v4028 = vadd.f32 0.0, %v4027
      %v4029 = vpop.f32.mrf.mxu0
      %v4030 = vpop.f32.mrf.mxu0
      %v4031 = vadd.f32 0.0, %v4030
      %v4032 = vpop.f32.mrf.mxu0
      %4033 = vmatprep.mubr.bf16.mxu0 0
      %4034 = vmatmul.mubr.bf16.gmra.mxu0 %v3340
      %v4035 = vpop.f32.mrf.mxu0
      %v4036 = vadd.f32 0.0, %v4035
      %v4037 = vpop.f32.mrf.mxu0
      %v4038 = vpop.f32.mrf.mxu0
      %v4039 = vadd.f32 0.0, %v4038
      %v4040 = vpop.f32.mrf.mxu0
      %4041 = vmatprep.mubr.bf16.mxu0 0
      %4042 = vmatmul.mubr.bf16.gmra.mxu0 %v3884
      %v4043 = vpop.f32.mrf.mxu0
      %v4044 = vadd.f32 0.0, %v4043
      %v4045 = vpop.f32.mrf.mxu0
      %v4046 = vpop.f32.mrf.mxu0
      %v4047 = vadd.f32 0.0, %v4046
      %v4048 = vpop.f32.mrf.mxu0
      %4049 = vdwg.mxu0
      %v4050 = vadd.f32 %v3848, %v3924
      %v4051 = vadd.f32 %v3849, %v3927
      %v4052 = vadd.f32 %v3850, %v3932
      %v4053 = vadd.f32 %v3851, %v3935
      %v4054 = vadd.f32 %v3852, %v3940
      %v4055 = vadd.f32 %v3853, %v3943
      %v4056 = vadd.f32 %v3854, %v3948
      %v4057 = vadd.f32 %v3855, %v3951
      %v4058 = vadd.f32 %v3856, %v3956
      %v4059 = vadd.f32 %v3857, %v3959
      %v4060 = vadd.f32 %v3858, %v3964
      %v4061 = vadd.f32 %v3859, %v3967
      %v4062 = vadd.f32 %v3860, %v3972
      %v4063 = vadd.f32 %v3861, %v3975
      %v4064 = vadd.f32 %v3862, %v3980
      %v4065 = vadd.f32 %v3863, %v3983
      %v4066 = vadd.f32 %v3864, %v3988
      %v4067 = vadd.f32 %v3865, %v3991
      %v4068 = vadd.f32 %v3866, %v3996
      %v4069 = vadd.f32 %v3867, %v3999
      %v4070 = vadd.f32 %v3868, %v4004
      %v4071 = vadd.f32 %v3869, %v4007
      %v4072 = vadd.f32 %v3870, %v4012
      %v4073 = vadd.f32 %v3871, %v4015
      %v4074 = vadd.f32 %v3872, %v4020
      %v4075 = vadd.f32 %v3873, %v4023
      %v4076 = vadd.f32 %v3874, %v4028
      %v4077 = vadd.f32 %v3875, %v4031
      %v4078 = vadd.f32 %v3876, %v4036
      %v4079 = vadd.f32 %v3877, %v4039
      %v4080 = vadd.f32 %v3878, %v4044
      %v4081 = vadd.f32 %v3879, %v4047
      %v4085 = vrot.slane %v2881, 1
      %v4086 = vrot.slane %v2882, 1
      %v4087 = vsel %vm498, %v4085, %v4086
      %v4088 = vrot.slane %v2883, 1
      %v4089 = vsel %vm498, %v4086, %v4088
      %v4092 = vpack.c.bf16 %v4089, %v4087
      %s4093 = scalar_lea.vmem %s3, 16
      %v4094 = vld [vmem:[%s4093] sm:$0xf]
      %v4096 = vsel %vm226, %v4092, 0
      %v4099 = vsel %vm677, %v4094, 0
      %4101 = vmatprep.subr.bf16.mxu0 0
      %4102 = vmatpush1.bf16.msra.mxu0 0
      %4103 = vmatprep.subr.bf16.mxu0 0
      %4104 = vmatpush1.bf16.msra.mxu0 0
      %4105 = vmatprep.subr.bf16.mxu0 0
      %4106 = vmatpush1.bf16.msra.mxu0 0
      %4107 = vmatprep.subr.bf16.mxu0 0
      %4108 = vmatpush1.bf16.msra.mxu0 0
      %4109 = vmatprep.subr.bf16.mxu0 0
      %4110 = vmatpush1.bf16.msra.mxu0 0
      %4111 = vmatprep.subr.bf16.mxu0 0
      %4112 = vmatpush1.bf16.msra.mxu0 0
      %4113 = vmatprep.subr.bf16.mxu0 0
      %4114 = vmatpush1.bf16.msra.mxu0 0
      %4115 = vmatprep.subr.bf16.mxu0 0
      %4116 = vmatpush1.bf16.msra.mxu0 %v4099
      %4117 = vmatprep.subr.bf16.mxu0 0
      %4118 = vmatpush2.bf16.msra.mxu0 0
      %4119 = vmatprep.subr.bf16.mxu0 0
      %4120 = vmatpush2.bf16.msra.mxu0 0
      %4121 = vmatprep.subr.bf16.mxu0 0
      %4122 = vmatpush2.bf16.msra.mxu0 0
      %4123 = vmatprep.subr.bf16.mxu0 0
      %4124 = vmatpush2.bf16.msra.mxu0 0
      %4125 = vmatprep.subr.bf16.mxu0 0
      %4126 = vmatpush2.bf16.msra.mxu0 0
      %4127 = vmatprep.subr.bf16.mxu0 0
      %4128 = vmatpush2.bf16.msra.mxu0 0
      %4129 = vmatprep.subr.bf16.mxu0 0
      %4130 = vmatpush2.bf16.msra.mxu0 0
      %4131 = vmatprep.subr.bf16.mxu0 0
      %4132 = vmatpush2.bf16.msra.mxu0 0
      %4133 = vmatprep.mubr.bf16.mxu0 0
      %4134 = vmatmul.mubr.bf16.gmra.mxu0 %v3086
      %v4135 = vpop.f32.mrf.mxu0
      %v4136 = vadd.f32 0.0, %v4135
      %v4137 = vpop.f32.mrf.mxu0
      %v4138 = vpop.f32.mrf.mxu0
      %v4139 = vadd.f32 0.0, %v4138
      %v4140 = vpop.f32.mrf.mxu0
      %4141 = vmatprep.mubr.bf16.mxu0 0
      %4142 = vmatmul.mubr.bf16.gmra.mxu0 %v3089
      %v4143 = vpop.f32.mrf.mxu0
      %v4144 = vadd.f32 0.0, %v4143
      %v4145 = vpop.f32.mrf.mxu0
      %v4146 = vpop.f32.mrf.mxu0
      %v4147 = vadd.f32 0.0, %v4146
      %v4148 = vpop.f32.mrf.mxu0
      %4149 = vmatprep.mubr.bf16.mxu0 0
      %4150 = vmatmul.mubr.bf16.gmra.mxu0 %v3092
      %v4151 = vpop.f32.mrf.mxu0
      %v4152 = vadd.f32 0.0, %v4151
      %v4153 = vpop.f32.mrf.mxu0
      %v4154 = vpop.f32.mrf.mxu0
      %v4155 = vadd.f32 0.0, %v4154
      %v4156 = vpop.f32.mrf.mxu0
      %4157 = vmatprep.mubr.bf16.mxu0 0
      %4158 = vmatmul.mubr.bf16.gmra.mxu0 %v3095
      %v4159 = vpop.f32.mrf.mxu0
      %v4160 = vadd.f32 0.0, %v4159
      %v4161 = vpop.f32.mrf.mxu0
      %v4162 = vpop.f32.mrf.mxu0
      %v4163 = vadd.f32 0.0, %v4162
      %v4164 = vpop.f32.mrf.mxu0
      %4165 = vmatprep.mubr.bf16.mxu0 0
      %4166 = vmatmul.mubr.bf16.gmra.mxu0 %v3098
      %v4167 = vpop.f32.mrf.mxu0
      %v4168 = vadd.f32 0.0, %v4167
      %v4169 = vpop.f32.mrf.mxu0
      %v4170 = vpop.f32.mrf.mxu0
      %v4171 = vadd.f32 0.0, %v4170
      %v4172 = vpop.f32.mrf.mxu0
      %4173 = vmatprep.mubr.bf16.mxu0 0
      %4174 = vmatmul.mubr.bf16.gmra.mxu0 %v3101
      %v4175 = vpop.f32.mrf.mxu0
      %v4176 = vadd.f32 0.0, %v4175
      %v4177 = vpop.f32.mrf.mxu0
      %v4178 = vpop.f32.mrf.mxu0
      %v4179 = vadd.f32 0.0, %v4178
      %v4180 = vpop.f32.mrf.mxu0
      %4181 = vmatprep.mubr.bf16.mxu0 0
      %4182 = vmatmul.mubr.bf16.gmra.mxu0 %v3104
      %v4183 = vpop.f32.mrf.mxu0
      %v4184 = vadd.f32 0.0, %v4183
      %v4185 = vpop.f32.mrf.mxu0
      %v4186 = vpop.f32.mrf.mxu0
      %v4187 = vadd.f32 0.0, %v4186
      %v4188 = vpop.f32.mrf.mxu0
      %4189 = vmatprep.mubr.bf16.mxu0 0
      %4190 = vmatmul.mubr.bf16.gmra.mxu0 %v3107
      %v4191 = vpop.f32.mrf.mxu0
      %v4192 = vadd.f32 0.0, %v4191
      %v4193 = vpop.f32.mrf.mxu0
      %v4194 = vpop.f32.mrf.mxu0
      %v4195 = vadd.f32 0.0, %v4194
      %v4196 = vpop.f32.mrf.mxu0
      %4197 = vmatprep.mubr.bf16.mxu0 0
      %4198 = vmatmul.mubr.bf16.gmra.mxu0 %v3110
      %v4199 = vpop.f32.mrf.mxu0
      %v4200 = vadd.f32 0.0, %v4199
      %v4201 = vpop.f32.mrf.mxu0
      %v4202 = vpop.f32.mrf.mxu0
      %v4203 = vadd.f32 0.0, %v4202
      %v4204 = vpop.f32.mrf.mxu0
      %4205 = vmatprep.mubr.bf16.mxu0 0
      %4206 = vmatmul.mubr.bf16.gmra.mxu0 %v3113
      %v4207 = vpop.f32.mrf.mxu0
      %v4208 = vadd.f32 0.0, %v4207
      %v4209 = vpop.f32.mrf.mxu0
      %v4210 = vpop.f32.mrf.mxu0
      %v4211 = vadd.f32 0.0, %v4210
      %v4212 = vpop.f32.mrf.mxu0
      %4213 = vmatprep.mubr.bf16.mxu0 0
      %4214 = vmatmul.mubr.bf16.gmra.mxu0 %v3116
      %v4215 = vpop.f32.mrf.mxu0
      %v4216 = vadd.f32 0.0, %v4215
      %v4217 = vpop.f32.mrf.mxu0
      %v4218 = vpop.f32.mrf.mxu0
      %v4219 = vadd.f32 0.0, %v4218
      %v4220 = vpop.f32.mrf.mxu0
      %4221 = vmatprep.mubr.bf16.mxu0 0
      %4222 = vmatmul.mubr.bf16.gmra.mxu0 %v3119
      %v4223 = vpop.f32.mrf.mxu0
      %v4224 = vadd.f32 0.0, %v4223
      %v4225 = vpop.f32.mrf.mxu0
      %v4226 = vpop.f32.mrf.mxu0
      %v4227 = vadd.f32 0.0, %v4226
      %v4228 = vpop.f32.mrf.mxu0
      %4229 = vmatprep.mubr.bf16.mxu0 0
      %4230 = vmatmul.mubr.bf16.gmra.mxu0 %v3122
      %v4231 = vpop.f32.mrf.mxu0
      %v4232 = vadd.f32 0.0, %v4231
      %v4233 = vpop.f32.mrf.mxu0
      %v4234 = vpop.f32.mrf.mxu0
      %v4235 = vadd.f32 0.0, %v4234
      %v4236 = vpop.f32.mrf.mxu0
      %4237 = vmatprep.mubr.bf16.mxu0 0
      %4238 = vmatmul.mubr.bf16.gmra.mxu0 %v3125
      %v4239 = vpop.f32.mrf.mxu0
      %v4240 = vadd.f32 0.0, %v4239
      %v4241 = vpop.f32.mrf.mxu0
      %v4242 = vpop.f32.mrf.mxu0
      %v4243 = vadd.f32 0.0, %v4242
      %v4244 = vpop.f32.mrf.mxu0
      %4245 = vmatprep.mubr.bf16.mxu0 0
      %4246 = vmatmul.mubr.bf16.gmra.mxu0 %v3128
      %v4247 = vpop.f32.mrf.mxu0
      %v4248 = vadd.f32 0.0, %v4247
      %v4249 = vpop.f32.mrf.mxu0
      %v4250 = vpop.f32.mrf.mxu0
      %v4251 = vadd.f32 0.0, %v4250
      %v4252 = vpop.f32.mrf.mxu0
      %4253 = vmatprep.mubr.bf16.mxu0 0
      %4254 = vmatmul.mubr.bf16.gmra.mxu0 %v4096
      %v4255 = vpop.f32.mrf.mxu0
      %v4256 = vadd.f32 0.0, %v4255
      %v4257 = vpop.f32.mrf.mxu0
      %v4258 = vpop.f32.mrf.mxu0
      %v4259 = vadd.f32 0.0, %v4258
      %v4260 = vpop.f32.mrf.mxu0
      %4261 = vdwg.mxu0
      %v4262 = vadd.f32 %v4050, %v4136
      %v4263 = vadd.f32 %v4051, %v4139
      %v4264 = vadd.f32 %v4052, %v4144
      %v4265 = vadd.f32 %v4053, %v4147
      %v4266 = vadd.f32 %v4054, %v4152
      %v4267 = vadd.f32 %v4055, %v4155
      %v4268 = vadd.f32 %v4056, %v4160
      %v4269 = vadd.f32 %v4057, %v4163
      %v4270 = vadd.f32 %v4058, %v4168
      %v4271 = vadd.f32 %v4059, %v4171
      %v4272 = vadd.f32 %v4060, %v4176
      %v4273 = vadd.f32 %v4061, %v4179
      %v4274 = vadd.f32 %v4062, %v4184
      %v4275 = vadd.f32 %v4063, %v4187
      %v4276 = vadd.f32 %v4064, %v4192
      %v4277 = vadd.f32 %v4065, %v4195
      %v4278 = vadd.f32 %v4066, %v4200
      %v4279 = vadd.f32 %v4067, %v4203
      %v4280 = vadd.f32 %v4068, %v4208
      %v4281 = vadd.f32 %v4069, %v4211
      %v4282 = vadd.f32 %v4070, %v4216
      %v4283 = vadd.f32 %v4071, %v4219
      %v4284 = vadd.f32 %v4072, %v4224
      %v4285 = vadd.f32 %v4073, %v4227
      %v4286 = vadd.f32 %v4074, %v4232
      %v4287 = vadd.f32 %v4075, %v4235
      %v4288 = vadd.f32 %v4076, %v4240
      %v4289 = vadd.f32 %v4077, %v4243
      %v4290 = vadd.f32 %v4078, %v4248
      %v4291 = vadd.f32 %v4079, %v4251
      %v4292 = vadd.f32 %v4080, %v4256
      %v4293 = vadd.f32 %v4081, %v4259
      %v4294 = vrot.slane %v2881, 2
      %v4295 = vrot.slane %v2882, 2
      %v4296 = vsel %vm1054, %v4294, %v4295
      %v4297 = vrot.slane %v2883, 2
      %v4298 = vsel %vm1054, %v4295, %v4297
      %v4301 = vpack.c.bf16 %v4298, %v4296
      %s4302 = scalar_lea.vmem %s3, 20
      %v4303 = vld [vmem:[%s4302] sm:$0xf]
      %v4305 = vsel %vm226, %v4301, 0
      %v4308 = vsel %vm677, %v4303, 0
      %4310 = vmatprep.subr.bf16.mxu0 0
      %4311 = vmatpush1.bf16.msra.mxu0 0
      %4312 = vmatprep.subr.bf16.mxu0 0
      %4313 = vmatpush1.bf16.msra.mxu0 0
      %4314 = vmatprep.subr.bf16.mxu0 0
      %4315 = vmatpush1.bf16.msra.mxu0 0
      %4316 = vmatprep.subr.bf16.mxu0 0
      %4317 = vmatpush1.bf16.msra.mxu0 0
      %4318 = vmatprep.subr.bf16.mxu0 0
      %4319 = vmatpush1.bf16.msra.mxu0 0
      %4320 = vmatprep.subr.bf16.mxu0 0
      %4321 = vmatpush1.bf16.msra.mxu0 0
      %4322 = vmatprep.subr.bf16.mxu0 0
      %4323 = vmatpush1.bf16.msra.mxu0 0
      %4324 = vmatprep.subr.bf16.mxu0 0
      %4325 = vmatpush1.bf16.msra.mxu0 %v4308
      %4326 = vmatprep.subr.bf16.mxu0 0
      %4327 = vmatpush2.bf16.msra.mxu0 0
      %4328 = vmatprep.subr.bf16.mxu0 0
      %4329 = vmatpush2.bf16.msra.mxu0 0
      %4330 = vmatprep.subr.bf16.mxu0 0
      %4331 = vmatpush2.bf16.msra.mxu0 0
      %4332 = vmatprep.subr.bf16.mxu0 0
      %4333 = vmatpush2.bf16.msra.mxu0 0
      %4334 = vmatprep.subr.bf16.mxu0 0
      %4335 = vmatpush2.bf16.msra.mxu0 0
      %4336 = vmatprep.subr.bf16.mxu0 0
      %4337 = vmatpush2.bf16.msra.mxu0 0
      %4338 = vmatprep.subr.bf16.mxu0 0
      %4339 = vmatpush2.bf16.msra.mxu0 0
      %4340 = vmatprep.subr.bf16.mxu0 0
      %4341 = vmatpush2.bf16.msra.mxu0 0
      %4342 = vmatprep.mubr.bf16.mxu0 0
      %4343 = vmatmul.mubr.bf16.gmra.mxu0 %v3640
      %v4344 = vpop.f32.mrf.mxu0
      %v4345 = vadd.f32 0.0, %v4344
      %v4346 = vpop.f32.mrf.mxu0
      %v4347 = vpop.f32.mrf.mxu0
      %v4348 = vadd.f32 0.0, %v4347
      %v4349 = vpop.f32.mrf.mxu0
      %4350 = vmatprep.mubr.bf16.mxu0 0
      %4351 = vmatmul.mubr.bf16.gmra.mxu0 %v3643
      %v4352 = vpop.f32.mrf.mxu0
      %v4353 = vadd.f32 0.0, %v4352
      %v4354 = vpop.f32.mrf.mxu0
      %v4355 = vpop.f32.mrf.mxu0
      %v4356 = vadd.f32 0.0, %v4355
      %v4357 = vpop.f32.mrf.mxu0
      %4358 = vmatprep.mubr.bf16.mxu0 0
      %4359 = vmatmul.mubr.bf16.gmra.mxu0 %v3646
      %v4360 = vpop.f32.mrf.mxu0
      %v4361 = vadd.f32 0.0, %v4360
      %v4362 = vpop.f32.mrf.mxu0
      %v4363 = vpop.f32.mrf.mxu0
      %v4364 = vadd.f32 0.0, %v4363
      %v4365 = vpop.f32.mrf.mxu0
      %4366 = vmatprep.mubr.bf16.mxu0 0
      %4367 = vmatmul.mubr.bf16.gmra.mxu0 %v3649
      %v4368 = vpop.f32.mrf.mxu0
      %v4369 = vadd.f32 0.0, %v4368
      %v4370 = vpop.f32.mrf.mxu0
      %v4371 = vpop.f32.mrf.mxu0
      %v4372 = vadd.f32 0.0, %v4371
      %v4373 = vpop.f32.mrf.mxu0
      %4374 = vmatprep.mubr.bf16.mxu0 0
      %4375 = vmatmul.mubr.bf16.gmra.mxu0 %v3652
      %v4376 = vpop.f32.mrf.mxu0
      %v4377 = vadd.f32 0.0, %v4376
      %v4378 = vpop.f32.mrf.mxu0
      %v4379 = vpop.f32.mrf.mxu0
      %v4380 = vadd.f32 0.0, %v4379
      %v4381 = vpop.f32.mrf.mxu0
      %4382 = vmatprep.mubr.bf16.mxu0 0
      %4383 = vmatmul.mubr.bf16.gmra.mxu0 %v3655
      %v4384 = vpop.f32.mrf.mxu0
      %v4385 = vadd.f32 0.0, %v4384
      %v4386 = vpop.f32.mrf.mxu0
      %v4387 = vpop.f32.mrf.mxu0
      %v4388 = vadd.f32 0.0, %v4387
      %v4389 = vpop.f32.mrf.mxu0
      %4390 = vmatprep.mubr.bf16.mxu0 0
      %4391 = vmatmul.mubr.bf16.gmra.mxu0 %v3658
      %v4392 = vpop.f32.mrf.mxu0
      %v4393 = vadd.f32 0.0, %v4392
      %v4394 = vpop.f32.mrf.mxu0
      %v4395 = vpop.f32.mrf.mxu0
      %v4396 = vadd.f32 0.0, %v4395
      %v4397 = vpop.f32.mrf.mxu0
      %4398 = vmatprep.mubr.bf16.mxu0 0
      %4399 = vmatmul.mubr.bf16.gmra.mxu0 %v3661
      %v4400 = vpop.f32.mrf.mxu0
      %v4401 = vadd.f32 0.0, %v4400
      %v4402 = vpop.f32.mrf.mxu0
      %v4403 = vpop.f32.mrf.mxu0
      %v4404 = vadd.f32 0.0, %v4403
      %v4405 = vpop.f32.mrf.mxu0
      %4406 = vmatprep.mubr.bf16.mxu0 0
      %4407 = vmatmul.mubr.bf16.gmra.mxu0 %v3664
      %v4408 = vpop.f32.mrf.mxu0
      %v4409 = vadd.f32 0.0, %v4408
      %v4410 = vpop.f32.mrf.mxu0
      %v4411 = vpop.f32.mrf.mxu0
      %v4412 = vadd.f32 0.0, %v4411
      %v4413 = vpop.f32.mrf.mxu0
      %4414 = vmatprep.mubr.bf16.mxu0 0
      %4415 = vmatmul.mubr.bf16.gmra.mxu0 %v3667
      %v4416 = vpop.f32.mrf.mxu0
      %v4417 = vadd.f32 0.0, %v4416
      %v4418 = vpop.f32.mrf.mxu0
      %v4419 = vpop.f32.mrf.mxu0
      %v4420 = vadd.f32 0.0, %v4419
      %v4421 = vpop.f32.mrf.mxu0
      %4422 = vmatprep.mubr.bf16.mxu0 0
      %4423 = vmatmul.mubr.bf16.gmra.mxu0 %v3670
      %v4424 = vpop.f32.mrf.mxu0
      %v4425 = vadd.f32 0.0, %v4424
      %v4426 = vpop.f32.mrf.mxu0
      %v4427 = vpop.f32.mrf.mxu0
      %v4428 = vadd.f32 0.0, %v4427
      %v4429 = vpop.f32.mrf.mxu0
      %4430 = vmatprep.mubr.bf16.mxu0 0
      %4431 = vmatmul.mubr.bf16.gmra.mxu0 %v3673
      %v4432 = vpop.f32.mrf.mxu0
      %v4433 = vadd.f32 0.0, %v4432
      %v4434 = vpop.f32.mrf.mxu0
      %v4435 = vpop.f32.mrf.mxu0
      %v4436 = vadd.f32 0.0, %v4435
      %v4437 = vpop.f32.mrf.mxu0
      %4438 = vmatprep.mubr.bf16.mxu0 0
      %4439 = vmatmul.mubr.bf16.gmra.mxu0 %v3676
      %v4440 = vpop.f32.mrf.mxu0
      %v4441 = vadd.f32 0.0, %v4440
      %v4442 = vpop.f32.mrf.mxu0
      %v4443 = vpop.f32.mrf.mxu0
      %v4444 = vadd.f32 0.0, %v4443
      %v4445 = vpop.f32.mrf.mxu0
      %4446 = vmatprep.mubr.bf16.mxu0 0
      %4447 = vmatmul.mubr.bf16.gmra.mxu0 %v3679
      %v4448 = vpop.f32.mrf.mxu0
      %v4449 = vadd.f32 0.0, %v4448
      %v4450 = vpop.f32.mrf.mxu0
      %v4451 = vpop.f32.mrf.mxu0
      %v4452 = vadd.f32 0.0, %v4451
      %v4453 = vpop.f32.mrf.mxu0
      %4454 = vmatprep.mubr.bf16.mxu0 0
      %4455 = vmatmul.mubr.bf16.gmra.mxu0 %v3682
      %v4456 = vpop.f32.mrf.mxu0
      %v4457 = vadd.f32 0.0, %v4456
      %v4458 = vpop.f32.mrf.mxu0
      %v4459 = vpop.f32.mrf.mxu0
      %v4460 = vadd.f32 0.0, %v4459
      %v4461 = vpop.f32.mrf.mxu0
      %4462 = vmatprep.mubr.bf16.mxu0 0
      %4463 = vmatmul.mubr.bf16.gmra.mxu0 %v4305
      %v4464 = vpop.f32.mrf.mxu0
      %v4465 = vadd.f32 0.0, %v4464
      %v4466 = vpop.f32.mrf.mxu0
      %v4467 = vpop.f32.mrf.mxu0
      %v4468 = vadd.f32 0.0, %v4467
      %v4469 = vpop.f32.mrf.mxu0
      %4470 = vdwg.mxu0
      %v4471 = vadd.f32 %v4262, %v4345
      %v4472 = vadd.f32 %v4263, %v4348
      %v4473 = vadd.f32 %v4264, %v4353
      %v4474 = vadd.f32 %v4265, %v4356
      %v4475 = vadd.f32 %v4266, %v4361
      %v4476 = vadd.f32 %v4267, %v4364
      %v4477 = vadd.f32 %v4268, %v4369
      %v4478 = vadd.f32 %v4269, %v4372
      %v4479 = vadd.f32 %v4270, %v4377
      %v4480 = vadd.f32 %v4271, %v4380
      %v4481 = vadd.f32 %v4272, %v4385
      %v4482 = vadd.f32 %v4273, %v4388
      %v4483 = vadd.f32 %v4274, %v4393
      %v4484 = vadd.f32 %v4275, %v4396
      %v4485 = vadd.f32 %v4276, %v4401
      %v4486 = vadd.f32 %v4277, %v4404
      %v4487 = vadd.f32 %v4278, %v4409
      %v4488 = vadd.f32 %v4279, %v4412
      %v4489 = vadd.f32 %v4280, %v4417
      %v4490 = vadd.f32 %v4281, %v4420
      %v4491 = vadd.f32 %v4282, %v4425
      %v4492 = vadd.f32 %v4283, %v4428
      %v4493 = vadd.f32 %v4284, %v4433
      %v4494 = vadd.f32 %v4285, %v4436
      %v4495 = vadd.f32 %v4286, %v4441
      %v4496 = vadd.f32 %v4287, %v4444
      %v4497 = vadd.f32 %v4288, %v4449
      %v4498 = vadd.f32 %v4289, %v4452
      %v4499 = vadd.f32 %v4290, %v4457
      %v4500 = vadd.f32 %v4291, %v4460
      %v4501 = vadd.f32 %v4292, %v4465
      %v4502 = vadd.f32 %v4293, %v4468
      %v4503 = vpack.c.bf16 %v2885, %v2884
      %s4504 = scalar_lea.vmem %s3, 24
      %v4505 = vld [vmem:[%s4504] sm:$0xf]
      %v4507 = vsel %vm226, %v4503, 0
      %v4510 = vsel %vm677, %v4505, 0
      %4512 = vmatprep.subr.bf16.mxu0 0
      %4513 = vmatpush1.bf16.msra.mxu0 0
      %4514 = vmatprep.subr.bf16.mxu0 0
      %4515 = vmatpush1.bf16.msra.mxu0 0
      %4516 = vmatprep.subr.bf16.mxu0 0
      %4517 = vmatpush1.bf16.msra.mxu0 0
      %4518 = vmatprep.subr.bf16.mxu0 0
      %4519 = vmatpush1.bf16.msra.mxu0 0
      %4520 = vmatprep.subr.bf16.mxu0 0
      %4521 = vmatpush1.bf16.msra.mxu0 0
      %4522 = vmatprep.subr.bf16.mxu0 0
      %4523 = vmatpush1.bf16.msra.mxu0 0
      %4524 = vmatprep.subr.bf16.mxu0 0
      %4525 = vmatpush1.bf16.msra.mxu0 0
      %4526 = vmatprep.subr.bf16.mxu0 0
      %4527 = vmatpush1.bf16.msra.mxu0 %v4510
      %4528 = vmatprep.subr.bf16.mxu0 0
      %4529 = vmatpush2.bf16.msra.mxu0 0
      %4530 = vmatprep.subr.bf16.mxu0 0
      %4531 = vmatpush2.bf16.msra.mxu0 0
      %4532 = vmatprep.subr.bf16.mxu0 0
      %4533 = vmatpush2.bf16.msra.mxu0 0
      %4534 = vmatprep.subr.bf16.mxu0 0
      %4535 = vmatpush2.bf16.msra.mxu0 0
      %4536 = vmatprep.subr.bf16.mxu0 0
      %4537 = vmatpush2.bf16.msra.mxu0 0
      %4538 = vmatprep.subr.bf16.mxu0 0
      %4539 = vmatpush2.bf16.msra.mxu0 0
      %4540 = vmatprep.subr.bf16.mxu0 0
      %4541 = vmatpush2.bf16.msra.mxu0 0
      %4542 = vmatprep.subr.bf16.mxu0 0
      %4543 = vmatpush2.bf16.msra.mxu0 0
      %4544 = vmatprep.mubr.bf16.mxu0 0
      %4545 = vmatmul.mubr.bf16.gmra.mxu0 %v3301
      %v4546 = vpop.f32.mrf.mxu0
      %v4547 = vadd.f32 0.0, %v4546
      %v4548 = vpop.f32.mrf.mxu0
      %v4549 = vpop.f32.mrf.mxu0
      %v4550 = vadd.f32 0.0, %v4549
      %v4551 = vpop.f32.mrf.mxu0
      %4552 = vmatprep.mubr.bf16.mxu0 0
      %4553 = vmatmul.mubr.bf16.gmra.mxu0 %v3304
      %v4554 = vpop.f32.mrf.mxu0
      %v4555 = vadd.f32 0.0, %v4554
      %v4556 = vpop.f32.mrf.mxu0
      %v4557 = vpop.f32.mrf.mxu0
      %v4558 = vadd.f32 0.0, %v4557
      %v4559 = vpop.f32.mrf.mxu0
      %4560 = vmatprep.mubr.bf16.mxu0 0
      %4561 = vmatmul.mubr.bf16.gmra.mxu0 %v3307
      %v4562 = vpop.f32.mrf.mxu0
      %v4563 = vadd.f32 0.0, %v4562
      %v4564 = vpop.f32.mrf.mxu0
      %v4565 = vpop.f32.mrf.mxu0
      %v4566 = vadd.f32 0.0, %v4565
      %v4567 = vpop.f32.mrf.mxu0
      %4568 = vmatprep.mubr.bf16.mxu0 0
      %4569 = vmatmul.mubr.bf16.gmra.mxu0 %v3310
      %v4570 = vpop.f32.mrf.mxu0
      %v4571 = vadd.f32 0.0, %v4570
      %v4572 = vpop.f32.mrf.mxu0
      %v4573 = vpop.f32.mrf.mxu0
      %v4574 = vadd.f32 0.0, %v4573
      %v4575 = vpop.f32.mrf.mxu0
      %4576 = vmatprep.mubr.bf16.mxu0 0
      %4577 = vmatmul.mubr.bf16.gmra.mxu0 %v3313
      %v4578 = vpop.f32.mrf.mxu0
      %v4579 = vadd.f32 0.0, %v4578
      %v4580 = vpop.f32.mrf.mxu0
      %v4581 = vpop.f32.mrf.mxu0
      %v4582 = vadd.f32 0.0, %v4581
      %v4583 = vpop.f32.mrf.mxu0
      %4584 = vmatprep.mubr.bf16.mxu0 0
      %4585 = vmatmul.mubr.bf16.gmra.mxu0 %v3316
      %v4586 = vpop.f32.mrf.mxu0
      %v4587 = vadd.f32 0.0, %v4586
      %v4588 = vpop.f32.mrf.mxu0
      %v4589 = vpop.f32.mrf.mxu0
      %v4590 = vadd.f32 0.0, %v4589
      %v4591 = vpop.f32.mrf.mxu0
      %4592 = vmatprep.mubr.bf16.mxu0 0
      %4593 = vmatmul.mubr.bf16.gmra.mxu0 %v3319
      %v4594 = vpop.f32.mrf.mxu0
      %v4595 = vadd.f32 0.0, %v4594
      %v4596 = vpop.f32.mrf.mxu0
      %v4597 = vpop.f32.mrf.mxu0
      %v4598 = vadd.f32 0.0, %v4597
      %v4599 = vpop.f32.mrf.mxu0
      %4600 = vmatprep.mubr.bf16.mxu0 0
      %4601 = vmatmul.mubr.bf16.gmra.mxu0 %v3322
      %v4602 = vpop.f32.mrf.mxu0
      %v4603 = vadd.f32 0.0, %v4602
      %v4604 = vpop.f32.mrf.mxu0
      %v4605 = vpop.f32.mrf.mxu0
      %v4606 = vadd.f32 0.0, %v4605
      %v4607 = vpop.f32.mrf.mxu0
      %4608 = vmatprep.mubr.bf16.mxu0 0
      %4609 = vmatmul.mubr.bf16.gmra.mxu0 %v3325
      %v4610 = vpop.f32.mrf.mxu0
      %v4611 = vadd.f32 0.0, %v4610
      %v4612 = vpop.f32.mrf.mxu0
      %v4613 = vpop.f32.mrf.mxu0
      %v4614 = vadd.f32 0.0, %v4613
      %v4615 = vpop.f32.mrf.mxu0
      %4616 = vmatprep.mubr.bf16.mxu0 0
      %4617 = vmatmul.mubr.bf16.gmra.mxu0 %v3328
      %v4618 = vpop.f32.mrf.mxu0
      %v4619 = vadd.f32 0.0, %v4618
      %v4620 = vpop.f32.mrf.mxu0
      %v4621 = vpop.f32.mrf.mxu0
      %v4622 = vadd.f32 0.0, %v4621
      %v4623 = vpop.f32.mrf.mxu0
      %4624 = vmatprep.mubr.bf16.mxu0 0
      %4625 = vmatmul.mubr.bf16.gmra.mxu0 %v3331
      %v4626 = vpop.f32.mrf.mxu0
      %v4627 = vadd.f32 0.0, %v4626
      %v4628 = vpop.f32.mrf.mxu0
      %v4629 = vpop.f32.mrf.mxu0
      %v4630 = vadd.f32 0.0, %v4629
      %v4631 = vpop.f32.mrf.mxu0
      %4632 = vmatprep.mubr.bf16.mxu0 0
      %4633 = vmatmul.mubr.bf16.gmra.mxu0 %v3334
      %v4634 = vpop.f32.mrf.mxu0
      %v4635 = vadd.f32 0.0, %v4634
      %v4636 = vpop.f32.mrf.mxu0
      %v4637 = vpop.f32.mrf.mxu0
      %v4638 = vadd.f32 0.0, %v4637
      %v4639 = vpop.f32.mrf.mxu0
      %4640 = vmatprep.mubr.bf16.mxu0 0
      %4641 = vmatmul.mubr.bf16.gmra.mxu0 %v3337
      %v4642 = vpop.f32.mrf.mxu0
      %v4643 = vadd.f32 0.0, %v4642
      %v4644 = vpop.f32.mrf.mxu0
      %v4645 = vpop.f32.mrf.mxu0
      %v4646 = vadd.f32 0.0, %v4645
      %v4647 = vpop.f32.mrf.mxu0
      %4648 = vmatprep.mubr.bf16.mxu0 0
      %4649 = vmatmul.mubr.bf16.gmra.mxu0 %v3340
      %v4650 = vpop.f32.mrf.mxu0
      %v4651 = vadd.f32 0.0, %v4650
      %v4652 = vpop.f32.mrf.mxu0
      %v4653 = vpop.f32.mrf.mxu0
      %v4654 = vadd.f32 0.0, %v4653
      %v4655 = vpop.f32.mrf.mxu0
      %4656 = vmatprep.mubr.bf16.mxu0 0
      %4657 = vmatmul.mubr.bf16.gmra.mxu0 %v3884
      %v4658 = vpop.f32.mrf.mxu0
      %v4659 = vadd.f32 0.0, %v4658
      %v4660 = vpop.f32.mrf.mxu0
      %v4661 = vpop.f32.mrf.mxu0
      %v4662 = vadd.f32 0.0, %v4661
      %v4663 = vpop.f32.mrf.mxu0
      %4664 = vmatprep.mubr.bf16.mxu0 0
      %4665 = vmatmul.mubr.bf16.gmra.mxu0 %v4507
      %v4666 = vpop.f32.mrf.mxu0
      %v4667 = vadd.f32 0.0, %v4666
      %v4668 = vpop.f32.mrf.mxu0
      %v4669 = vpop.f32.mrf.mxu0
      %v4670 = vadd.f32 0.0, %v4669
      %v4671 = vpop.f32.mrf.mxu0
      %4672 = vdwg.mxu0
      %v4673 = vadd.f32 %v4471, %v4547
      %v4674 = vadd.f32 %v4472, %v4550
      %v4675 = vadd.f32 %v4473, %v4555
      %v4676 = vadd.f32 %v4474, %v4558
      %v4677 = vadd.f32 %v4475, %v4563
      %v4678 = vadd.f32 %v4476, %v4566
      %v4679 = vadd.f32 %v4477, %v4571
      %v4680 = vadd.f32 %v4478, %v4574
      %v4681 = vadd.f32 %v4479, %v4579
      %v4682 = vadd.f32 %v4480, %v4582
      %v4683 = vadd.f32 %v4481, %v4587
      %v4684 = vadd.f32 %v4482, %v4590
      %v4685 = vadd.f32 %v4483, %v4595
      %v4686 = vadd.f32 %v4484, %v4598
      %v4687 = vadd.f32 %v4485, %v4603
      %v4688 = vadd.f32 %v4486, %v4606
      %v4689 = vadd.f32 %v4487, %v4611
      %v4690 = vadd.f32 %v4488, %v4614
      %v4691 = vadd.f32 %v4489, %v4619
      %v4692 = vadd.f32 %v4490, %v4622
      %v4693 = vadd.f32 %v4491, %v4627
      %v4694 = vadd.f32 %v4492, %v4630
      %v4695 = vadd.f32 %v4493, %v4635
      %v4696 = vadd.f32 %v4494, %v4638
      %v4697 = vadd.f32 %v4495, %v4643
      %v4698 = vadd.f32 %v4496, %v4646
      %v4699 = vadd.f32 %v4497, %v4651
      %v4700 = vadd.f32 %v4498, %v4654
      %v4701 = vadd.f32 %v4499, %v4659
      %v4702 = vadd.f32 %v4500, %v4662
      %v4703 = vadd.f32 %v4501, %v4667
      %v4704 = vadd.f32 %v4502, %v4670
      %v4708 = vrot.slane %v2884, 1
      %v4709 = vrot.slane %v2885, 1
      %v4710 = vsel %vm498, %v4708, %v4709
      %v4711 = vrot.slane %v2886, 1
      %v4712 = vsel %vm498, %v4709, %v4711
      %v4715 = vpack.c.bf16 %v4712, %v4710
      %s4716 = scalar_lea.vmem %s3, 28
      %v4717 = vld [vmem:[%s4716] sm:$0xf]
      %v4719 = vsel %vm226, %v4715, 0
      %v4722 = vsel %vm677, %v4717, 0
      %4724 = vmatprep.subr.bf16.mxu0 0
      %4725 = vmatpush1.bf16.msra.mxu0 0
      %4726 = vmatprep.subr.bf16.mxu0 0
      %4727 = vmatpush1.bf16.msra.mxu0 0
      %4728 = vmatprep.subr.bf16.mxu0 0
      %4729 = vmatpush1.bf16.msra.mxu0 0
      %4730 = vmatprep.subr.bf16.mxu0 0
      %4731 = vmatpush1.bf16.msra.mxu0 0
      %4732 = vmatprep.subr.bf16.mxu0 0
      %4733 = vmatpush1.bf16.msra.mxu0 0
      %4734 = vmatprep.subr.bf16.mxu0 0
      %4735 = vmatpush1.bf16.msra.mxu0 0
      %4736 = vmatprep.subr.bf16.mxu0 0
      %4737 = vmatpush1.bf16.msra.mxu0 0
      %4738 = vmatprep.subr.bf16.mxu0 0
      %4739 = vmatpush1.bf16.msra.mxu0 %v4722
      %4740 = vmatprep.subr.bf16.mxu0 0
      %4741 = vmatpush2.bf16.msra.mxu0 0
      %4742 = vmatprep.subr.bf16.mxu0 0
      %4743 = vmatpush2.bf16.msra.mxu0 0
      %4744 = vmatprep.subr.bf16.mxu0 0
      %4745 = vmatpush2.bf16.msra.mxu0 0
      %4746 = vmatprep.subr.bf16.mxu0 0
      %4747 = vmatpush2.bf16.msra.mxu0 0
      %4748 = vmatprep.subr.bf16.mxu0 0
      %4749 = vmatpush2.bf16.msra.mxu0 0
      %4750 = vmatprep.subr.bf16.mxu0 0
      %4751 = vmatpush2.bf16.msra.mxu0 0
      %4752 = vmatprep.subr.bf16.mxu0 0
      %4753 = vmatpush2.bf16.msra.mxu0 0
      %4754 = vmatprep.subr.bf16.mxu0 0
      %4755 = vmatpush2.bf16.msra.mxu0 0
      %4756 = vmatprep.mubr.bf16.mxu0 0
      %4757 = vmatmul.mubr.bf16.gmra.mxu0 %v3089
      %v4758 = vpop.f32.mrf.mxu0
      %v4759 = vadd.f32 0.0, %v4758
      %v4760 = vpop.f32.mrf.mxu0
      %v4761 = vpop.f32.mrf.mxu0
      %v4762 = vadd.f32 0.0, %v4761
      %v4763 = vpop.f32.mrf.mxu0
      %4764 = vmatprep.mubr.bf16.mxu0 0
      %4765 = vmatmul.mubr.bf16.gmra.mxu0 %v3092
      %v4766 = vpop.f32.mrf.mxu0
      %v4767 = vadd.f32 0.0, %v4766
      %v4768 = vpop.f32.mrf.mxu0
      %v4769 = vpop.f32.mrf.mxu0
      %v4770 = vadd.f32 0.0, %v4769
      %v4771 = vpop.f32.mrf.mxu0
      %4772 = vmatprep.mubr.bf16.mxu0 0
      %4773 = vmatmul.mubr.bf16.gmra.mxu0 %v3095
      %v4774 = vpop.f32.mrf.mxu0
      %v4775 = vadd.f32 0.0, %v4774
      %v4776 = vpop.f32.mrf.mxu0
      %v4777 = vpop.f32.mrf.mxu0
      %v4778 = vadd.f32 0.0, %v4777
      %v4779 = vpop.f32.mrf.mxu0
      %4780 = vmatprep.mubr.bf16.mxu0 0
      %4781 = vmatmul.mubr.bf16.gmra.mxu0 %v3098
      %v4782 = vpop.f32.mrf.mxu0
      %v4783 = vadd.f32 0.0, %v4782
      %v4784 = vpop.f32.mrf.mxu0
      %v4785 = vpop.f32.mrf.mxu0
      %v4786 = vadd.f32 0.0, %v4785
      %v4787 = vpop.f32.mrf.mxu0
      %4788 = vmatprep.mubr.bf16.mxu0 0
      %4789 = vmatmul.mubr.bf16.gmra.mxu0 %v3101
      %v4790 = vpop.f32.mrf.mxu0
      %v4791 = vadd.f32 0.0, %v4790
      %v4792 = vpop.f32.mrf.mxu0
      %v4793 = vpop.f32.mrf.mxu0
      %v4794 = vadd.f32 0.0, %v4793
      %v4795 = vpop.f32.mrf.mxu0
      %4796 = vmatprep.mubr.bf16.mxu0 0
      %4797 = vmatmul.mubr.bf16.gmra.mxu0 %v3104
      %v4798 = vpop.f32.mrf.mxu0
      %v4799 = vadd.f32 0.0, %v4798
      %v4800 = vpop.f32.mrf.mxu0
      %v4801 = vpop.f32.mrf.mxu0
      %v4802 = vadd.f32 0.0, %v4801
      %v4803 = vpop.f32.mrf.mxu0
      %4804 = vmatprep.mubr.bf16.mxu0 0
      %4805 = vmatmul.mubr.bf16.gmra.mxu0 %v3107
      %v4806 = vpop.f32.mrf.mxu0
      %v4807 = vadd.f32 0.0, %v4806
      %v4808 = vpop.f32.mrf.mxu0
      %v4809 = vpop.f32.mrf.mxu0
      %v4810 = vadd.f32 0.0, %v4809
      %v4811 = vpop.f32.mrf.mxu0
      %4812 = vmatprep.mubr.bf16.mxu0 0
      %4813 = vmatmul.mubr.bf16.gmra.mxu0 %v3110
      %v4814 = vpop.f32.mrf.mxu0
      %v4815 = vadd.f32 0.0, %v4814
      %v4816 = vpop.f32.mrf.mxu0
      %v4817 = vpop.f32.mrf.mxu0
      %v4818 = vadd.f32 0.0, %v4817
      %v4819 = vpop.f32.mrf.mxu0
      %4820 = vmatprep.mubr.bf16.mxu0 0
      %4821 = vmatmul.mubr.bf16.gmra.mxu0 %v3113
      %v4822 = vpop.f32.mrf.mxu0
      %v4823 = vadd.f32 0.0, %v4822
      %v4824 = vpop.f32.mrf.mxu0
      %v4825 = vpop.f32.mrf.mxu0
      %v4826 = vadd.f32 0.0, %v4825
      %v4827 = vpop.f32.mrf.mxu0
      %4828 = vmatprep.mubr.bf16.mxu0 0
      %4829 = vmatmul.mubr.bf16.gmra.mxu0 %v3116
      %v4830 = vpop.f32.mrf.mxu0
      %v4831 = vadd.f32 0.0, %v4830
      %v4832 = vpop.f32.mrf.mxu0
      %v4833 = vpop.f32.mrf.mxu0
      %v4834 = vadd.f32 0.0, %v4833
      %v4835 = vpop.f32.mrf.mxu0
      %4836 = vmatprep.mubr.bf16.mxu0 0
      %4837 = vmatmul.mubr.bf16.gmra.mxu0 %v3119
      %v4838 = vpop.f32.mrf.mxu0
      %v4839 = vadd.f32 0.0, %v4838
      %v4840 = vpop.f32.mrf.mxu0
      %v4841 = vpop.f32.mrf.mxu0
      %v4842 = vadd.f32 0.0, %v4841
      %v4843 = vpop.f32.mrf.mxu0
      %4844 = vmatprep.mubr.bf16.mxu0 0
      %4845 = vmatmul.mubr.bf16.gmra.mxu0 %v3122
      %v4846 = vpop.f32.mrf.mxu0
      %v4847 = vadd.f32 0.0, %v4846
      %v4848 = vpop.f32.mrf.mxu0
      %v4849 = vpop.f32.mrf.mxu0
      %v4850 = vadd.f32 0.0, %v4849
      %v4851 = vpop.f32.mrf.mxu0
      %4852 = vmatprep.mubr.bf16.mxu0 0
      %4853 = vmatmul.mubr.bf16.gmra.mxu0 %v3125
      %v4854 = vpop.f32.mrf.mxu0
      %v4855 = vadd.f32 0.0, %v4854
      %v4856 = vpop.f32.mrf.mxu0
      %v4857 = vpop.f32.mrf.mxu0
      %v4858 = vadd.f32 0.0, %v4857
      %v4859 = vpop.f32.mrf.mxu0
      %4860 = vmatprep.mubr.bf16.mxu0 0
      %4861 = vmatmul.mubr.bf16.gmra.mxu0 %v3128
      %v4862 = vpop.f32.mrf.mxu0
      %v4863 = vadd.f32 0.0, %v4862
      %v4864 = vpop.f32.mrf.mxu0
      %v4865 = vpop.f32.mrf.mxu0
      %v4866 = vadd.f32 0.0, %v4865
      %v4867 = vpop.f32.mrf.mxu0
      %4868 = vmatprep.mubr.bf16.mxu0 0
      %4869 = vmatmul.mubr.bf16.gmra.mxu0 %v4096
      %v4870 = vpop.f32.mrf.mxu0
      %v4871 = vadd.f32 0.0, %v4870
      %v4872 = vpop.f32.mrf.mxu0
      %v4873 = vpop.f32.mrf.mxu0
      %v4874 = vadd.f32 0.0, %v4873
      %v4875 = vpop.f32.mrf.mxu0
      %4876 = vmatprep.mubr.bf16.mxu0 0
      %4877 = vmatmul.mubr.bf16.gmra.mxu0 %v4719
      %v4878 = vpop.f32.mrf.mxu0
      %v4879 = vadd.f32 0.0, %v4878
      %v4880 = vpop.f32.mrf.mxu0
      %v4881 = vpop.f32.mrf.mxu0
      %v4882 = vadd.f32 0.0, %v4881
      %v4883 = vpop.f32.mrf.mxu0
      %4884 = vdwg.mxu0
      %v4885 = vadd.f32 %v4673, %v4759
      %v4886 = vadd.f32 %v4674, %v4762
      %v4887 = vadd.f32 %v4675, %v4767
      %v4888 = vadd.f32 %v4676, %v4770
      %v4889 = vadd.f32 %v4677, %v4775
      %v4890 = vadd.f32 %v4678, %v4778
      %v4891 = vadd.f32 %v4679, %v4783
      %v4892 = vadd.f32 %v4680, %v4786
      %v4893 = vadd.f32 %v4681, %v4791
      %v4894 = vadd.f32 %v4682, %v4794
      %v4895 = vadd.f32 %v4683, %v4799
      %v4896 = vadd.f32 %v4684, %v4802
      %v4897 = vadd.f32 %v4685, %v4807
      %v4898 = vadd.f32 %v4686, %v4810
      %v4899 = vadd.f32 %v4687, %v4815
      %v4900 = vadd.f32 %v4688, %v4818
      %v4901 = vadd.f32 %v4689, %v4823
      %v4902 = vadd.f32 %v4690, %v4826
      %v4903 = vadd.f32 %v4691, %v4831
      %v4904 = vadd.f32 %v4692, %v4834
      %v4905 = vadd.f32 %v4693, %v4839
      %v4906 = vadd.f32 %v4694, %v4842
      %v4907 = vadd.f32 %v4695, %v4847
      %v4908 = vadd.f32 %v4696, %v4850
      %v4909 = vadd.f32 %v4697, %v4855
      %v4910 = vadd.f32 %v4698, %v4858
      %v4911 = vadd.f32 %v4699, %v4863
      %v4912 = vadd.f32 %v4700, %v4866
      %v4913 = vadd.f32 %v4701, %v4871
      %v4914 = vadd.f32 %v4702, %v4874
      %v4915 = vadd.f32 %v4703, %v4879
      %v4916 = vadd.f32 %v4704, %v4882
      %v4917 = vrot.slane %v2884, 2
      %v4918 = vrot.slane %v2885, 2
      %v4919 = vsel %vm1054, %v4917, %v4918
      %v4920 = vrot.slane %v2886, 2
      %v4921 = vsel %vm1054, %v4918, %v4920
      %v4924 = vpack.c.bf16 %v4921, %v4919
      %s4925 = scalar_lea.vmem %s3, 32
      %v4926 = vld [vmem:[%s4925] sm:$0xf]
      %v4928 = vsel %vm226, %v4924, 0
      %v4931 = vsel %vm677, %v4926, 0
      %4933 = vmatprep.subr.bf16.mxu0 0
      %4934 = vmatpush1.bf16.msra.mxu0 0
      %4935 = vmatprep.subr.bf16.mxu0 0
      %4936 = vmatpush1.bf16.msra.mxu0 0
      %4937 = vmatprep.subr.bf16.mxu0 0
      %4938 = vmatpush1.bf16.msra.mxu0 0
      %4939 = vmatprep.subr.bf16.mxu0 0
      %4940 = vmatpush1.bf16.msra.mxu0 0
      %4941 = vmatprep.subr.bf16.mxu0 0
      %4942 = vmatpush1.bf16.msra.mxu0 0
      %4943 = vmatprep.subr.bf16.mxu0 0
      %4944 = vmatpush1.bf16.msra.mxu0 0
      %4945 = vmatprep.subr.bf16.mxu0 0
      %4946 = vmatpush1.bf16.msra.mxu0 0
      %4947 = vmatprep.subr.bf16.mxu0 0
      %4948 = vmatpush1.bf16.msra.mxu0 %v4931
      %4949 = vmatprep.subr.bf16.mxu0 0
      %4950 = vmatpush2.bf16.msra.mxu0 0
      %4951 = vmatprep.subr.bf16.mxu0 0
      %4952 = vmatpush2.bf16.msra.mxu0 0
      %4953 = vmatprep.subr.bf16.mxu0 0
      %4954 = vmatpush2.bf16.msra.mxu0 0
      %4955 = vmatprep.subr.bf16.mxu0 0
      %4956 = vmatpush2.bf16.msra.mxu0 0
      %4957 = vmatprep.subr.bf16.mxu0 0
      %4958 = vmatpush2.bf16.msra.mxu0 0
      %4959 = vmatprep.subr.bf16.mxu0 0
      %4960 = vmatpush2.bf16.msra.mxu0 0
      %4961 = vmatprep.subr.bf16.mxu0 0
      %4962 = vmatpush2.bf16.msra.mxu0 0
      %4963 = vmatprep.subr.bf16.mxu0 0
      %4964 = vmatpush2.bf16.msra.mxu0 0
      %4965 = vmatprep.mubr.bf16.mxu0 0
      %4966 = vmatmul.mubr.bf16.gmra.mxu0 %v3643
      %v4967 = vpop.f32.mrf.mxu0
      %v4968 = vadd.f32 0.0, %v4967
      %v4969 = vpop.f32.mrf.mxu0
      %v4970 = vpop.f32.mrf.mxu0
      %v4971 = vadd.f32 0.0, %v4970
      %v4972 = vpop.f32.mrf.mxu0
      %4973 = vmatprep.mubr.bf16.mxu0 0
      %4974 = vmatmul.mubr.bf16.gmra.mxu0 %v3646
      %v4975 = vpop.f32.mrf.mxu0
      %v4976 = vadd.f32 0.0, %v4975
      %v4977 = vpop.f32.mrf.mxu0
      %v4978 = vpop.f32.mrf.mxu0
      %v4979 = vadd.f32 0.0, %v4978
      %v4980 = vpop.f32.mrf.mxu0
      %4981 = vmatprep.mubr.bf16.mxu0 0
      %4982 = vmatmul.mubr.bf16.gmra.mxu0 %v3649
      %v4983 = vpop.f32.mrf.mxu0
      %v4984 = vadd.f32 0.0, %v4983
      %v4985 = vpop.f32.mrf.mxu0
      %v4986 = vpop.f32.mrf.mxu0
      %v4987 = vadd.f32 0.0, %v4986
      %v4988 = vpop.f32.mrf.mxu0
      %4989 = vmatprep.mubr.bf16.mxu0 0
      %4990 = vmatmul.mubr.bf16.gmra.mxu0 %v3652
      %v4991 = vpop.f32.mrf.mxu0
      %v4992 = vadd.f32 0.0, %v4991
      %v4993 = vpop.f32.mrf.mxu0
      %v4994 = vpop.f32.mrf.mxu0
      %v4995 = vadd.f32 0.0, %v4994
      %v4996 = vpop.f32.mrf.mxu0
      %4997 = vmatprep.mubr.bf16.mxu0 0
      %4998 = vmatmul.mubr.bf16.gmra.mxu0 %v3655
      %v4999 = vpop.f32.mrf.mxu0
      %v5000 = vadd.f32 0.0, %v4999
      %v5001 = vpop.f32.mrf.mxu0
      %v5002 = vpop.f32.mrf.mxu0
      %v5003 = vadd.f32 0.0, %v5002
      %v5004 = vpop.f32.mrf.mxu0
      %5005 = vmatprep.mubr.bf16.mxu0 0
      %5006 = vmatmul.mubr.bf16.gmra.mxu0 %v3658
      %v5007 = vpop.f32.mrf.mxu0
      %v5008 = vadd.f32 0.0, %v5007
      %v5009 = vpop.f32.mrf.mxu0
      %v5010 = vpop.f32.mrf.mxu0
      %v5011 = vadd.f32 0.0, %v5010
      %v5012 = vpop.f32.mrf.mxu0
      %5013 = vmatprep.mubr.bf16.mxu0 0
      %5014 = vmatmul.mubr.bf16.gmra.mxu0 %v3661
      %v5015 = vpop.f32.mrf.mxu0
      %v5016 = vadd.f32 0.0, %v5015
      %v5017 = vpop.f32.mrf.mxu0
      %v5018 = vpop.f32.mrf.mxu0
      %v5019 = vadd.f32 0.0, %v5018
      %v5020 = vpop.f32.mrf.mxu0
      %5021 = vmatprep.mubr.bf16.mxu0 0
      %5022 = vmatmul.mubr.bf16.gmra.mxu0 %v3664
      %v5023 = vpop.f32.mrf.mxu0
      %v5024 = vadd.f32 0.0, %v5023
      %v5025 = vpop.f32.mrf.mxu0
      %v5026 = vpop.f32.mrf.mxu0
      %v5027 = vadd.f32 0.0, %v5026
      %v5028 = vpop.f32.mrf.mxu0
      %5029 = vmatprep.mubr.bf16.mxu0 0
      %5030 = vmatmul.mubr.bf16.gmra.mxu0 %v3667
      %v5031 = vpop.f32.mrf.mxu0
      %v5032 = vadd.f32 0.0, %v5031
      %v5033 = vpop.f32.mrf.mxu0
      %v5034 = vpop.f32.mrf.mxu0
      %v5035 = vadd.f32 0.0, %v5034
      %v5036 = vpop.f32.mrf.mxu0
      %5037 = vmatprep.mubr.bf16.mxu0 0
      %5038 = vmatmul.mubr.bf16.gmra.mxu0 %v3670
      %v5039 = vpop.f32.mrf.mxu0
      %v5040 = vadd.f32 0.0, %v5039
      %v5041 = vpop.f32.mrf.mxu0
      %v5042 = vpop.f32.mrf.mxu0
      %v5043 = vadd.f32 0.0, %v5042
      %v5044 = vpop.f32.mrf.mxu0
      %5045 = vmatprep.mubr.bf16.mxu0 0
      %5046 = vmatmul.mubr.bf16.gmra.mxu0 %v3673
      %v5047 = vpop.f32.mrf.mxu0
      %v5048 = vadd.f32 0.0, %v5047
      %v5049 = vpop.f32.mrf.mxu0
      %v5050 = vpop.f32.mrf.mxu0
      %v5051 = vadd.f32 0.0, %v5050
      %v5052 = vpop.f32.mrf.mxu0
      %5053 = vmatprep.mubr.bf16.mxu0 0
      %5054 = vmatmul.mubr.bf16.gmra.mxu0 %v3676
      %v5055 = vpop.f32.mrf.mxu0
      %v5056 = vadd.f32 0.0, %v5055
      %v5057 = vpop.f32.mrf.mxu0
      %v5058 = vpop.f32.mrf.mxu0
      %v5059 = vadd.f32 0.0, %v5058
      %v5060 = vpop.f32.mrf.mxu0
      %5061 = vmatprep.mubr.bf16.mxu0 0
      %5062 = vmatmul.mubr.bf16.gmra.mxu0 %v3679
      %v5063 = vpop.f32.mrf.mxu0
      %v5064 = vadd.f32 0.0, %v5063
      %v5065 = vpop.f32.mrf.mxu0
      %v5066 = vpop.f32.mrf.mxu0
      %v5067 = vadd.f32 0.0, %v5066
      %v5068 = vpop.f32.mrf.mxu0
      %5069 = vmatprep.mubr.bf16.mxu0 0
      %5070 = vmatmul.mubr.bf16.gmra.mxu0 %v3682
      %v5071 = vpop.f32.mrf.mxu0
      %v5072 = vadd.f32 0.0, %v5071
      %v5073 = vpop.f32.mrf.mxu0
      %v5074 = vpop.f32.mrf.mxu0
      %v5075 = vadd.f32 0.0, %v5074
      %v5076 = vpop.f32.mrf.mxu0
      %5077 = vmatprep.mubr.bf16.mxu0 0
      %5078 = vmatmul.mubr.bf16.gmra.mxu0 %v4305
      %v5079 = vpop.f32.mrf.mxu0
      %v5080 = vadd.f32 0.0, %v5079
      %v5081 = vpop.f32.mrf.mxu0
      %v5082 = vpop.f32.mrf.mxu0
      %v5083 = vadd.f32 0.0, %v5082
      %v5084 = vpop.f32.mrf.mxu0
      %5085 = vmatprep.mubr.bf16.mxu0 0
      %5086 = vmatmul.mubr.bf16.gmra.mxu0 %v4928
      %v5087 = vpop.f32.mrf.mxu0
      %v5088 = vadd.f32 0.0, %v5087
      %v5089 = vpop.f32.mrf.mxu0
      %v5090 = vpop.f32.mrf.mxu0
      %v5091 = vadd.f32 0.0, %v5090
      %v5092 = vpop.f32.mrf.mxu0
      %5093 = vdwg.mxu0
      %v5094 = vadd.f32 %v4885, %v4968
      %v5095 = vadd.f32 %v4886, %v4971
      %v5096 = vadd.f32 %v4887, %v4976
      %v5097 = vadd.f32 %v4888, %v4979
      %v5098 = vadd.f32 %v4889, %v4984
      %v5099 = vadd.f32 %v4890, %v4987
      %v5100 = vadd.f32 %v4891, %v4992
      %v5101 = vadd.f32 %v4892, %v4995
      %v5102 = vadd.f32 %v4893, %v5000
      %v5103 = vadd.f32 %v4894, %v5003
      %v5104 = vadd.f32 %v4895, %v5008
      %v5105 = vadd.f32 %v4896, %v5011
      %v5106 = vadd.f32 %v4897, %v5016
      %v5107 = vadd.f32 %v4898, %v5019
      %v5108 = vadd.f32 %v4899, %v5024
      %v5109 = vadd.f32 %v4900, %v5027
      %v5110 = vadd.f32 %v4901, %v5032
      %v5111 = vadd.f32 %v4902, %v5035
      %v5112 = vadd.f32 %v4903, %v5040
      %v5113 = vadd.f32 %v4904, %v5043
      %v5114 = vadd.f32 %v4905, %v5048
      %v5115 = vadd.f32 %v4906, %v5051
      %v5116 = vadd.f32 %v4907, %v5056
      %v5117 = vadd.f32 %v4908, %v5059
      %v5118 = vadd.f32 %v4909, %v5064
      %v5119 = vadd.f32 %v4910, %v5067
      %v5120 = vadd.f32 %v4911, %v5072
      %v5121 = vadd.f32 %v4912, %v5075
      %v5122 = vadd.f32 %v4913, %v5080
      %v5123 = vadd.f32 %v4914, %v5083
      %v5124 = vadd.f32 %v4915, %v5088
      %v5125 = vadd.f32 %v4916, %v5091
      %v5126 = vld [vmem:[%s4] sm:$0x1]
      %v5128 = vlaneseq
      %v5129 = vshrl.u32 %v5128, 7
      %v5130 = vsub.s32 0, %v5129
      %v5131 = vrot.slane %v5126, %v5130
      %v5133 = vadd.f32 %v5094, %v5131
      %v5134 = vadd.f32 %v5095, %v5131
      %v5135 = vadd.f32 %v5096, %v5131
      %v5136 = vadd.f32 %v5097, %v5131
      %v5137 = vadd.f32 %v5098, %v5131
      %v5138 = vadd.f32 %v5099, %v5131
      %v5139 = vadd.f32 %v5100, %v5131
      %v5140 = vadd.f32 %v5101, %v5131
      %v5141 = vadd.f32 %v5102, %v5131
      %v5142 = vadd.f32 %v5103, %v5131
      %v5143 = vadd.f32 %v5104, %v5131
      %v5144 = vadd.f32 %v5105, %v5131
      %v5145 = vadd.f32 %v5106, %v5131
      %v5146 = vadd.f32 %v5107, %v5131
      %v5147 = vadd.f32 %v5108, %v5131
      %v5148 = vadd.f32 %v5109, %v5131
      %v5149 = vadd.f32 %v5110, %v5131
      %v5150 = vadd.f32 %v5111, %v5131
      %v5151 = vadd.f32 %v5112, %v5131
      %v5152 = vadd.f32 %v5113, %v5131
      %v5153 = vadd.f32 %v5114, %v5131
      %v5154 = vadd.f32 %v5115, %v5131
      %v5155 = vadd.f32 %v5116, %v5131
      %v5156 = vadd.f32 %v5117, %v5131
      %v5157 = vadd.f32 %v5118, %v5131
      %v5158 = vadd.f32 %v5119, %v5131
      %v5159 = vadd.f32 %v5120, %v5131
      %v5160 = vadd.f32 %v5121, %v5131
      %v5161 = vadd.f32 %v5122, %v5131
      %v5162 = vadd.f32 %v5123, %v5131
      %v5163 = vadd.f32 %v5124, %v5131
      %v5164 = vadd.f32 %v5125, %v5131
      %v5165 = vld [vmem:[%s219] sm:$0xf]
      %v5166 = vld [vmem:[%s219 + $0x4] sm:$0xf]
      %v5167 = vld [vmem:[%s219 + $0x8] sm:$0xf]
      %v5168 = vld [vmem:[%s219 + $0xc] sm:$0xf]
      %v5169 = vld [vmem:[%s219 + $0x10] sm:$0xf]
      %v5170 = vld [vmem:[%s219 + $0x14] sm:$0xf]
      %v5171 = vld [vmem:[%s219 + $0x18] sm:$0xf]
      %v5172 = vld [vmem:[%s219 + $0x1c] sm:$0xf]
      %v5173 = vld [vmem:[%s219 + $0x20] sm:$0xf]
      %v5174 = vld [vmem:[%s219 + $0x24] sm:$0xf]
      %v5175 = vld [vmem:[%s219 + $0x28] sm:$0xf]
      %v5176 = vld [vmem:[%s219 + $0x2c] sm:$0xf]
      %v5177 = vld [vmem:[%s219 + $0x30] sm:$0xf]
      %v5178 = vld [vmem:[%s219 + $0x34] sm:$0xf]
      %v5179 = vld [vmem:[%s219 + $0x38] sm:$0xf]
      %v5180 = vld [vmem:[%s219 + $0x3c] sm:$0xf]
      %v5181 = vld [vmem:[%s219 + $0x40] sm:$0xf]
      %v5182 = vld [vmem:[%s219 + $0x44] sm:$0xf]
      %v5183 = vld [vmem:[%s219 + $0x48] sm:$0xf]
      %v5184 = vld [vmem:[%s219 + $0x4c] sm:$0xf]
      %v5185 = vld [vmem:[%s219 + $0x50] sm:$0xf]
      %v5186 = vld [vmem:[%s219 + $0x54] sm:$0xf]
      %v5187 = vld [vmem:[%s219 + $0x58] sm:$0xf]
      %v5188 = vld [vmem:[%s219 + $0x5c] sm:$0xf]
      %v5189 = vld [vmem:[%s219 + $0x60] sm:$0xf]
      %v5190 = vld [vmem:[%s219 + $0x64] sm:$0xf]
      %v5191 = vld [vmem:[%s219 + $0x68] sm:$0xf]
      %v5192 = vld [vmem:[%s219 + $0x6c] sm:$0xf]
      %v5193 = vld [vmem:[%s219 + $0x70] sm:$0xf]
      %v5194 = vld [vmem:[%s219 + $0x74] sm:$0xf]
      %v5195 = vld [vmem:[%s219 + $0x78] sm:$0xf]
      %v5196 = vld [vmem:[%s219 + $0x7c] sm:$0xf]
      %v5197 = vunpack.c.l.bf16 %v5165
      %v5198 = vunpack.c.l.bf16 %v5166
      %v5199 = vunpack.c.l.bf16 %v5167
      %v5200 = vunpack.c.l.bf16 %v5168
      %v5201 = vunpack.c.l.bf16 %v5169
      %v5202 = vunpack.c.l.bf16 %v5170
      %v5203 = vunpack.c.l.bf16 %v5171
      %v5204 = vunpack.c.l.bf16 %v5172
      %v5205 = vunpack.c.l.bf16 %v5173
      %v5206 = vunpack.c.l.bf16 %v5174
      %v5207 = vunpack.c.l.bf16 %v5175
      %v5208 = vunpack.c.l.bf16 %v5176
      %v5209 = vunpack.c.l.bf16 %v5177
      %v5210 = vunpack.c.l.bf16 %v5178
      %v5211 = vunpack.c.l.bf16 %v5179
      %v5212 = vunpack.c.l.bf16 %v5180
      %v5213 = vunpack.c.l.bf16 %v5181
      %v5214 = vunpack.c.l.bf16 %v5182
      %v5215 = vunpack.c.l.bf16 %v5183
      %v5216 = vunpack.c.l.bf16 %v5184
      %v5217 = vunpack.c.l.bf16 %v5185
      %v5218 = vunpack.c.l.bf16 %v5186
      %v5219 = vunpack.c.l.bf16 %v5187
      %v5220 = vunpack.c.l.bf16 %v5188
      %v5221 = vunpack.c.l.bf16 %v5189
      %v5222 = vunpack.c.l.bf16 %v5190
      %v5223 = vunpack.c.l.bf16 %v5191
      %v5224 = vunpack.c.l.bf16 %v5192
      %v5225 = vunpack.c.l.bf16 %v5193
      %v5226 = vunpack.c.l.bf16 %v5194
      %v5227 = vunpack.c.l.bf16 %v5195
      %v5228 = vunpack.c.l.bf16 %v5196
      %v5229 = vadd.f32 %v5133, %v5197
      %v5230 = vadd.f32 %v5134, %v5198
      %v5231 = vadd.f32 %v5135, %v5199
      %v5232 = vadd.f32 %v5136, %v5200
      %v5233 = vadd.f32 %v5137, %v5201
      %v5234 = vadd.f32 %v5138, %v5202
      %v5235 = vadd.f32 %v5139, %v5203
      %v5236 = vadd.f32 %v5140, %v5204
      %v5237 = vadd.f32 %v5141, %v5205
      %v5238 = vadd.f32 %v5142, %v5206
      %v5239 = vadd.f32 %v5143, %v5207
      %v5240 = vadd.f32 %v5144, %v5208
      %v5241 = vadd.f32 %v5145, %v5209
      %v5242 = vadd.f32 %v5146, %v5210
      %v5243 = vadd.f32 %v5147, %v5211
      %v5244 = vadd.f32 %v5148, %v5212
      %v5245 = vadd.f32 %v5149, %v5213
      %v5246 = vadd.f32 %v5150, %v5214
      %v5247 = vadd.f32 %v5151, %v5215
      %v5248 = vadd.f32 %v5152, %v5216
      %v5249 = vadd.f32 %v5153, %v5217
      %v5250 = vadd.f32 %v5154, %v5218
      %v5251 = vadd.f32 %v5155, %v5219
      %v5252 = vadd.f32 %v5156, %v5220
      %v5253 = vadd.f32 %v5157, %v5221
      %v5254 = vadd.f32 %v5158, %v5222
      %v5255 = vadd.f32 %v5159, %v5223
      %v5256 = vadd.f32 %v5160, %v5224
      %v5257 = vadd.f32 %v5161, %v5225
      %v5258 = vadd.f32 %v5162, %v5226
      %v5259 = vadd.f32 %v5163, %v5227
      %v5260 = vadd.f32 %v5164, %v5228
      %v5261 = vmax.f32 %v5229, 0.0
      %v5262 = vmax.f32 %v5230, 0.0
      %v5263 = vmax.f32 %v5231, 0.0
      %v5264 = vmax.f32 %v5232, 0.0
      %v5265 = vmax.f32 %v5233, 0.0
      %v5266 = vmax.f32 %v5234, 0.0
      %v5267 = vmax.f32 %v5235, 0.0
      %v5268 = vmax.f32 %v5236, 0.0
      %v5269 = vmax.f32 %v5237, 0.0
      %v5270 = vmax.f32 %v5238, 0.0
      %v5271 = vmax.f32 %v5239, 0.0
      %v5272 = vmax.f32 %v5240, 0.0
      %v5273 = vmax.f32 %v5241, 0.0
      %v5274 = vmax.f32 %v5242, 0.0
      %v5275 = vmax.f32 %v5243, 0.0
      %v5276 = vmax.f32 %v5244, 0.0
      %v5277 = vmax.f32 %v5245, 0.0
      %v5278 = vmax.f32 %v5246, 0.0
      %v5279 = vmax.f32 %v5247, 0.0
      %v5280 = vmax.f32 %v5248, 0.0
      %v5281 = vmax.f32 %v5249, 0.0
      %v5282 = vmax.f32 %v5250, 0.0
      %v5283 = vmax.f32 %v5251, 0.0
      %v5284 = vmax.f32 %v5252, 0.0
      %v5285 = vmax.f32 %v5253, 0.0
      %v5286 = vmax.f32 %v5254, 0.0
      %v5287 = vmax.f32 %v5255, 0.0
      %v5288 = vmax.f32 %v5256, 0.0
      %v5289 = vmax.f32 %v5257, 0.0
      %v5290 = vmax.f32 %v5258, 0.0
      %v5291 = vmax.f32 %v5259, 0.0
      %v5292 = vmax.f32 %v5260, 0.0
      %5293 = vst.msk [vmem:[%s224] sm:$0xff] %vm226, %v5261
      %5294 = vst.msk [vmem:[%s224 + $0x8] sm:$0xff] %vm226, %v5262
      %5295 = vst.msk [vmem:[%s224 + $0x10] sm:$0xff] %vm226, %v5263
      %5296 = vst.msk [vmem:[%s224 + $0x18] sm:$0xff] %vm226, %v5264
      %5297 = vst.msk [vmem:[%s224 + $0x20] sm:$0xff] %vm226, %v5265
      %5298 = vst.msk [vmem:[%s224 + $0x28] sm:$0xff] %vm226, %v5266
      %5299 = vst.msk [vmem:[%s224 + $0x30] sm:$0xff] %vm226, %v5267
      %5300 = vst.msk [vmem:[%s224 + $0x38] sm:$0xff] %vm226, %v5268
      %5301 = vst.msk [vmem:[%s224 + $0x40] sm:$0xff] %vm226, %v5269
      %5302 = vst.msk [vmem:[%s224 + $0x48] sm:$0xff] %vm226, %v5270
      %5303 = vst.msk [vmem:[%s224 + $0x50] sm:$0xff] %vm226, %v5271
      %5304 = vst.msk [vmem:[%s224 + $0x58] sm:$0xff] %vm226, %v5272
      %5305 = vst.msk [vmem:[%s224 + $0x60] sm:$0xff] %vm226, %v5273
      %5306 = vst.msk [vmem:[%s224 + $0x68] sm:$0xff] %vm226, %v5274
      %5307 = vst.msk [vmem:[%s224 + $0x70] sm:$0xff] %vm226, %v5275
      %5308 = vst.msk [vmem:[%s224 + $0x78] sm:$0xff] %vm226, %v5276
      %5309 = vst.msk [vmem:[%s224 + $0x80] sm:$0xff] %vm226, %v5277
      %5310 = vst.msk [vmem:[%s224 + $0x88] sm:$0xff] %vm226, %v5278
      %5311 = vst.msk [vmem:[%s224 + $0x90] sm:$0xff] %vm226, %v5279
      %5312 = vst.msk [vmem:[%s224 + $0x98] sm:$0xff] %vm226, %v5280
      %5313 = vst.msk [vmem:[%s224 + $0xa0] sm:$0xff] %vm226, %v5281
      %5314 = vst.msk [vmem:[%s224 + $0xa8] sm:$0xff] %vm226, %v5282
      %5315 = vst.msk [vmem:[%s224 + $0xb0] sm:$0xff] %vm226, %v5283
      %5316 = vst.msk [vmem:[%s224 + $0xb8] sm:$0xff] %vm226, %v5284
      %5317 = vst.msk [vmem:[%s224 + $0xc0] sm:$0xff] %vm226, %v5285
      %5318 = vst.msk [vmem:[%s224 + $0xc8] sm:$0xff] %vm226, %v5286
      %5319 = vst.msk [vmem:[%s224 + $0xd0] sm:$0xff] %vm226, %v5287
      %5320 = vst.msk [vmem:[%s224 + $0xd8] sm:$0xff] %vm226, %v5288
      %5321 = vst.msk [vmem:[%s224 + $0xe0] sm:$0xff] %vm226, %v5289
      %5322 = vst.msk [vmem:[%s224 + $0xe8] sm:$0xff] %vm226, %v5290
      %5323 = vst.msk [vmem:[%s224 + $0xf0] sm:$0xff] %vm226, %v5291
      %5324 = vst.msk [vmem:[%s224 + $0xf8] sm:$0xff] %vm226, %v5292
      %p5325 = scmp.lt.s32.totalorder %s16, 1
      %s5326 = scalar_select %p5325, %s16, 1
      %s5327 = smul.addr %s5326, 32
      %s5328 = smul.addr %s5327, 8
      %s5329 = scalar_lea.vmem %s5, %s5328
      // Predicated region
      $region41: #{tpu_custom_call.1} parent=39 // pred_check
        %p5330 = pneg %p144
      $region42: #{tpu_custom_call.1} parent=39 // pred_check_branch
        %5332 = sbr.rel (%p5330) target = $region44
      $region43: #{tpu_custom_call.1} parent=39 // pred_region
        _
      $region44: #{tpu_custom_call.1} parent=39 // pred_fallthru
        _
    $region40: #{tpu_custom_call.1} parent=5 // pred_fallthru
      _
    %p5333 = scmp.le.s32.totalorder 2, %s11
    // Predicated region
    $region45: #{tpu_custom_call.1} parent=5 // pred_check
      %p5334 = pneg %p5333
    $region46: #{tpu_custom_call.1} parent=5 // pred_check_branch
      %5336 = sbr.rel (%p5334) target = $region48
    $region47: #{tpu_custom_call.1} parent=5 // pred_region
      %s5337 = ssub.s32 %s11, 2
      // Predicated region
      $region49: #{tpu_custom_call.1} parent=47 // pred_check
        %p5338 = pneg %p150
      $region50: #{tpu_custom_call.1} parent=47 // pred_check_branch
        %5340 = sbr.rel (%p5338) target = $region52
      $region51: #{tpu_custom_call.1} parent=47 // pred_region
        %p5341 = scmp.lt.s32.totalorder %s17, 1
        %s5342 = scalar_select %p5341, %s17, 1
        %s5343 = smul.addr %s5342, 32
        %s5344 = smul.addr %s5343, 8
        %s5345 = scalar_lea.vmem %s5, %s5344
      $region52: #{tpu_custom_call.1} parent=47 // pred_fallthru
        _
    $region48: #{tpu_custom_call.1} parent=5 // pred_fallthru
      _
  $region6: #{tpu_custom_call.1} parent=0 // loop_footer
    %s15 = sadd.s32 1, %s11
  $region7: #{tpu_custom_call.1} parent=0 // loop_footer_branch
    %10 = sbr.rel target = $region3
  $region8: #{tpu_custom_call.1} parent=0 // loop_exit
    _

</llo_original>
